<compile_context>
chip_gen: v7x
topology: tpu7x:2x2x1
jax: 0.10.0
libtpu: 0.0.40
codegen_flags: <defaults>
</compile_context>

<pallas_src>
import jax
import jax.numpy as jnp
from jax.experimental import pallas as pl
from jax.experimental.pallas import tpu as pltpu


def _modality_kernel(x_ref, mask_ref, dm_ref,
                     wp_ref, bp_ref, wcf_ref, wcb_ref, bc_ref,
                     out_ref):
    """Fused bidirectional length-masked LSTM + in-loop bmm(dm, relu(enc)) + classifier."""
    S, Bb, E = x_ref.shape
    Hd = wcf_ref.shape[0]            # per-direction hidden size (= hidden_size // 2)
    M = dm_ref.shape[2]
    G = 4 * Hd

    # Hoist weights / bias out of the recurrence (a handful of vregs).
    w_packed = wp_ref[...]                                   # (2*(E+Hd), 8*Hd)
    bias = jnp.broadcast_to(bp_ref[...], (Bb, 2 * G))        # broadcast done once

    def split_gates(g):
        i = jax.nn.sigmoid(g[:, 0 * Hd:1 * Hd])
        f = jax.nn.sigmoid(g[:, 1 * Hd:2 * Hd])
        c = jnp.tanh(g[:, 2 * Hd:3 * Hd])
        o = jax.nn.sigmoid(g[:, 3 * Hd:4 * Hd])
        return i, f, c, o

    def step(t, carry):
        hf, cf, hb, cb, tag_f, tag_b = carry
        tb = S - 1 - t

        x_f = x_ref[t]                        # (Bb, E)
        x_b = x_ref[tb]
        m_f = mask_ref[t] > 0.0               # (Bb, 1) bool
        m_b = mask_ref[tb] > 0.0

        # Single MXU push for both directions (block-diagonal packed weights).
        inp = jnp.concatenate([x_f, hf, x_b, hb], axis=-1)   # (Bb, 2*(E+Hd))
        gates = jnp.dot(inp, w_packed,
                        preferred_element_type=jnp.float32) + bias  # (Bb, 8*Hd)

        i_f, f_f, g_f, o_f = split_gates(gates[:, :G])
        i_b, f_b, g_b, o_b = split_gates(gates[:, G:])

        cf_new = f_f * cf + i_f * g_f
        hf_new = o_f * jnp.tanh(cf_new)
        cb_new = f_b * cb + i_b * g_b
        hb_new = o_b * jnp.tanh(cb_new)

        # Length-masked state carry (packed-sequence semantics).
        hf = jnp.where(m_f, hf_new, hf)
        cf = jnp.where(m_f, cf_new, cf)
        hb = jnp.where(m_b, hb_new, hb)
        cb = jnp.where(m_b, cb_new, cb)

        # relu(encoder output), zero at padded positions; accumulate
        # tag_rep = bmm(dm_mask, relu(enc)) in-loop (no (S,B,H) scratch, no concat).
        enc_f = jnp.where(m_f, jnp.maximum(hf, 0.0), 0.0)    # (Bb, Hd)
        enc_b = jnp.where(m_b, jnp.maximum(hb, 0.0), 0.0)
        tag_f = tag_f + dm_ref[t] * enc_f[:, None, :]        # (Bb,M,1)*(Bb,1,Hd)->(Bb,M,Hd)
        tag_b = tag_b + dm_ref[tb] * enc_b[:, None, :]
        return hf, cf, hb, cb, tag_f, tag_b

    zeros_h = jnp.zeros((Bb, Hd), jnp.float32)
    zeros_t = jnp.zeros((Bb, M, Hd), jnp.float32)
    carry = (zeros_h, zeros_h, zeros_h, zeros_h, zeros_t, zeros_t)
    # Unrolled recurrence: lets the scheduler interleave the two directions'
    # MXU / EUP latencies across iterations.
    _, _, _, _, tag_f, tag_b = jax.lax.fori_loop(0, S, step, carry, unroll=True)

    # Classifier: tag @ wc + bc with wc split per direction (no concat needed).
    wc_f = wcf_ref[...]
    wc_b = wcb_ref[...]
    bc = bc_ref[...]                                          # (1, L)
    rows = []
    for b in range(Bb):                                       # static, small batch block
        rows.append(jnp.dot(tag_f[b], wc_f, preferred_element_type=jnp.float32)
                    + jnp.dot(tag_b[b], wc_b, preferred_element_type=jnp.float32)
                    + bc)                                     # (M, L)
    out_ref[...] = jnp.stack(rows, axis=0)                    # single output store


def modality_classifier_forward(input_ix, dm_mask, params):
    """JAX wrapper: embedding gather + weight packing + layout glue, one Pallas call."""
    B, S = input_ix.shape
    M = dm_mask.shape[1]
    embed_tab = params["embed"]
    E = embed_tab.shape[1]
    Hd = params["whh_f"].shape[0]
    L = params["wc"].shape[1]

    # Embedding gather directly in time-major order: transpose the cheap int32
    # index matrix instead of the f32 activations.  emb_drop/dropout: identity (eval).
    x = embed_tab[input_ix.T].astype(jnp.float32)                     # (S, B, E)

    # pack_padded_sequence lengths: number of non-zero tokens (pad id 0, trailing).
    lengths = (input_ix != 0).sum(-1)                                 # (B,)
    mask = (jnp.arange(S)[:, None] < lengths[None, :]
            ).astype(jnp.float32)[:, :, None]                         # (S, B, 1)

    # dm_mask time-major with trailing singleton lane dim so dm_ref[t] needs no
    # in-kernel relayout: (B, M, S) -> (S, B, M, 1).
    dm_t = jnp.transpose(dm_mask.astype(jnp.float32), (2, 0, 1))[..., None]

    # Fused block-diagonal gate weights: one matmul per timestep covers
    # x@Wih_f + h@Whh_f (cols 0:4Hd) and x@Wih_b + h@Whh_b (cols 4Hd:8Hd).
    In = E + Hd
    w_packed = jnp.zeros((2 * In, 8 * Hd), jnp.float32)
    w_packed = w_packed.at[:E, :4 * Hd].set(params["wih_f"])
    w_packed = w_packed.at[E:In, :4 * Hd].set(params["whh_f"])
    w_packed = w_packed.at[In:In + E, 4 * Hd:].set(params["wih_b"])
    w_packed = w_packed.at[In + E:, 4 * Hd:].set(params["whh_b"])
    b_packed = jnp.concatenate([params["b_f"], params["b_b"]], axis=-1)  # (1, 8*Hd)
    # NOTE: weights kept f32 (not bf16) to stay within the reference tolerance.

    wc_f = params["wc"][:Hd]                                          # (Hd, L)
    wc_b = params["wc"][Hd:]                                          # (Hd, L)
    bc = params["bc"]                                                 # (1, L)

    # Batch-block: whole batch per program at tiny B; for large B (multiple of 16)
    # split over a parallel grid axis so v7x's two TensorCores share the work.
    bb = B // 2 if (B % 16 == 0) else B
    grid = (B // bb,)

    def _full(shape):
        return pl.BlockSpec(shape, lambda i: (0,) * len(shape))

    out = pl.pallas_call(
        _modality_kernel,
        out_shape=jax.ShapeDtypeStruct((B, M, L), jnp.float32),
        grid=grid,
        in_specs=[
            pl.BlockSpec((S, bb, E), lambda i: (0, i, 0)),            # x (time-major)
            pl.BlockSpec((S, bb, 1), lambda i: (0, i, 0)),            # length mask
            pl.BlockSpec((S, bb, M, 1), lambda i: (0, i, 0, 0)),      # dm_mask
            _full(w_packed.shape),
            _full(b_packed.shape),
            _full(wc_f.shape),
            _full(wc_b.shape),
            _full(bc.shape),
        ],
        out_specs=pl.BlockSpec((bb, M, L), lambda i: (i, 0, 0)),
        compiler_params=pltpu.CompilerParams(
            dimension_semantics=("parallel",)),
        # TODO(synk): for long S on v7x (64 MiB VMEM), stream x/dm over a time-chunk
        # grid axis or manual double-buffering instead of whole-array residency.
    )(x, mask, dm_t, w_packed, b_packed, wc_f, wc_b, bc)
    return out


def _reference_forward(input_ix, dm_mask, params):
    """Pure-JAX reference with identical math (for a correctness check)."""
    B, S = input_ix.shape
    Hd = params["whh_f"].shape[0]
    x = jnp.transpose(params["embed"][input_ix], (1, 0, 2)).astype(jnp.float32)
    lengths = (input_ix != 0).sum(-1)
    mask = (jnp.arange(S)[:, None] < lengths[None, :]).astype(jnp.float32)[:, :, None]

    def cell(x_t, h, c, wih, whh, b):
        g = x_t @ wih + h @ whh + b
        i = jax.nn.sigmoid(g[:, :Hd]); f = jax.nn.sigmoid(g[:, Hd:2 * Hd])
        gg = jnp.tanh(g[:, 2 * Hd:3 * Hd]); o = jax.nn.sigmoid(g[:, 3 * Hd:])
        c_new = f * c + i * gg
        return o * jnp.tanh(c_new), c_new

    hf = cf = jnp.zeros((B, Hd)); enc_f = [None] * S
    for t in range(S):
        m = mask[t]
        hn, cn = cell(x[t], hf, cf, params["wih_f"], params["whh_f"], params["b_f"])
        hf = m * hn + (1 - m) * hf; cf = m * cn + (1 - m) * cf
        enc_f[t] = hf * m
    hb = cb = jnp.zeros((B, Hd)); enc_b = [None] * S
    for t in reversed(range(S)):
        m = mask[t]
        hn, cn = cell(x[t], hb, cb, params["wih_b"], params["whh_b"], params["b_b"])
        hb = m * hn + (1 - m) * hb; cb = m * cn + (1 - m) * cb
        enc_b[t] = hb * m
    enc = jnp.concatenate([jnp.stack(enc_f), jnp.stack(enc_b)], axis=-1)
    enc = jnp.maximum(enc, 0.0)
    tag = jnp.einsum('bms,bsh->bmh', dm_mask.astype(jnp.float32),
                     jnp.transpose(enc, (1, 0, 2)))
    return tag @ params["wc"] + params["bc"]


def _init_params(key, vocab, E, Hd, H, num_labels):
    ks = jax.random.split(key, 12)
    bnd_l = 1.0 / jnp.sqrt(Hd)
    bnd_c = 1.0 / jnp.sqrt(H)
    u = lambda k, s, b: jax.random.uniform(k, s, jnp.float32, -b, b)
    return {
        "embed": 0.1 * jax.random.normal(ks[0], (vocab, E), jnp.float32),
        # weights pre-transposed for x @ W_ih^T, h @ W_hh^T; biases combined (b_ih + b_hh).
        "wih_f": u(ks[1], (E, 4 * Hd), bnd_l),
        "whh_f": u(ks[2], (Hd, 4 * Hd), bnd_l),
        "b_f":   u(ks[3], (1, 4 * Hd), bnd_l) + u(ks[4], (1, 4 * Hd), bnd_l),
        "wih_b": u(ks[5], (E, 4 * Hd), bnd_l),
        "whh_b": u(ks[6], (Hd, 4 * Hd), bnd_l),
        "b_b":   u(ks[7], (1, 4 * Hd), bnd_l) + u(ks[8], (1, 4 * Hd), bnd_l),
        "wc":    u(ks[9], (H, num_labels), bnd_c),
        "bc":    u(ks[10], (1, num_labels), bnd_c),
    }


if __name__ == "__main__":
    # Small shapes: batch=2, seq=8, embed=32, hidden_size=32 (16 per direction),
    # entity_num=4, num_labels=3, vocab=50.
    B, S, E, H, M, NUM_LABELS, VOCAB = 2, 8, 32, 32, 4, 3, 50
    Hd = H // 2

    key = jax.random.PRNGKey(0)
    k_par, k_ids, k_dm = jax.random.split(key, 3)
    params = _init_params(k_par, VOCAB, E, Hd, H, NUM_LABELS)

    # token ids with trailing zero padding (lengths 8 and 5)
    ids = jax.random.randint(k_ids, (B, S), 1, VOCAB, dtype=jnp.int32)
    pad_col = jnp.arange(S)[None, :] >= jnp.array([S, 5])[:, None]
    input_ix = jnp.where(pad_col, 0, ids)

    dm_mask = jax.random.uniform(k_dm, (B, M, S), jnp.float32)

    logits = modality_classifier_forward(input_ix, dm_mask, params)
    logits = jax.block_until_ready(logits)

    ref = _reference_forward(input_ix, dm_mask, params)
    assert logits.shape == (B, M, NUM_LABELS)
    assert jnp.allclose(logits, ref, atol=1e-4, rtol=1e-4), (
        f"max err {jnp.max(jnp.abs(logits - ref))}")

    print("KERNEL_OK")
</pallas_src>

<mosaic_0001>
module attributes {stable_mosaic.version = 11 : i64} {
  func.func @_modality_kernel(%arg0: i32, %arg1: memref<8x2x32xf32, #tpu.memory_space<vmem>>, %arg2: memref<8x2x1xf32, #tpu.memory_space<vmem>>, %arg3: memref<8x2x4x1xf32, #tpu.memory_space<vmem>>, %arg4: memref<96x128xf32, #tpu.memory_space<vmem>>, %arg5: memref<1x128xf32, #tpu.memory_space<vmem>>, %arg6: memref<16x3xf32, #tpu.memory_space<vmem>>, %arg7: memref<16x3xf32, #tpu.memory_space<vmem>>, %arg8: memref<1x3xf32, #tpu.memory_space<vmem>>, %arg9: memref<2x4x3xf32, #tpu.memory_space<vmem>>) attributes {dimension_semantics = [#tpu.dimension_semantics<parallel>], iteration_bounds = array<i64: 1>, scalar_prefetch = 0 : i64, scratch_operands = 0 : i64, tpu.core_type = #tpu.core_type<tc>, window_params = [{transform_indices = @transform_0, window_bounds = array<i64: 8, 2, 32>}, {transform_indices = @transform_1, window_bounds = array<i64: 8, 2, 1>}, {transform_indices = @transform_2, window_bounds = array<i64: 8, 2, 4, 1>}, {pipeline_mode = #tpu.pipeline_mode<synchronous>, transform_indices = @transform_3, window_bounds = array<i64: 96, 128>}, {pipeline_mode = #tpu.pipeline_mode<synchronous>, transform_indices = @transform_4, window_bounds = array<i64: 1, 128>}, {pipeline_mode = #tpu.pipeline_mode<synchronous>, transform_indices = @transform_5, window_bounds = array<i64: 16, 3>}, {pipeline_mode = #tpu.pipeline_mode<synchronous>, transform_indices = @transform_6, window_bounds = array<i64: 16, 3>}, {pipeline_mode = #tpu.pipeline_mode<synchronous>, transform_indices = @transform_7, window_bounds = array<i64: 1, 3>}, {transform_indices = @transform_8, window_bounds = array<i64: 2, 4, 3>}]} {
    %c0 = arith.constant 0 : index
    %c0_0 = arith.constant 0 : index
    %0 = vector.load %arg4[%c0, %c0_0] : memref<96x128xf32, #tpu.memory_space<vmem>>, vector<96x128xf32>
    %c0_1 = arith.constant 0 : index
    %c0_2 = arith.constant 0 : index
    %1 = vector.load %arg5[%c0_1, %c0_2] : memref<1x128xf32, #tpu.memory_space<vmem>>, vector<1x128xf32>
    %2 = vector.shape_cast %1 : vector<1x128xf32> to vector<1x128xf32>
    %3 = vector.broadcast %2 : vector<1x128xf32> to vector<2x128xf32>
    %cst = arith.constant 0.000000e+00 : f32
    %4 = vector.broadcast %cst : f32 to vector<2x16xf32>
    %cst_3 = arith.constant 0.000000e+00 : f32
    %5 = vector.broadcast %cst_3 : f32 to vector<2x4x16xf32>
    %c0_i32 = arith.constant 0 : i32
    %c7_i32 = arith.constant 7 : i32
    %6 = arith.subi %c7_i32, %c0_i32 : i32
    %7 = arith.index_cast %c0_i32 : i32 to index
    %c0_4 = arith.constant 0 : index
    %c0_5 = arith.constant 0 : index
    %8 = vector.load %arg1[%7, %c0_4, %c0_5] : memref<8x2x32xf32, #tpu.memory_space<vmem>>, vector<1x2x32xf32>
    %9 = vector.shape_cast %8 : vector<1x2x32xf32> to vector<2x32xf32>
    %10 = arith.index_cast %6 : i32 to index
    %c0_6 = arith.constant 0 : index
    %c0_7 = arith.constant 0 : index
    %11 = vector.load %arg1[%10, %c0_6, %c0_7] : memref<8x2x32xf32, #tpu.memory_space<vmem>>, vector<1x2x32xf32>
    %12 = vector.shape_cast %11 : vector<1x2x32xf32> to vector<2x32xf32>
    %13 = arith.index_cast %c0_i32 : i32 to index
    %c0_8 = arith.constant 0 : index
    %c0_9 = arith.constant 0 : index
    %14 = vector.load %arg2[%13, %c0_8, %c0_9] : memref<8x2x1xf32, #tpu.memory_space<vmem>>, vector<1x2x1xf32>
    %15 = vector.shape_cast %14 : vector<1x2x1xf32> to vector<2x1xf32>
    %cst_10 = arith.constant 0.000000e+00 : f32
    %16 = vector.broadcast %cst_10 : f32 to vector<2x1xf32>
    %17 = arith.cmpf ogt, %15, %16 : vector<2x1xf32>
    %18 = arith.index_cast %6 : i32 to index
    %c0_11 = arith.constant 0 : index
    %c0_12 = arith.constant 0 : index
    %19 = vector.load %arg2[%18, %c0_11, %c0_12] : memref<8x2x1xf32, #tpu.memory_space<vmem>>, vector<1x2x1xf32>
    %20 = vector.shape_cast %19 : vector<1x2x1xf32> to vector<2x1xf32>
    %cst_13 = arith.constant 0.000000e+00 : f32
    %21 = vector.broadcast %cst_13 : f32 to vector<2x1xf32>
    %22 = arith.cmpf ogt, %20, %21 : vector<2x1xf32>
    %23 = tpu.concatenate %9, %4, %12, %4 in 1 : vector<2x32xf32>, vector<2x16xf32>, vector<2x32xf32>, vector<2x16xf32> -> vector<2x96xf32>
    %cst_14 = arith.constant dense<0.000000e+00> : vector<2x128xf32>
    %24 = tpu.matmul %23, %0, %cst_14 {dimension_numbers = #tpu.dot_dimension_numbers<[1], [0], [0], [1], [0, 0, 1, 1], [], []>} : vector<2x96xf32>, vector<96x128xf32>, vector<2x128xf32> -> vector<2x128xf32>
    %25 = arith.addf %24, %3 : vector<2x128xf32>
    %26 = vector.extract_strided_slice %25 {offsets = [0, 0], sizes = [2, 64], strides = [1, 1]} : vector<2x128xf32> to vector<2x64xf32>
    %27 = vector.extract_strided_slice %26 {offsets = [0, 0], sizes = [2, 16], strides = [1, 1]} : vector<2x64xf32> to vector<2x16xf32>
    %28 = arith.negf %27 : vector<2x16xf32>
    %29 = math.exp %28 : vector<2x16xf32>
    %cst_15 = arith.constant 1.000000e+00 : f32
    %30 = vector.broadcast %cst_15 : f32 to vector<2x16xf32>
    %31 = arith.addf %30, %29 : vector<2x16xf32>
    %32 = arith.divf %30, %31 : vector<2x16xf32>
    %33 = vector.extract_strided_slice %26 {offsets = [0, 16], sizes = [2, 16], strides = [1, 1]} : vector<2x64xf32> to vector<2x16xf32>
    %34 = arith.negf %33 : vector<2x16xf32>
    %35 = math.exp %34 : vector<2x16xf32>
    %cst_16 = arith.constant 1.000000e+00 : f32
    %36 = vector.broadcast %cst_16 : f32 to vector<2x16xf32>
    %37 = arith.addf %36, %35 : vector<2x16xf32>
    %38 = arith.divf %36, %37 : vector<2x16xf32>
    %39 = vector.extract_strided_slice %26 {offsets = [0, 32], sizes = [2, 16], strides = [1, 1]} : vector<2x64xf32> to vector<2x16xf32>
    %40 = math.tanh %39 : vector<2x16xf32>
    %41 = vector.extract_strided_slice %26 {offsets = [0, 48], sizes = [2, 16], strides = [1, 1]} : vector<2x64xf32> to vector<2x16xf32>
    %42 = arith.negf %41 : vector<2x16xf32>
    %43 = math.exp %42 : vector<2x16xf32>
    %cst_17 = arith.constant 1.000000e+00 : f32
    %44 = vector.broadcast %cst_17 : f32 to vector<2x16xf32>
    %45 = arith.addf %44, %43 : vector<2x16xf32>
    %46 = arith.divf %44, %45 : vector<2x16xf32>
    %47 = vector.extract_strided_slice %25 {offsets = [0, 64], sizes = [2, 64], strides = [1, 1]} : vector<2x128xf32> to vector<2x64xf32>
    %48 = vector.extract_strided_slice %47 {offsets = [0, 0], sizes = [2, 16], strides = [1, 1]} : vector<2x64xf32> to vector<2x16xf32>
    %49 = arith.negf %48 : vector<2x16xf32>
    %50 = math.exp %49 : vector<2x16xf32>
    %cst_18 = arith.constant 1.000000e+00 : f32
    %51 = vector.broadcast %cst_18 : f32 to vector<2x16xf32>
    %52 = arith.addf %51, %50 : vector<2x16xf32>
    %53 = arith.divf %51, %52 : vector<2x16xf32>
    %54 = vector.extract_strided_slice %47 {offsets = [0, 16], sizes = [2, 16], strides = [1, 1]} : vector<2x64xf32> to vector<2x16xf32>
    %55 = arith.negf %54 : vector<2x16xf32>
    %56 = math.exp %55 : vector<2x16xf32>
    %cst_19 = arith.constant 1.000000e+00 : f32
    %57 = vector.broadcast %cst_19 : f32 to vector<2x16xf32>
    %58 = arith.addf %57, %56 : vector<2x16xf32>
    %59 = arith.divf %57, %58 : vector<2x16xf32>
    %60 = vector.extract_strided_slice %47 {offsets = [0, 32], sizes = [2, 16], strides = [1, 1]} : vector<2x64xf32> to vector<2x16xf32>
    %61 = math.tanh %60 : vector<2x16xf32>
    %62 = vector.extract_strided_slice %47 {offsets = [0, 48], sizes = [2, 16], strides = [1, 1]} : vector<2x64xf32> to vector<2x16xf32>
    %63 = arith.negf %62 : vector<2x16xf32>
    %64 = math.exp %63 : vector<2x16xf32>
    %cst_20 = arith.constant 1.000000e+00 : f32
    %65 = vector.broadcast %cst_20 : f32 to vector<2x16xf32>
    %66 = arith.addf %65, %64 : vector<2x16xf32>
    %67 = arith.divf %65, %66 : vector<2x16xf32>
    %68 = arith.mulf %38, %4 : vector<2x16xf32>
    %69 = arith.mulf %32, %40 : vector<2x16xf32>
    %70 = arith.addf %68, %69 : vector<2x16xf32>
    %71 = math.tanh %70 : vector<2x16xf32>
    %72 = arith.mulf %46, %71 : vector<2x16xf32>
    %73 = arith.mulf %59, %4 : vector<2x16xf32>
    %74 = arith.mulf %53, %61 : vector<2x16xf32>
    %75 = arith.addf %73, %74 : vector<2x16xf32>
    %76 = math.tanh %75 : vector<2x16xf32>
    %77 = arith.mulf %67, %76 : vector<2x16xf32>
    %78 = vector.shape_cast %17 : vector<2x1xi1> to vector<2x1xi1>
    %79 = vector.broadcast %78 : vector<2x1xi1> to vector<2x16xi1>
    %80 = arith.select %79, %72, %4 : vector<2x16xi1>, vector<2x16xf32>
    %81 = vector.shape_cast %17 : vector<2x1xi1> to vector<2x1xi1>
    %82 = vector.broadcast %81 : vector<2x1xi1> to vector<2x16xi1>
    %83 = arith.select %82, %70, %4 : vector<2x16xi1>, vector<2x16xf32>
    %84 = vector.shape_cast %22 : vector<2x1xi1> to vector<2x1xi1>
    %85 = vector.broadcast %84 : vector<2x1xi1> to vector<2x16xi1>
    %86 = arith.select %85, %77, %4 : vector<2x16xi1>, vector<2x16xf32>
    %87 = vector.shape_cast %22 : vector<2x1xi1> to vector<2x1xi1>
    %88 = vector.broadcast %87 : vector<2x1xi1> to vector<2x16xi1>
    %89 = arith.select %88, %75, %4 : vector<2x16xi1>, vector<2x16xf32>
    %cst_21 = arith.constant 0.000000e+00 : f32
    %90 = vector.broadcast %cst_21 : f32 to vector<2x16xf32>
    %91 = arith.maximumf %80, %90 : vector<2x16xf32>
    %cst_22 = arith.constant 0.000000e+00 : f32
    %92 = vector.shape_cast %17 : vector<2x1xi1> to vector<2x1xi1>
    %93 = vector.broadcast %92 : vector<2x1xi1> to vector<2x16xi1>
    %94 = vector.broadcast %cst_22 : f32 to vector<2x16xf32>
    %95 = arith.select %93, %91, %94 : vector<2x16xi1>, vector<2x16xf32>
    %cst_23 = arith.constant 0.000000e+00 : f32
    %96 = vector.broadcast %cst_23 : f32 to vector<2x16xf32>
    %97 = arith.maximumf %86, %96 : vector<2x16xf32>
    %cst_24 = arith.constant 0.000000e+00 : f32
    %98 = vector.shape_cast %22 : vector<2x1xi1> to vector<2x1xi1>
    %99 = vector.broadcast %98 : vector<2x1xi1> to vector<2x16xi1>
    %100 = vector.broadcast %cst_24 : f32 to vector<2x16xf32>
    %101 = arith.select %99, %97, %100 : vector<2x16xi1>, vector<2x16xf32>
    %102 = arith.index_cast %c0_i32 : i32 to index
    %c0_25 = arith.constant 0 : index
    %c0_26 = arith.constant 0 : index
    %c0_27 = arith.constant 0 : index
    %103 = vector.load %arg3[%102, %c0_25, %c0_26, %c0_27] : memref<8x2x4x1xf32, #tpu.memory_space<vmem>>, vector<1x2x4x1xf32>
    %104 = vector.shape_cast %103 : vector<1x2x4x1xf32> to vector<2x4x1xf32>
    %105 = vector.shape_cast %95 : vector<2x16xf32> to vector<2x1x16xf32>
    %106 = vector.broadcast %104 : vector<2x4x1xf32> to vector<2x4x16xf32>
    %107 = vector.broadcast %105 : vector<2x1x16xf32> to vector<2x4x16xf32>
    %108 = arith.mulf %106, %107 : vector<2x4x16xf32>
    %109 = arith.addf %5, %108 : vector<2x4x16xf32>
    %110 = arith.index_cast %6 : i32 to index
    %c0_28 = arith.constant 0 : index
    %c0_29 = arith.constant 0 : index
    %c0_30 = arith.constant 0 : index
    %111 = vector.load %arg3[%110, %c0_28, %c0_29, %c0_30] : memref<8x2x4x1xf32, #tpu.memory_space<vmem>>, vector<1x2x4x1xf32>
    %112 = vector.shape_cast %111 : vector<1x2x4x1xf32> to vector<2x4x1xf32>
    %113 = vector.shape_cast %101 : vector<2x16xf32> to vector<2x1x16xf32>
    %114 = vector.broadcast %112 : vector<2x4x1xf32> to vector<2x4x16xf32>
    %115 = vector.broadcast %113 : vector<2x1x16xf32> to vector<2x4x16xf32>
    %116 = arith.mulf %114, %115 : vector<2x4x16xf32>
    %117 = arith.addf %5, %116 : vector<2x4x16xf32>
    %c1_i32 = arith.constant 1 : i32
    %c7_i32_31 = arith.constant 7 : i32
    %118 = arith.subi %c7_i32_31, %c1_i32 : i32
    %119 = arith.index_cast %c1_i32 : i32 to index
    %c0_32 = arith.constant 0 : index
    %c0_33 = arith.constant 0 : index
    %120 = vector.load %arg1[%119, %c0_32, %c0_33] : memref<8x2x32xf32, #tpu.memory_space<vmem>>, vector<1x2x32xf32>
    %121 = vector.shape_cast %120 : vector<1x2x32xf32> to vector<2x32xf32>
    %122 = arith.index_cast %118 : i32 to index
    %c0_34 = arith.constant 0 : index
    %c0_35 = arith.constant 0 : index
    %123 = vector.load %arg1[%122, %c0_34, %c0_35] : memref<8x2x32xf32, #tpu.memory_space<vmem>>, vector<1x2x32xf32>
    %124 = vector.shape_cast %123 : vector<1x2x32xf32> to vector<2x32xf32>
    %125 = arith.index_cast %c1_i32 : i32 to index
    %c0_36 = arith.constant 0 : index
    %c0_37 = arith.constant 0 : index
    %126 = vector.load %arg2[%125, %c0_36, %c0_37] : memref<8x2x1xf32, #tpu.memory_space<vmem>>, vector<1x2x1xf32>
    %127 = vector.shape_cast %126 : vector<1x2x1xf32> to vector<2x1xf32>
    %cst_38 = arith.constant 0.000000e+00 : f32
    %128 = vector.broadcast %cst_38 : f32 to vector<2x1xf32>
    %129 = arith.cmpf ogt, %127, %128 : vector<2x1xf32>
    %130 = arith.index_cast %118 : i32 to index
    %c0_39 = arith.constant 0 : index
    %c0_40 = arith.constant 0 : index
    %131 = vector.load %arg2[%130, %c0_39, %c0_40] : memref<8x2x1xf32, #tpu.memory_space<vmem>>, vector<1x2x1xf32>
    %132 = vector.shape_cast %131 : vector<1x2x1xf32> to vector<2x1xf32>
    %cst_41 = arith.constant 0.000000e+00 : f32
    %133 = vector.broadcast %cst_41 : f32 to vector<2x1xf32>
    %134 = arith.cmpf ogt, %132, %133 : vector<2x1xf32>
    %135 = tpu.concatenate %121, %80, %124, %86 in 1 : vector<2x32xf32>, vector<2x16xf32>, vector<2x32xf32>, vector<2x16xf32> -> vector<2x96xf32>
    %cst_42 = arith.constant dense<0.000000e+00> : vector<2x128xf32>
    %136 = tpu.matmul %135, %0, %cst_42 {dimension_numbers = #tpu.dot_dimension_numbers<[1], [0], [0], [1], [0, 0, 1, 1], [], []>} : vector<2x96xf32>, vector<96x128xf32>, vector<2x128xf32> -> vector<2x128xf32>
    %137 = arith.addf %136, %3 : vector<2x128xf32>
    %138 = vector.extract_strided_slice %137 {offsets = [0, 0], sizes = [2, 64], strides = [1, 1]} : vector<2x128xf32> to vector<2x64xf32>
    %139 = vector.extract_strided_slice %138 {offsets = [0, 0], sizes = [2, 16], strides = [1, 1]} : vector<2x64xf32> to vector<2x16xf32>
    %140 = arith.negf %139 : vector<2x16xf32>
    %141 = math.exp %140 : vector<2x16xf32>
    %cst_43 = arith.constant 1.000000e+00 : f32
    %142 = vector.broadcast %cst_43 : f32 to vector<2x16xf32>
    %143 = arith.addf %142, %141 : vector<2x16xf32>
    %144 = arith.divf %142, %143 : vector<2x16xf32>
    %145 = vector.extract_strided_slice %138 {offsets = [0, 16], sizes = [2, 16], strides = [1, 1]} : vector<2x64xf32> to vector<2x16xf32>
    %146 = arith.negf %145 : vector<2x16xf32>
    %147 = math.exp %146 : vector<2x16xf32>
    %cst_44 = arith.constant 1.000000e+00 : f32
    %148 = vector.broadcast %cst_44 : f32 to vector<2x16xf32>
    %149 = arith.addf %148, %147 : vector<2x16xf32>
    %150 = arith.divf %148, %149 : vector<2x16xf32>
    %151 = vector.extract_strided_slice %138 {offsets = [0, 32], sizes = [2, 16], strides = [1, 1]} : vector<2x64xf32> to vector<2x16xf32>
    %152 = math.tanh %151 : vector<2x16xf32>
    %153 = vector.extract_strided_slice %138 {offsets = [0, 48], sizes = [2, 16], strides = [1, 1]} : vector<2x64xf32> to vector<2x16xf32>
    %154 = arith.negf %153 : vector<2x16xf32>
    %155 = math.exp %154 : vector<2x16xf32>
    %cst_45 = arith.constant 1.000000e+00 : f32
    %156 = vector.broadcast %cst_45 : f32 to vector<2x16xf32>
    %157 = arith.addf %156, %155 : vector<2x16xf32>
    %158 = arith.divf %156, %157 : vector<2x16xf32>
    %159 = vector.extract_strided_slice %137 {offsets = [0, 64], sizes = [2, 64], strides = [1, 1]} : vector<2x128xf32> to vector<2x64xf32>
    %160 = vector.extract_strided_slice %159 {offsets = [0, 0], sizes = [2, 16], strides = [1, 1]} : vector<2x64xf32> to vector<2x16xf32>
    %161 = arith.negf %160 : vector<2x16xf32>
    %162 = math.exp %161 : vector<2x16xf32>
    %cst_46 = arith.constant 1.000000e+00 : f32
    %163 = vector.broadcast %cst_46 : f32 to vector<2x16xf32>
    %164 = arith.addf %163, %162 : vector<2x16xf32>
    %165 = arith.divf %163, %164 : vector<2x16xf32>
    %166 = vector.extract_strided_slice %159 {offsets = [0, 16], sizes = [2, 16], strides = [1, 1]} : vector<2x64xf32> to vector<2x16xf32>
    %167 = arith.negf %166 : vector<2x16xf32>
    %168 = math.exp %167 : vector<2x16xf32>
    %cst_47 = arith.constant 1.000000e+00 : f32
    %169 = vector.broadcast %cst_47 : f32 to vector<2x16xf32>
    %170 = arith.addf %169, %168 : vector<2x16xf32>
    %171 = arith.divf %169, %170 : vector<2x16xf32>
    %172 = vector.extract_strided_slice %159 {offsets = [0, 32], sizes = [2, 16], strides = [1, 1]} : vector<2x64xf32> to vector<2x16xf32>
    %173 = math.tanh %172 : vector<2x16xf32>
    %174 = vector.extract_strided_slice %159 {offsets = [0, 48], sizes = [2, 16], strides = [1, 1]} : vector<2x64xf32> to vector<2x16xf32>
    %175 = arith.negf %174 : vector<2x16xf32>
    %176 = math.exp %175 : vector<2x16xf32>
    %cst_48 = arith.constant 1.000000e+00 : f32
    %177 = vector.broadcast %cst_48 : f32 to vector<2x16xf32>
    %178 = arith.addf %177, %176 : vector<2x16xf32>
    %179 = arith.divf %177, %178 : vector<2x16xf32>
    %180 = arith.mulf %150, %83 : vector<2x16xf32>
    %181 = arith.mulf %144, %152 : vector<2x16xf32>
    %182 = arith.addf %180, %181 : vector<2x16xf32>
    %183 = math.tanh %182 : vector<2x16xf32>
    %184 = arith.mulf %158, %183 : vector<2x16xf32>
    %185 = arith.mulf %171, %89 : vector<2x16xf32>
    %186 = arith.mulf %165, %173 : vector<2x16xf32>
    %187 = arith.addf %185, %186 : vector<2x16xf32>
    %188 = math.tanh %187 : vector<2x16xf32>
    %189 = arith.mulf %179, %188 : vector<2x16xf32>
    %190 = vector.shape_cast %129 : vector<2x1xi1> to vector<2x1xi1>
    %191 = vector.broadcast %190 : vector<2x1xi1> to vector<2x16xi1>
    %192 = arith.select %191, %184, %80 : vector<2x16xi1>, vector<2x16xf32>
    %193 = vector.shape_cast %129 : vector<2x1xi1> to vector<2x1xi1>
    %194 = vector.broadcast %193 : vector<2x1xi1> to vector<2x16xi1>
    %195 = arith.select %194, %182, %83 : vector<2x16xi1>, vector<2x16xf32>
    %196 = vector.shape_cast %134 : vector<2x1xi1> to vector<2x1xi1>
    %197 = vector.broadcast %196 : vector<2x1xi1> to vector<2x16xi1>
    %198 = arith.select %197, %189, %86 : vector<2x16xi1>, vector<2x16xf32>
    %199 = vector.shape_cast %134 : vector<2x1xi1> to vector<2x1xi1>
    %200 = vector.broadcast %199 : vector<2x1xi1> to vector<2x16xi1>
    %201 = arith.select %200, %187, %89 : vector<2x16xi1>, vector<2x16xf32>
    %cst_49 = arith.constant 0.000000e+00 : f32
    %202 = vector.broadcast %cst_49 : f32 to vector<2x16xf32>
    %203 = arith.maximumf %192, %202 : vector<2x16xf32>
    %cst_50 = arith.constant 0.000000e+00 : f32
    %204 = vector.shape_cast %129 : vector<2x1xi1> to vector<2x1xi1>
    %205 = vector.broadcast %204 : vector<2x1xi1> to vector<2x16xi1>
    %206 = vector.broadcast %cst_50 : f32 to vector<2x16xf32>
    %207 = arith.select %205, %203, %206 : vector<2x16xi1>, vector<2x16xf32>
    %cst_51 = arith.constant 0.000000e+00 : f32
    %208 = vector.broadcast %cst_51 : f32 to vector<2x16xf32>
    %209 = arith.maximumf %198, %208 : vector<2x16xf32>
    %cst_52 = arith.constant 0.000000e+00 : f32
    %210 = vector.shape_cast %134 : vector<2x1xi1> to vector<2x1xi1>
    %211 = vector.broadcast %210 : vector<2x1xi1> to vector<2x16xi1>
    %212 = vector.broadcast %cst_52 : f32 to vector<2x16xf32>
    %213 = arith.select %211, %209, %212 : vector<2x16xi1>, vector<2x16xf32>
    %214 = arith.index_cast %c1_i32 : i32 to index
    %c0_53 = arith.constant 0 : index
    %c0_54 = arith.constant 0 : index
    %c0_55 = arith.constant 0 : index
    %215 = vector.load %arg3[%214, %c0_53, %c0_54, %c0_55] : memref<8x2x4x1xf32, #tpu.memory_space<vmem>>, vector<1x2x4x1xf32>
    %216 = vector.shape_cast %215 : vector<1x2x4x1xf32> to vector<2x4x1xf32>
    %217 = vector.shape_cast %207 : vector<2x16xf32> to vector<2x1x16xf32>
    %218 = vector.broadcast %216 : vector<2x4x1xf32> to vector<2x4x16xf32>
    %219 = vector.broadcast %217 : vector<2x1x16xf32> to vector<2x4x16xf32>
    %220 = arith.mulf %218, %219 : vector<2x4x16xf32>
    %221 = arith.addf %109, %220 : vector<2x4x16xf32>
    %222 = arith.index_cast %118 : i32 to index
    %c0_56 = arith.constant 0 : index
    %c0_57 = arith.constant 0 : index
    %c0_58 = arith.constant 0 : index
    %223 = vector.load %arg3[%222, %c0_56, %c0_57, %c0_58] : memref<8x2x4x1xf32, #tpu.memory_space<vmem>>, vector<1x2x4x1xf32>
    %224 = vector.shape_cast %223 : vector<1x2x4x1xf32> to vector<2x4x1xf32>
    %225 = vector.shape_cast %213 : vector<2x16xf32> to vector<2x1x16xf32>
    %226 = vector.broadcast %224 : vector<2x4x1xf32> to vector<2x4x16xf32>
    %227 = vector.broadcast %225 : vector<2x1x16xf32> to vector<2x4x16xf32>
    %228 = arith.mulf %226, %227 : vector<2x4x16xf32>
    %229 = arith.addf %117, %228 : vector<2x4x16xf32>
    %c2_i32 = arith.constant 2 : i32
    %c7_i32_59 = arith.constant 7 : i32
    %230 = arith.subi %c7_i32_59, %c2_i32 : i32
    %231 = arith.index_cast %c2_i32 : i32 to index
    %c0_60 = arith.constant 0 : index
    %c0_61 = arith.constant 0 : index
    %232 = vector.load %arg1[%231, %c0_60, %c0_61] : memref<8x2x32xf32, #tpu.memory_space<vmem>>, vector<1x2x32xf32>
    %233 = vector.shape_cast %232 : vector<1x2x32xf32> to vector<2x32xf32>
    %234 = arith.index_cast %230 : i32 to index
    %c0_62 = arith.constant 0 : index
    %c0_63 = arith.constant 0 : index
    %235 = vector.load %arg1[%234, %c0_62, %c0_63] : memref<8x2x32xf32, #tpu.memory_space<vmem>>, vector<1x2x32xf32>
    %236 = vector.shape_cast %235 : vector<1x2x32xf32> to vector<2x32xf32>
    %237 = arith.index_cast %c2_i32 : i32 to index
    %c0_64 = arith.constant 0 : index
    %c0_65 = arith.constant 0 : index
    %238 = vector.load %arg2[%237, %c0_64, %c0_65] : memref<8x2x1xf32, #tpu.memory_space<vmem>>, vector<1x2x1xf32>
    %239 = vector.shape_cast %238 : vector<1x2x1xf32> to vector<2x1xf32>
    %cst_66 = arith.constant 0.000000e+00 : f32
    %240 = vector.broadcast %cst_66 : f32 to vector<2x1xf32>
    %241 = arith.cmpf ogt, %239, %240 : vector<2x1xf32>
    %242 = arith.index_cast %230 : i32 to index
    %c0_67 = arith.constant 0 : index
    %c0_68 = arith.constant 0 : index
    %243 = vector.load %arg2[%242, %c0_67, %c0_68] : memref<8x2x1xf32, #tpu.memory_space<vmem>>, vector<1x2x1xf32>
    %244 = vector.shape_cast %243 : vector<1x2x1xf32> to vector<2x1xf32>
    %cst_69 = arith.constant 0.000000e+00 : f32
    %245 = vector.broadcast %cst_69 : f32 to vector<2x1xf32>
    %246 = arith.cmpf ogt, %244, %245 : vector<2x1xf32>
    %247 = tpu.concatenate %233, %192, %236, %198 in 1 : vector<2x32xf32>, vector<2x16xf32>, vector<2x32xf32>, vector<2x16xf32> -> vector<2x96xf32>
    %cst_70 = arith.constant dense<0.000000e+00> : vector<2x128xf32>
    %248 = tpu.matmul %247, %0, %cst_70 {dimension_numbers = #tpu.dot_dimension_numbers<[1], [0], [0], [1], [0, 0, 1, 1], [], []>} : vector<2x96xf32>, vector<96x128xf32>, vector<2x128xf32> -> vector<2x128xf32>
    %249 = arith.addf %248, %3 : vector<2x128xf32>
    %250 = vector.extract_strided_slice %249 {offsets = [0, 0], sizes = [2, 64], strides = [1, 1]} : vector<2x128xf32> to vector<2x64xf32>
    %251 = vector.extract_strided_slice %250 {offsets = [0, 0], sizes = [2, 16], strides = [1, 1]} : vector<2x64xf32> to vector<2x16xf32>
    %252 = arith.negf %251 : vector<2x16xf32>
    %253 = math.exp %252 : vector<2x16xf32>
    %cst_71 = arith.constant 1.000000e+00 : f32
    %254 = vector.broadcast %cst_71 : f32 to vector<2x16xf32>
    %255 = arith.addf %254, %253 : vector<2x16xf32>
    %256 = arith.divf %254, %255 : vector<2x16xf32>
    %257 = vector.extract_strided_slice %250 {offsets = [0, 16], sizes = [2, 16], strides = [1, 1]} : vector<2x64xf32> to vector<2x16xf32>
    %258 = arith.negf %257 : vector<2x16xf32>
    %259 = math.exp %258 : vector<2x16xf32>
    %cst_72 = arith.constant 1.000000e+00 : f32
    %260 = vector.broadcast %cst_72 : f32 to vector<2x16xf32>
    %261 = arith.addf %260, %259 : vector<2x16xf32>
    %262 = arith.divf %260, %261 : vector<2x16xf32>
    %263 = vector.extract_strided_slice %250 {offsets = [0, 32], sizes = [2, 16], strides = [1, 1]} : vector<2x64xf32> to vector<2x16xf32>
    %264 = math.tanh %263 : vector<2x16xf32>
    %265 = vector.extract_strided_slice %250 {offsets = [0, 48], sizes = [2, 16], strides = [1, 1]} : vector<2x64xf32> to vector<2x16xf32>
    %266 = arith.negf %265 : vector<2x16xf32>
    %267 = math.exp %266 : vector<2x16xf32>
    %cst_73 = arith.constant 1.000000e+00 : f32
    %268 = vector.broadcast %cst_73 : f32 to vector<2x16xf32>
    %269 = arith.addf %268, %267 : vector<2x16xf32>
    %270 = arith.divf %268, %269 : vector<2x16xf32>
    %271 = vector.extract_strided_slice %249 {offsets = [0, 64], sizes = [2, 64], strides = [1, 1]} : vector<2x128xf32> to vector<2x64xf32>
    %272 = vector.extract_strided_slice %271 {offsets = [0, 0], sizes = [2, 16], strides = [1, 1]} : vector<2x64xf32> to vector<2x16xf32>
    %273 = arith.negf %272 : vector<2x16xf32>
    %274 = math.exp %273 : vector<2x16xf32>
    %cst_74 = arith.constant 1.000000e+00 : f32
    %275 = vector.broadcast %cst_74 : f32 to vector<2x16xf32>
    %276 = arith.addf %275, %274 : vector<2x16xf32>
    %277 = arith.divf %275, %276 : vector<2x16xf32>
    %278 = vector.extract_strided_slice %271 {offsets = [0, 16], sizes = [2, 16], strides = [1, 1]} : vector<2x64xf32> to vector<2x16xf32>
    %279 = arith.negf %278 : vector<2x16xf32>
    %280 = math.exp %279 : vector<2x16xf32>
    %cst_75 = arith.constant 1.000000e+00 : f32
    %281 = vector.broadcast %cst_75 : f32 to vector<2x16xf32>
    %282 = arith.addf %281, %280 : vector<2x16xf32>
    %283 = arith.divf %281, %282 : vector<2x16xf32>
    %284 = vector.extract_strided_slice %271 {offsets = [0, 32], sizes = [2, 16], strides = [1, 1]} : vector<2x64xf32> to vector<2x16xf32>
    %285 = math.tanh %284 : vector<2x16xf32>
    %286 = vector.extract_strided_slice %271 {offsets = [0, 48], sizes = [2, 16], strides = [1, 1]} : vector<2x64xf32> to vector<2x16xf32>
    %287 = arith.negf %286 : vector<2x16xf32>
    %288 = math.exp %287 : vector<2x16xf32>
    %cst_76 = arith.constant 1.000000e+00 : f32
    %289 = vector.broadcast %cst_76 : f32 to vector<2x16xf32>
    %290 = arith.addf %289, %288 : vector<2x16xf32>
    %291 = arith.divf %289, %290 : vector<2x16xf32>
    %292 = arith.mulf %262, %195 : vector<2x16xf32>
    %293 = arith.mulf %256, %264 : vector<2x16xf32>
    %294 = arith.addf %292, %293 : vector<2x16xf32>
    %295 = math.tanh %294 : vector<2x16xf32>
    %296 = arith.mulf %270, %295 : vector<2x16xf32>
    %297 = arith.mulf %283, %201 : vector<2x16xf32>
    %298 = arith.mulf %277, %285 : vector<2x16xf32>
    %299 = arith.addf %297, %298 : vector<2x16xf32>
    %300 = math.tanh %299 : vector<2x16xf32>
    %301 = arith.mulf %291, %300 : vector<2x16xf32>
    %302 = vector.shape_cast %241 : vector<2x1xi1> to vector<2x1xi1>
    %303 = vector.broadcast %302 : vector<2x1xi1> to vector<2x16xi1>
    %304 = arith.select %303, %296, %192 : vector<2x16xi1>, vector<2x16xf32>
    %305 = vector.shape_cast %241 : vector<2x1xi1> to vector<2x1xi1>
    %306 = vector.broadcast %305 : vector<2x1xi1> to vector<2x16xi1>
    %307 = arith.select %306, %294, %195 : vector<2x16xi1>, vector<2x16xf32>
    %308 = vector.shape_cast %246 : vector<2x1xi1> to vector<2x1xi1>
    %309 = vector.broadcast %308 : vector<2x1xi1> to vector<2x16xi1>
    %310 = arith.select %309, %301, %198 : vector<2x16xi1>, vector<2x16xf32>
    %311 = vector.shape_cast %246 : vector<2x1xi1> to vector<2x1xi1>
    %312 = vector.broadcast %311 : vector<2x1xi1> to vector<2x16xi1>
    %313 = arith.select %312, %299, %201 : vector<2x16xi1>, vector<2x16xf32>
    %cst_77 = arith.constant 0.000000e+00 : f32
    %314 = vector.broadcast %cst_77 : f32 to vector<2x16xf32>
    %315 = arith.maximumf %304, %314 : vector<2x16xf32>
    %cst_78 = arith.constant 0.000000e+00 : f32
    %316 = vector.shape_cast %241 : vector<2x1xi1> to vector<2x1xi1>
    %317 = vector.broadcast %316 : vector<2x1xi1> to vector<2x16xi1>
    %318 = vector.broadcast %cst_78 : f32 to vector<2x16xf32>
    %319 = arith.select %317, %315, %318 : vector<2x16xi1>, vector<2x16xf32>
    %cst_79 = arith.constant 0.000000e+00 : f32
    %320 = vector.broadcast %cst_79 : f32 to vector<2x16xf32>
    %321 = arith.maximumf %310, %320 : vector<2x16xf32>
    %cst_80 = arith.constant 0.000000e+00 : f32
    %322 = vector.shape_cast %246 : vector<2x1xi1> to vector<2x1xi1>
    %323 = vector.broadcast %322 : vector<2x1xi1> to vector<2x16xi1>
    %324 = vector.broadcast %cst_80 : f32 to vector<2x16xf32>
    %325 = arith.select %323, %321, %324 : vector<2x16xi1>, vector<2x16xf32>
    %326 = arith.index_cast %c2_i32 : i32 to index
    %c0_81 = arith.constant 0 : index
    %c0_82 = arith.constant 0 : index
    %c0_83 = arith.constant 0 : index
    %327 = vector.load %arg3[%326, %c0_81, %c0_82, %c0_83] : memref<8x2x4x1xf32, #tpu.memory_space<vmem>>, vector<1x2x4x1xf32>
    %328 = vector.shape_cast %327 : vector<1x2x4x1xf32> to vector<2x4x1xf32>
    %329 = vector.shape_cast %319 : vector<2x16xf32> to vector<2x1x16xf32>
    %330 = vector.broadcast %328 : vector<2x4x1xf32> to vector<2x4x16xf32>
    %331 = vector.broadcast %329 : vector<2x1x16xf32> to vector<2x4x16xf32>
    %332 = arith.mulf %330, %331 : vector<2x4x16xf32>
    %333 = arith.addf %221, %332 : vector<2x4x16xf32>
    %334 = arith.index_cast %230 : i32 to index
    %c0_84 = arith.constant 0 : index
    %c0_85 = arith.constant 0 : index
    %c0_86 = arith.constant 0 : index
    %335 = vector.load %arg3[%334, %c0_84, %c0_85, %c0_86] : memref<8x2x4x1xf32, #tpu.memory_space<vmem>>, vector<1x2x4x1xf32>
    %336 = vector.shape_cast %335 : vector<1x2x4x1xf32> to vector<2x4x1xf32>
    %337 = vector.shape_cast %325 : vector<2x16xf32> to vector<2x1x16xf32>
    %338 = vector.broadcast %336 : vector<2x4x1xf32> to vector<2x4x16xf32>
    %339 = vector.broadcast %337 : vector<2x1x16xf32> to vector<2x4x16xf32>
    %340 = arith.mulf %338, %339 : vector<2x4x16xf32>
    %341 = arith.addf %229, %340 : vector<2x4x16xf32>
    %c3_i32 = arith.constant 3 : i32
    %c7_i32_87 = arith.constant 7 : i32
    %342 = arith.subi %c7_i32_87, %c3_i32 : i32
    %343 = arith.index_cast %c3_i32 : i32 to index
    %c0_88 = arith.constant 0 : index
    %c0_89 = arith.constant 0 : index
    %344 = vector.load %arg1[%343, %c0_88, %c0_89] : memref<8x2x32xf32, #tpu.memory_space<vmem>>, vector<1x2x32xf32>
    %345 = vector.shape_cast %344 : vector<1x2x32xf32> to vector<2x32xf32>
    %346 = arith.index_cast %342 : i32 to index
    %c0_90 = arith.constant 0 : index
    %c0_91 = arith.constant 0 : index
    %347 = vector.load %arg1[%346, %c0_90, %c0_91] : memref<8x2x32xf32, #tpu.memory_space<vmem>>, vector<1x2x32xf32>
    %348 = vector.shape_cast %347 : vector<1x2x32xf32> to vector<2x32xf32>
    %349 = arith.index_cast %c3_i32 : i32 to index
    %c0_92 = arith.constant 0 : index
    %c0_93 = arith.constant 0 : index
    %350 = vector.load %arg2[%349, %c0_92, %c0_93] : memref<8x2x1xf32, #tpu.memory_space<vmem>>, vector<1x2x1xf32>
    %351 = vector.shape_cast %350 : vector<1x2x1xf32> to vector<2x1xf32>
    %cst_94 = arith.constant 0.000000e+00 : f32
    %352 = vector.broadcast %cst_94 : f32 to vector<2x1xf32>
    %353 = arith.cmpf ogt, %351, %352 : vector<2x1xf32>
    %354 = arith.index_cast %342 : i32 to index
    %c0_95 = arith.constant 0 : index
    %c0_96 = arith.constant 0 : index
    %355 = vector.load %arg2[%354, %c0_95, %c0_96] : memref<8x2x1xf32, #tpu.memory_space<vmem>>, vector<1x2x1xf32>
    %356 = vector.shape_cast %355 : vector<1x2x1xf32> to vector<2x1xf32>
    %cst_97 = arith.constant 0.000000e+00 : f32
    %357 = vector.broadcast %cst_97 : f32 to vector<2x1xf32>
    %358 = arith.cmpf ogt, %356, %357 : vector<2x1xf32>
    %359 = tpu.concatenate %345, %304, %348, %310 in 1 : vector<2x32xf32>, vector<2x16xf32>, vector<2x32xf32>, vector<2x16xf32> -> vector<2x96xf32>
    %cst_98 = arith.constant dense<0.000000e+00> : vector<2x128xf32>
    %360 = tpu.matmul %359, %0, %cst_98 {dimension_numbers = #tpu.dot_dimension_numbers<[1], [0], [0], [1], [0, 0, 1, 1], [], []>} : vector<2x96xf32>, vector<96x128xf32>, vector<2x128xf32> -> vector<2x128xf32>
    %361 = arith.addf %360, %3 : vector<2x128xf32>
    %362 = vector.extract_strided_slice %361 {offsets = [0, 0], sizes = [2, 64], strides = [1, 1]} : vector<2x128xf32> to vector<2x64xf32>
    %363 = vector.extract_strided_slice %362 {offsets = [0, 0], sizes = [2, 16], strides = [1, 1]} : vector<2x64xf32> to vector<2x16xf32>
    %364 = arith.negf %363 : vector<2x16xf32>
    %365 = math.exp %364 : vector<2x16xf32>
    %cst_99 = arith.constant 1.000000e+00 : f32
    %366 = vector.broadcast %cst_99 : f32 to vector<2x16xf32>
    %367 = arith.addf %366, %365 : vector<2x16xf32>
    %368 = arith.divf %366, %367 : vector<2x16xf32>
    %369 = vector.extract_strided_slice %362 {offsets = [0, 16], sizes = [2, 16], strides = [1, 1]} : vector<2x64xf32> to vector<2x16xf32>
    %370 = arith.negf %369 : vector<2x16xf32>
    %371 = math.exp %370 : vector<2x16xf32>
    %cst_100 = arith.constant 1.000000e+00 : f32
    %372 = vector.broadcast %cst_100 : f32 to vector<2x16xf32>
    %373 = arith.addf %372, %371 : vector<2x16xf32>
    %374 = arith.divf %372, %373 : vector<2x16xf32>
    %375 = vector.extract_strided_slice %362 {offsets = [0, 32], sizes = [2, 16], strides = [1, 1]} : vector<2x64xf32> to vector<2x16xf32>
    %376 = math.tanh %375 : vector<2x16xf32>
    %377 = vector.extract_strided_slice %362 {offsets = [0, 48], sizes = [2, 16], strides = [1, 1]} : vector<2x64xf32> to vector<2x16xf32>
    %378 = arith.negf %377 : vector<2x16xf32>
    %379 = math.exp %378 : vector<2x16xf32>
    %cst_101 = arith.constant 1.000000e+00 : f32
    %380 = vector.broadcast %cst_101 : f32 to vector<2x16xf32>
    %381 = arith.addf %380, %379 : vector<2x16xf32>
    %382 = arith.divf %380, %381 : vector<2x16xf32>
    %383 = vector.extract_strided_slice %361 {offsets = [0, 64], sizes = [2, 64], strides = [1, 1]} : vector<2x128xf32> to vector<2x64xf32>
    %384 = vector.extract_strided_slice %383 {offsets = [0, 0], sizes = [2, 16], strides = [1, 1]} : vector<2x64xf32> to vector<2x16xf32>
    %385 = arith.negf %384 : vector<2x16xf32>
    %386 = math.exp %385 : vector<2x16xf32>
    %cst_102 = arith.constant 1.000000e+00 : f32
    %387 = vector.broadcast %cst_102 : f32 to vector<2x16xf32>
    %388 = arith.addf %387, %386 : vector<2x16xf32>
    %389 = arith.divf %387, %388 : vector<2x16xf32>
    %390 = vector.extract_strided_slice %383 {offsets = [0, 16], sizes = [2, 16], strides = [1, 1]} : vector<2x64xf32> to vector<2x16xf32>
    %391 = arith.negf %390 : vector<2x16xf32>
    %392 = math.exp %391 : vector<2x16xf32>
    %cst_103 = arith.constant 1.000000e+00 : f32
    %393 = vector.broadcast %cst_103 : f32 to vector<2x16xf32>
    %394 = arith.addf %393, %392 : vector<2x16xf32>
    %395 = arith.divf %393, %394 : vector<2x16xf32>
    %396 = vector.extract_strided_slice %383 {offsets = [0, 32], sizes = [2, 16], strides = [1, 1]} : vector<2x64xf32> to vector<2x16xf32>
    %397 = math.tanh %396 : vector<2x16xf32>
    %398 = vector.extract_strided_slice %383 {offsets = [0, 48], sizes = [2, 16], strides = [1, 1]} : vector<2x64xf32> to vector<2x16xf32>
    %399 = arith.negf %398 : vector<2x16xf32>
    %400 = math.exp %399 : vector<2x16xf32>
    %cst_104 = arith.constant 1.000000e+00 : f32
    %401 = vector.broadcast %cst_104 : f32 to vector<2x16xf32>
    %402 = arith.addf %401, %400 : vector<2x16xf32>
    %403 = arith.divf %401, %402 : vector<2x16xf32>
    %404 = arith.mulf %374, %307 : vector<2x16xf32>
    %405 = arith.mulf %368, %376 : vector<2x16xf32>
    %406 = arith.addf %404, %405 : vector<2x16xf32>
    %407 = math.tanh %406 : vector<2x16xf32>
    %408 = arith.mulf %382, %407 : vector<2x16xf32>
    %409 = arith.mulf %395, %313 : vector<2x16xf32>
    %410 = arith.mulf %389, %397 : vector<2x16xf32>
    %411 = arith.addf %409, %410 : vector<2x16xf32>
    %412 = math.tanh %411 : vector<2x16xf32>
    %413 = arith.mulf %403, %412 : vector<2x16xf32>
    %414 = vector.shape_cast %353 : vector<2x1xi1> to vector<2x1xi1>
    %415 = vector.broadcast %414 : vector<2x1xi1> to vector<2x16xi1>
    %416 = arith.select %415, %408, %304 : vector<2x16xi1>, vector<2x16xf32>
    %417 = vector.shape_cast %353 : vector<2x1xi1> to vector<2x1xi1>
    %418 = vector.broadcast %417 : vector<2x1xi1> to vector<2x16xi1>
    %419 = arith.select %418, %406, %307 : vector<2x16xi1>, vector<2x16xf32>
    %420 = vector.shape_cast %358 : vector<2x1xi1> to vector<2x1xi1>
    %421 = vector.broadcast %420 : vector<2x1xi1> to vector<2x16xi1>
    %422 = arith.select %421, %413, %310 : vector<2x16xi1>, vector<2x16xf32>
    %423 = vector.shape_cast %358 : vector<2x1xi1> to vector<2x1xi1>
    %424 = vector.broadcast %423 : vector<2x1xi1> to vector<2x16xi1>
    %425 = arith.select %424, %411, %313 : vector<2x16xi1>, vector<2x16xf32>
    %cst_105 = arith.constant 0.000000e+00 : f32
    %426 = vector.broadcast %cst_105 : f32 to vector<2x16xf32>
    %427 = arith.maximumf %416, %426 : vector<2x16xf32>
    %cst_106 = arith.constant 0.000000e+00 : f32
    %428 = vector.shape_cast %353 : vector<2x1xi1> to vector<2x1xi1>
    %429 = vector.broadcast %428 : vector<2x1xi1> to vector<2x16xi1>
    %430 = vector.broadcast %cst_106 : f32 to vector<2x16xf32>
    %431 = arith.select %429, %427, %430 : vector<2x16xi1>, vector<2x16xf32>
    %cst_107 = arith.constant 0.000000e+00 : f32
    %432 = vector.broadcast %cst_107 : f32 to vector<2x16xf32>
    %433 = arith.maximumf %422, %432 : vector<2x16xf32>
    %cst_108 = arith.constant 0.000000e+00 : f32
    %434 = vector.shape_cast %358 : vector<2x1xi1> to vector<2x1xi1>
    %435 = vector.broadcast %434 : vector<2x1xi1> to vector<2x16xi1>
    %436 = vector.broadcast %cst_108 : f32 to vector<2x16xf32>
    %437 = arith.select %435, %433, %436 : vector<2x16xi1>, vector<2x16xf32>
    %438 = arith.index_cast %c3_i32 : i32 to index
    %c0_109 = arith.constant 0 : index
    %c0_110 = arith.constant 0 : index
    %c0_111 = arith.constant 0 : index
    %439 = vector.load %arg3[%438, %c0_109, %c0_110, %c0_111] : memref<8x2x4x1xf32, #tpu.memory_space<vmem>>, vector<1x2x4x1xf32>
    %440 = vector.shape_cast %439 : vector<1x2x4x1xf32> to vector<2x4x1xf32>
    %441 = vector.shape_cast %431 : vector<2x16xf32> to vector<2x1x16xf32>
    %442 = vector.broadcast %440 : vector<2x4x1xf32> to vector<2x4x16xf32>
    %443 = vector.broadcast %441 : vector<2x1x16xf32> to vector<2x4x16xf32>
    %444 = arith.mulf %442, %443 : vector<2x4x16xf32>
    %445 = arith.addf %333, %444 : vector<2x4x16xf32>
    %446 = arith.index_cast %342 : i32 to index
    %c0_112 = arith.constant 0 : index
    %c0_113 = arith.constant 0 : index
    %c0_114 = arith.constant 0 : index
    %447 = vector.load %arg3[%446, %c0_112, %c0_113, %c0_114] : memref<8x2x4x1xf32, #tpu.memory_space<vmem>>, vector<1x2x4x1xf32>
    %448 = vector.shape_cast %447 : vector<1x2x4x1xf32> to vector<2x4x1xf32>
    %449 = vector.shape_cast %437 : vector<2x16xf32> to vector<2x1x16xf32>
    %450 = vector.broadcast %448 : vector<2x4x1xf32> to vector<2x4x16xf32>
    %451 = vector.broadcast %449 : vector<2x1x16xf32> to vector<2x4x16xf32>
    %452 = arith.mulf %450, %451 : vector<2x4x16xf32>
    %453 = arith.addf %341, %452 : vector<2x4x16xf32>
    %c4_i32 = arith.constant 4 : i32
    %c7_i32_115 = arith.constant 7 : i32
    %454 = arith.subi %c7_i32_115, %c4_i32 : i32
    %455 = arith.index_cast %c4_i32 : i32 to index
    %c0_116 = arith.constant 0 : index
    %c0_117 = arith.constant 0 : index
    %456 = vector.load %arg1[%455, %c0_116, %c0_117] : memref<8x2x32xf32, #tpu.memory_space<vmem>>, vector<1x2x32xf32>
    %457 = vector.shape_cast %456 : vector<1x2x32xf32> to vector<2x32xf32>
    %458 = arith.index_cast %454 : i32 to index
    %c0_118 = arith.constant 0 : index
    %c0_119 = arith.constant 0 : index
    %459 = vector.load %arg1[%458, %c0_118, %c0_119] : memref<8x2x32xf32, #tpu.memory_space<vmem>>, vector<1x2x32xf32>
    %460 = vector.shape_cast %459 : vector<1x2x32xf32> to vector<2x32xf32>
    %461 = arith.index_cast %c4_i32 : i32 to index
    %c0_120 = arith.constant 0 : index
    %c0_121 = arith.constant 0 : index
    %462 = vector.load %arg2[%461, %c0_120, %c0_121] : memref<8x2x1xf32, #tpu.memory_space<vmem>>, vector<1x2x1xf32>
    %463 = vector.shape_cast %462 : vector<1x2x1xf32> to vector<2x1xf32>
    %cst_122 = arith.constant 0.000000e+00 : f32
    %464 = vector.broadcast %cst_122 : f32 to vector<2x1xf32>
    %465 = arith.cmpf ogt, %463, %464 : vector<2x1xf32>
    %466 = arith.index_cast %454 : i32 to index
    %c0_123 = arith.constant 0 : index
    %c0_124 = arith.constant 0 : index
    %467 = vector.load %arg2[%466, %c0_123, %c0_124] : memref<8x2x1xf32, #tpu.memory_space<vmem>>, vector<1x2x1xf32>
    %468 = vector.shape_cast %467 : vector<1x2x1xf32> to vector<2x1xf32>
    %cst_125 = arith.constant 0.000000e+00 : f32
    %469 = vector.broadcast %cst_125 : f32 to vector<2x1xf32>
    %470 = arith.cmpf ogt, %468, %469 : vector<2x1xf32>
    %471 = tpu.concatenate %457, %416, %460, %422 in 1 : vector<2x32xf32>, vector<2x16xf32>, vector<2x32xf32>, vector<2x16xf32> -> vector<2x96xf32>
    %cst_126 = arith.constant dense<0.000000e+00> : vector<2x128xf32>
    %472 = tpu.matmul %471, %0, %cst_126 {dimension_numbers = #tpu.dot_dimension_numbers<[1], [0], [0], [1], [0, 0, 1, 1], [], []>} : vector<2x96xf32>, vector<96x128xf32>, vector<2x128xf32> -> vector<2x128xf32>
    %473 = arith.addf %472, %3 : vector<2x128xf32>
    %474 = vector.extract_strided_slice %473 {offsets = [0, 0], sizes = [2, 64], strides = [1, 1]} : vector<2x128xf32> to vector<2x64xf32>
    %475 = vector.extract_strided_slice %474 {offsets = [0, 0], sizes = [2, 16], strides = [1, 1]} : vector<2x64xf32> to vector<2x16xf32>
    %476 = arith.negf %475 : vector<2x16xf32>
    %477 = math.exp %476 : vector<2x16xf32>
    %cst_127 = arith.constant 1.000000e+00 : f32
    %478 = vector.broadcast %cst_127 : f32 to vector<2x16xf32>
    %479 = arith.addf %478, %477 : vector<2x16xf32>
    %480 = arith.divf %478, %479 : vector<2x16xf32>
    %481 = vector.extract_strided_slice %474 {offsets = [0, 16], sizes = [2, 16], strides = [1, 1]} : vector<2x64xf32> to vector<2x16xf32>
    %482 = arith.negf %481 : vector<2x16xf32>
    %483 = math.exp %482 : vector<2x16xf32>
    %cst_128 = arith.constant 1.000000e+00 : f32
    %484 = vector.broadcast %cst_128 : f32 to vector<2x16xf32>
    %485 = arith.addf %484, %483 : vector<2x16xf32>
    %486 = arith.divf %484, %485 : vector<2x16xf32>
    %487 = vector.extract_strided_slice %474 {offsets = [0, 32], sizes = [2, 16], strides = [1, 1]} : vector<2x64xf32> to vector<2x16xf32>
    %488 = math.tanh %487 : vector<2x16xf32>
    %489 = vector.extract_strided_slice %474 {offsets = [0, 48], sizes = [2, 16], strides = [1, 1]} : vector<2x64xf32> to vector<2x16xf32>
    %490 = arith.negf %489 : vector<2x16xf32>
    %491 = math.exp %490 : vector<2x16xf32>
    %cst_129 = arith.constant 1.000000e+00 : f32
    %492 = vector.broadcast %cst_129 : f32 to vector<2x16xf32>
    %493 = arith.addf %492, %491 : vector<2x16xf32>
    %494 = arith.divf %492, %493 : vector<2x16xf32>
    %495 = vector.extract_strided_slice %473 {offsets = [0, 64], sizes = [2, 64], strides = [1, 1]} : vector<2x128xf32> to vector<2x64xf32>
    %496 = vector.extract_strided_slice %495 {offsets = [0, 0], sizes = [2, 16], strides = [1, 1]} : vector<2x64xf32> to vector<2x16xf32>
    %497 = arith.negf %496 : vector<2x16xf32>
    %498 = math.exp %497 : vector<2x16xf32>
    %cst_130 = arith.constant 1.000000e+00 : f32
    %499 = vector.broadcast %cst_130 : f32 to vector<2x16xf32>
    %500 = arith.addf %499, %498 : vector<2x16xf32>
    %501 = arith.divf %499, %500 : vector<2x16xf32>
    %502 = vector.extract_strided_slice %495 {offsets = [0, 16], sizes = [2, 16], strides = [1, 1]} : vector<2x64xf32> to vector<2x16xf32>
    %503 = arith.negf %502 : vector<2x16xf32>
    %504 = math.exp %503 : vector<2x16xf32>
    %cst_131 = arith.constant 1.000000e+00 : f32
    %505 = vector.broadcast %cst_131 : f32 to vector<2x16xf32>
    %506 = arith.addf %505, %504 : vector<2x16xf32>
    %507 = arith.divf %505, %506 : vector<2x16xf32>
    %508 = vector.extract_strided_slice %495 {offsets = [0, 32], sizes = [2, 16], strides = [1, 1]} : vector<2x64xf32> to vector<2x16xf32>
    %509 = math.tanh %508 : vector<2x16xf32>
    %510 = vector.extract_strided_slice %495 {offsets = [0, 48], sizes = [2, 16], strides = [1, 1]} : vector<2x64xf32> to vector<2x16xf32>
    %511 = arith.negf %510 : vector<2x16xf32>
    %512 = math.exp %511 : vector<2x16xf32>
    %cst_132 = arith.constant 1.000000e+00 : f32
    %513 = vector.broadcast %cst_132 : f32 to vector<2x16xf32>
    %514 = arith.addf %513, %512 : vector<2x16xf32>
    %515 = arith.divf %513, %514 : vector<2x16xf32>
    %516 = arith.mulf %486, %419 : vector<2x16xf32>
    %517 = arith.mulf %480, %488 : vector<2x16xf32>
    %518 = arith.addf %516, %517 : vector<2x16xf32>
    %519 = math.tanh %518 : vector<2x16xf32>
    %520 = arith.mulf %494, %519 : vector<2x16xf32>
    %521 = arith.mulf %507, %425 : vector<2x16xf32>
    %522 = arith.mulf %501, %509 : vector<2x16xf32>
    %523 = arith.addf %521, %522 : vector<2x16xf32>
    %524 = math.tanh %523 : vector<2x16xf32>
    %525 = arith.mulf %515, %524 : vector<2x16xf32>
    %526 = vector.shape_cast %465 : vector<2x1xi1> to vector<2x1xi1>
    %527 = vector.broadcast %526 : vector<2x1xi1> to vector<2x16xi1>
    %528 = arith.select %527, %520, %416 : vector<2x16xi1>, vector<2x16xf32>
    %529 = vector.shape_cast %465 : vector<2x1xi1> to vector<2x1xi1>
    %530 = vector.broadcast %529 : vector<2x1xi1> to vector<2x16xi1>
    %531 = arith.select %530, %518, %419 : vector<2x16xi1>, vector<2x16xf32>
    %532 = vector.shape_cast %470 : vector<2x1xi1> to vector<2x1xi1>
    %533 = vector.broadcast %532 : vector<2x1xi1> to vector<2x16xi1>
    %534 = arith.select %533, %525, %422 : vector<2x16xi1>, vector<2x16xf32>
    %535 = vector.shape_cast %470 : vector<2x1xi1> to vector<2x1xi1>
    %536 = vector.broadcast %535 : vector<2x1xi1> to vector<2x16xi1>
    %537 = arith.select %536, %523, %425 : vector<2x16xi1>, vector<2x16xf32>
    %cst_133 = arith.constant 0.000000e+00 : f32
    %538 = vector.broadcast %cst_133 : f32 to vector<2x16xf32>
    %539 = arith.maximumf %528, %538 : vector<2x16xf32>
    %cst_134 = arith.constant 0.000000e+00 : f32
    %540 = vector.shape_cast %465 : vector<2x1xi1> to vector<2x1xi1>
    %541 = vector.broadcast %540 : vector<2x1xi1> to vector<2x16xi1>
    %542 = vector.broadcast %cst_134 : f32 to vector<2x16xf32>
    %543 = arith.select %541, %539, %542 : vector<2x16xi1>, vector<2x16xf32>
    %cst_135 = arith.constant 0.000000e+00 : f32
    %544 = vector.broadcast %cst_135 : f32 to vector<2x16xf32>
    %545 = arith.maximumf %534, %544 : vector<2x16xf32>
    %cst_136 = arith.constant 0.000000e+00 : f32
    %546 = vector.shape_cast %470 : vector<2x1xi1> to vector<2x1xi1>
    %547 = vector.broadcast %546 : vector<2x1xi1> to vector<2x16xi1>
    %548 = vector.broadcast %cst_136 : f32 to vector<2x16xf32>
    %549 = arith.select %547, %545, %548 : vector<2x16xi1>, vector<2x16xf32>
    %550 = arith.index_cast %c4_i32 : i32 to index
    %c0_137 = arith.constant 0 : index
    %c0_138 = arith.constant 0 : index
    %c0_139 = arith.constant 0 : index
    %551 = vector.load %arg3[%550, %c0_137, %c0_138, %c0_139] : memref<8x2x4x1xf32, #tpu.memory_space<vmem>>, vector<1x2x4x1xf32>
    %552 = vector.shape_cast %551 : vector<1x2x4x1xf32> to vector<2x4x1xf32>
    %553 = vector.shape_cast %543 : vector<2x16xf32> to vector<2x1x16xf32>
    %554 = vector.broadcast %552 : vector<2x4x1xf32> to vector<2x4x16xf32>
    %555 = vector.broadcast %553 : vector<2x1x16xf32> to vector<2x4x16xf32>
    %556 = arith.mulf %554, %555 : vector<2x4x16xf32>
    %557 = arith.addf %445, %556 : vector<2x4x16xf32>
    %558 = arith.index_cast %454 : i32 to index
    %c0_140 = arith.constant 0 : index
    %c0_141 = arith.constant 0 : index
    %c0_142 = arith.constant 0 : index
    %559 = vector.load %arg3[%558, %c0_140, %c0_141, %c0_142] : memref<8x2x4x1xf32, #tpu.memory_space<vmem>>, vector<1x2x4x1xf32>
    %560 = vector.shape_cast %559 : vector<1x2x4x1xf32> to vector<2x4x1xf32>
    %561 = vector.shape_cast %549 : vector<2x16xf32> to vector<2x1x16xf32>
    %562 = vector.broadcast %560 : vector<2x4x1xf32> to vector<2x4x16xf32>
    %563 = vector.broadcast %561 : vector<2x1x16xf32> to vector<2x4x16xf32>
    %564 = arith.mulf %562, %563 : vector<2x4x16xf32>
    %565 = arith.addf %453, %564 : vector<2x4x16xf32>
    %c5_i32 = arith.constant 5 : i32
    %c7_i32_143 = arith.constant 7 : i32
    %566 = arith.subi %c7_i32_143, %c5_i32 : i32
    %567 = arith.index_cast %c5_i32 : i32 to index
    %c0_144 = arith.constant 0 : index
    %c0_145 = arith.constant 0 : index
    %568 = vector.load %arg1[%567, %c0_144, %c0_145] : memref<8x2x32xf32, #tpu.memory_space<vmem>>, vector<1x2x32xf32>
    %569 = vector.shape_cast %568 : vector<1x2x32xf32> to vector<2x32xf32>
    %570 = arith.index_cast %566 : i32 to index
    %c0_146 = arith.constant 0 : index
    %c0_147 = arith.constant 0 : index
    %571 = vector.load %arg1[%570, %c0_146, %c0_147] : memref<8x2x32xf32, #tpu.memory_space<vmem>>, vector<1x2x32xf32>
    %572 = vector.shape_cast %571 : vector<1x2x32xf32> to vector<2x32xf32>
    %573 = arith.index_cast %c5_i32 : i32 to index
    %c0_148 = arith.constant 0 : index
    %c0_149 = arith.constant 0 : index
    %574 = vector.load %arg2[%573, %c0_148, %c0_149] : memref<8x2x1xf32, #tpu.memory_space<vmem>>, vector<1x2x1xf32>
    %575 = vector.shape_cast %574 : vector<1x2x1xf32> to vector<2x1xf32>
    %cst_150 = arith.constant 0.000000e+00 : f32
    %576 = vector.broadcast %cst_150 : f32 to vector<2x1xf32>
    %577 = arith.cmpf ogt, %575, %576 : vector<2x1xf32>
    %578 = arith.index_cast %566 : i32 to index
    %c0_151 = arith.constant 0 : index
    %c0_152 = arith.constant 0 : index
    %579 = vector.load %arg2[%578, %c0_151, %c0_152] : memref<8x2x1xf32, #tpu.memory_space<vmem>>, vector<1x2x1xf32>
    %580 = vector.shape_cast %579 : vector<1x2x1xf32> to vector<2x1xf32>
    %cst_153 = arith.constant 0.000000e+00 : f32
    %581 = vector.broadcast %cst_153 : f32 to vector<2x1xf32>
    %582 = arith.cmpf ogt, %580, %581 : vector<2x1xf32>
    %583 = tpu.concatenate %569, %528, %572, %534 in 1 : vector<2x32xf32>, vector<2x16xf32>, vector<2x32xf32>, vector<2x16xf32> -> vector<2x96xf32>
    %cst_154 = arith.constant dense<0.000000e+00> : vector<2x128xf32>
    %584 = tpu.matmul %583, %0, %cst_154 {dimension_numbers = #tpu.dot_dimension_numbers<[1], [0], [0], [1], [0, 0, 1, 1], [], []>} : vector<2x96xf32>, vector<96x128xf32>, vector<2x128xf32> -> vector<2x128xf32>
    %585 = arith.addf %584, %3 : vector<2x128xf32>
    %586 = vector.extract_strided_slice %585 {offsets = [0, 0], sizes = [2, 64], strides = [1, 1]} : vector<2x128xf32> to vector<2x64xf32>
    %587 = vector.extract_strided_slice %586 {offsets = [0, 0], sizes = [2, 16], strides = [1, 1]} : vector<2x64xf32> to vector<2x16xf32>
    %588 = arith.negf %587 : vector<2x16xf32>
    %589 = math.exp %588 : vector<2x16xf32>
    %cst_155 = arith.constant 1.000000e+00 : f32
    %590 = vector.broadcast %cst_155 : f32 to vector<2x16xf32>
    %591 = arith.addf %590, %589 : vector<2x16xf32>
    %592 = arith.divf %590, %591 : vector<2x16xf32>
    %593 = vector.extract_strided_slice %586 {offsets = [0, 16], sizes = [2, 16], strides = [1, 1]} : vector<2x64xf32> to vector<2x16xf32>
    %594 = arith.negf %593 : vector<2x16xf32>
    %595 = math.exp %594 : vector<2x16xf32>
    %cst_156 = arith.constant 1.000000e+00 : f32
    %596 = vector.broadcast %cst_156 : f32 to vector<2x16xf32>
    %597 = arith.addf %596, %595 : vector<2x16xf32>
    %598 = arith.divf %596, %597 : vector<2x16xf32>
    %599 = vector.extract_strided_slice %586 {offsets = [0, 32], sizes = [2, 16], strides = [1, 1]} : vector<2x64xf32> to vector<2x16xf32>
    %600 = math.tanh %599 : vector<2x16xf32>
    %601 = vector.extract_strided_slice %586 {offsets = [0, 48], sizes = [2, 16], strides = [1, 1]} : vector<2x64xf32> to vector<2x16xf32>
    %602 = arith.negf %601 : vector<2x16xf32>
    %603 = math.exp %602 : vector<2x16xf32>
    %cst_157 = arith.constant 1.000000e+00 : f32
    %604 = vector.broadcast %cst_157 : f32 to vector<2x16xf32>
    %605 = arith.addf %604, %603 : vector<2x16xf32>
    %606 = arith.divf %604, %605 : vector<2x16xf32>
    %607 = vector.extract_strided_slice %585 {offsets = [0, 64], sizes = [2, 64], strides = [1, 1]} : vector<2x128xf32> to vector<2x64xf32>
    %608 = vector.extract_strided_slice %607 {offsets = [0, 0], sizes = [2, 16], strides = [1, 1]} : vector<2x64xf32> to vector<2x16xf32>
    %609 = arith.negf %608 : vector<2x16xf32>
    %610 = math.exp %609 : vector<2x16xf32>
    %cst_158 = arith.constant 1.000000e+00 : f32
    %611 = vector.broadcast %cst_158 : f32 to vector<2x16xf32>
    %612 = arith.addf %611, %610 : vector<2x16xf32>
    %613 = arith.divf %611, %612 : vector<2x16xf32>
    %614 = vector.extract_strided_slice %607 {offsets = [0, 16], sizes = [2, 16], strides = [1, 1]} : vector<2x64xf32> to vector<2x16xf32>
    %615 = arith.negf %614 : vector<2x16xf32>
    %616 = math.exp %615 : vector<2x16xf32>
    %cst_159 = arith.constant 1.000000e+00 : f32
    %617 = vector.broadcast %cst_159 : f32 to vector<2x16xf32>
    %618 = arith.addf %617, %616 : vector<2x16xf32>
    %619 = arith.divf %617, %618 : vector<2x16xf32>
    %620 = vector.extract_strided_slice %607 {offsets = [0, 32], sizes = [2, 16], strides = [1, 1]} : vector<2x64xf32> to vector<2x16xf32>
    %621 = math.tanh %620 : vector<2x16xf32>
    %622 = vector.extract_strided_slice %607 {offsets = [0, 48], sizes = [2, 16], strides = [1, 1]} : vector<2x64xf32> to vector<2x16xf32>
    %623 = arith.negf %622 : vector<2x16xf32>
    %624 = math.exp %623 : vector<2x16xf32>
    %cst_160 = arith.constant 1.000000e+00 : f32
    %625 = vector.broadcast %cst_160 : f32 to vector<2x16xf32>
    %626 = arith.addf %625, %624 : vector<2x16xf32>
    %627 = arith.divf %625, %626 : vector<2x16xf32>
    %628 = arith.mulf %598, %531 : vector<2x16xf32>
    %629 = arith.mulf %592, %600 : vector<2x16xf32>
    %630 = arith.addf %628, %629 : vector<2x16xf32>
    %631 = math.tanh %630 : vector<2x16xf32>
    %632 = arith.mulf %606, %631 : vector<2x16xf32>
    %633 = arith.mulf %619, %537 : vector<2x16xf32>
    %634 = arith.mulf %613, %621 : vector<2x16xf32>
    %635 = arith.addf %633, %634 : vector<2x16xf32>
    %636 = math.tanh %635 : vector<2x16xf32>
    %637 = arith.mulf %627, %636 : vector<2x16xf32>
    %638 = vector.shape_cast %577 : vector<2x1xi1> to vector<2x1xi1>
    %639 = vector.broadcast %638 : vector<2x1xi1> to vector<2x16xi1>
    %640 = arith.select %639, %632, %528 : vector<2x16xi1>, vector<2x16xf32>
    %641 = vector.shape_cast %577 : vector<2x1xi1> to vector<2x1xi1>
    %642 = vector.broadcast %641 : vector<2x1xi1> to vector<2x16xi1>
    %643 = arith.select %642, %630, %531 : vector<2x16xi1>, vector<2x16xf32>
    %644 = vector.shape_cast %582 : vector<2x1xi1> to vector<2x1xi1>
    %645 = vector.broadcast %644 : vector<2x1xi1> to vector<2x16xi1>
    %646 = arith.select %645, %637, %534 : vector<2x16xi1>, vector<2x16xf32>
    %647 = vector.shape_cast %582 : vector<2x1xi1> to vector<2x1xi1>
    %648 = vector.broadcast %647 : vector<2x1xi1> to vector<2x16xi1>
    %649 = arith.select %648, %635, %537 : vector<2x16xi1>, vector<2x16xf32>
    %cst_161 = arith.constant 0.000000e+00 : f32
    %650 = vector.broadcast %cst_161 : f32 to vector<2x16xf32>
    %651 = arith.maximumf %640, %650 : vector<2x16xf32>
    %cst_162 = arith.constant 0.000000e+00 : f32
    %652 = vector.shape_cast %577 : vector<2x1xi1> to vector<2x1xi1>
    %653 = vector.broadcast %652 : vector<2x1xi1> to vector<2x16xi1>
    %654 = vector.broadcast %cst_162 : f32 to vector<2x16xf32>
    %655 = arith.select %653, %651, %654 : vector<2x16xi1>, vector<2x16xf32>
    %cst_163 = arith.constant 0.000000e+00 : f32
    %656 = vector.broadcast %cst_163 : f32 to vector<2x16xf32>
    %657 = arith.maximumf %646, %656 : vector<2x16xf32>
    %cst_164 = arith.constant 0.000000e+00 : f32
    %658 = vector.shape_cast %582 : vector<2x1xi1> to vector<2x1xi1>
    %659 = vector.broadcast %658 : vector<2x1xi1> to vector<2x16xi1>
    %660 = vector.broadcast %cst_164 : f32 to vector<2x16xf32>
    %661 = arith.select %659, %657, %660 : vector<2x16xi1>, vector<2x16xf32>
    %662 = arith.index_cast %c5_i32 : i32 to index
    %c0_165 = arith.constant 0 : index
    %c0_166 = arith.constant 0 : index
    %c0_167 = arith.constant 0 : index
    %663 = vector.load %arg3[%662, %c0_165, %c0_166, %c0_167] : memref<8x2x4x1xf32, #tpu.memory_space<vmem>>, vector<1x2x4x1xf32>
    %664 = vector.shape_cast %663 : vector<1x2x4x1xf32> to vector<2x4x1xf32>
    %665 = vector.shape_cast %655 : vector<2x16xf32> to vector<2x1x16xf32>
    %666 = vector.broadcast %664 : vector<2x4x1xf32> to vector<2x4x16xf32>
    %667 = vector.broadcast %665 : vector<2x1x16xf32> to vector<2x4x16xf32>
    %668 = arith.mulf %666, %667 : vector<2x4x16xf32>
    %669 = arith.addf %557, %668 : vector<2x4x16xf32>
    %670 = arith.index_cast %566 : i32 to index
    %c0_168 = arith.constant 0 : index
    %c0_169 = arith.constant 0 : index
    %c0_170 = arith.constant 0 : index
    %671 = vector.load %arg3[%670, %c0_168, %c0_169, %c0_170] : memref<8x2x4x1xf32, #tpu.memory_space<vmem>>, vector<1x2x4x1xf32>
    %672 = vector.shape_cast %671 : vector<1x2x4x1xf32> to vector<2x4x1xf32>
    %673 = vector.shape_cast %661 : vector<2x16xf32> to vector<2x1x16xf32>
    %674 = vector.broadcast %672 : vector<2x4x1xf32> to vector<2x4x16xf32>
    %675 = vector.broadcast %673 : vector<2x1x16xf32> to vector<2x4x16xf32>
    %676 = arith.mulf %674, %675 : vector<2x4x16xf32>
    %677 = arith.addf %565, %676 : vector<2x4x16xf32>
    %c6_i32 = arith.constant 6 : i32
    %c7_i32_171 = arith.constant 7 : i32
    %678 = arith.subi %c7_i32_171, %c6_i32 : i32
    %679 = arith.index_cast %c6_i32 : i32 to index
    %c0_172 = arith.constant 0 : index
    %c0_173 = arith.constant 0 : index
    %680 = vector.load %arg1[%679, %c0_172, %c0_173] : memref<8x2x32xf32, #tpu.memory_space<vmem>>, vector<1x2x32xf32>
    %681 = vector.shape_cast %680 : vector<1x2x32xf32> to vector<2x32xf32>
    %682 = arith.index_cast %678 : i32 to index
    %c0_174 = arith.constant 0 : index
    %c0_175 = arith.constant 0 : index
    %683 = vector.load %arg1[%682, %c0_174, %c0_175] : memref<8x2x32xf32, #tpu.memory_space<vmem>>, vector<1x2x32xf32>
    %684 = vector.shape_cast %683 : vector<1x2x32xf32> to vector<2x32xf32>
    %685 = arith.index_cast %c6_i32 : i32 to index
    %c0_176 = arith.constant 0 : index
    %c0_177 = arith.constant 0 : index
    %686 = vector.load %arg2[%685, %c0_176, %c0_177] : memref<8x2x1xf32, #tpu.memory_space<vmem>>, vector<1x2x1xf32>
    %687 = vector.shape_cast %686 : vector<1x2x1xf32> to vector<2x1xf32>
    %cst_178 = arith.constant 0.000000e+00 : f32
    %688 = vector.broadcast %cst_178 : f32 to vector<2x1xf32>
    %689 = arith.cmpf ogt, %687, %688 : vector<2x1xf32>
    %690 = arith.index_cast %678 : i32 to index
    %c0_179 = arith.constant 0 : index
    %c0_180 = arith.constant 0 : index
    %691 = vector.load %arg2[%690, %c0_179, %c0_180] : memref<8x2x1xf32, #tpu.memory_space<vmem>>, vector<1x2x1xf32>
    %692 = vector.shape_cast %691 : vector<1x2x1xf32> to vector<2x1xf32>
    %cst_181 = arith.constant 0.000000e+00 : f32
    %693 = vector.broadcast %cst_181 : f32 to vector<2x1xf32>
    %694 = arith.cmpf ogt, %692, %693 : vector<2x1xf32>
    %695 = tpu.concatenate %681, %640, %684, %646 in 1 : vector<2x32xf32>, vector<2x16xf32>, vector<2x32xf32>, vector<2x16xf32> -> vector<2x96xf32>
    %cst_182 = arith.constant dense<0.000000e+00> : vector<2x128xf32>
    %696 = tpu.matmul %695, %0, %cst_182 {dimension_numbers = #tpu.dot_dimension_numbers<[1], [0], [0], [1], [0, 0, 1, 1], [], []>} : vector<2x96xf32>, vector<96x128xf32>, vector<2x128xf32> -> vector<2x128xf32>
    %697 = arith.addf %696, %3 : vector<2x128xf32>
    %698 = vector.extract_strided_slice %697 {offsets = [0, 0], sizes = [2, 64], strides = [1, 1]} : vector<2x128xf32> to vector<2x64xf32>
    %699 = vector.extract_strided_slice %698 {offsets = [0, 0], sizes = [2, 16], strides = [1, 1]} : vector<2x64xf32> to vector<2x16xf32>
    %700 = arith.negf %699 : vector<2x16xf32>
    %701 = math.exp %700 : vector<2x16xf32>
    %cst_183 = arith.constant 1.000000e+00 : f32
    %702 = vector.broadcast %cst_183 : f32 to vector<2x16xf32>
    %703 = arith.addf %702, %701 : vector<2x16xf32>
    %704 = arith.divf %702, %703 : vector<2x16xf32>
    %705 = vector.extract_strided_slice %698 {offsets = [0, 16], sizes = [2, 16], strides = [1, 1]} : vector<2x64xf32> to vector<2x16xf32>
    %706 = arith.negf %705 : vector<2x16xf32>
    %707 = math.exp %706 : vector<2x16xf32>
    %cst_184 = arith.constant 1.000000e+00 : f32
    %708 = vector.broadcast %cst_184 : f32 to vector<2x16xf32>
    %709 = arith.addf %708, %707 : vector<2x16xf32>
    %710 = arith.divf %708, %709 : vector<2x16xf32>
    %711 = vector.extract_strided_slice %698 {offsets = [0, 32], sizes = [2, 16], strides = [1, 1]} : vector<2x64xf32> to vector<2x16xf32>
    %712 = math.tanh %711 : vector<2x16xf32>
    %713 = vector.extract_strided_slice %698 {offsets = [0, 48], sizes = [2, 16], strides = [1, 1]} : vector<2x64xf32> to vector<2x16xf32>
    %714 = arith.negf %713 : vector<2x16xf32>
    %715 = math.exp %714 : vector<2x16xf32>
    %cst_185 = arith.constant 1.000000e+00 : f32
    %716 = vector.broadcast %cst_185 : f32 to vector<2x16xf32>
    %717 = arith.addf %716, %715 : vector<2x16xf32>
    %718 = arith.divf %716, %717 : vector<2x16xf32>
    %719 = vector.extract_strided_slice %697 {offsets = [0, 64], sizes = [2, 64], strides = [1, 1]} : vector<2x128xf32> to vector<2x64xf32>
    %720 = vector.extract_strided_slice %719 {offsets = [0, 0], sizes = [2, 16], strides = [1, 1]} : vector<2x64xf32> to vector<2x16xf32>
    %721 = arith.negf %720 : vector<2x16xf32>
    %722 = math.exp %721 : vector<2x16xf32>
    %cst_186 = arith.constant 1.000000e+00 : f32
    %723 = vector.broadcast %cst_186 : f32 to vector<2x16xf32>
    %724 = arith.addf %723, %722 : vector<2x16xf32>
    %725 = arith.divf %723, %724 : vector<2x16xf32>
    %726 = vector.extract_strided_slice %719 {offsets = [0, 16], sizes = [2, 16], strides = [1, 1]} : vector<2x64xf32> to vector<2x16xf32>
    %727 = arith.negf %726 : vector<2x16xf32>
    %728 = math.exp %727 : vector<2x16xf32>
    %cst_187 = arith.constant 1.000000e+00 : f32
    %729 = vector.broadcast %cst_187 : f32 to vector<2x16xf32>
    %730 = arith.addf %729, %728 : vector<2x16xf32>
    %731 = arith.divf %729, %730 : vector<2x16xf32>
    %732 = vector.extract_strided_slice %719 {offsets = [0, 32], sizes = [2, 16], strides = [1, 1]} : vector<2x64xf32> to vector<2x16xf32>
    %733 = math.tanh %732 : vector<2x16xf32>
    %734 = vector.extract_strided_slice %719 {offsets = [0, 48], sizes = [2, 16], strides = [1, 1]} : vector<2x64xf32> to vector<2x16xf32>
    %735 = arith.negf %734 : vector<2x16xf32>
    %736 = math.exp %735 : vector<2x16xf32>
    %cst_188 = arith.constant 1.000000e+00 : f32
    %737 = vector.broadcast %cst_188 : f32 to vector<2x16xf32>
    %738 = arith.addf %737, %736 : vector<2x16xf32>
    %739 = arith.divf %737, %738 : vector<2x16xf32>
    %740 = arith.mulf %710, %643 : vector<2x16xf32>
    %741 = arith.mulf %704, %712 : vector<2x16xf32>
    %742 = arith.addf %740, %741 : vector<2x16xf32>
    %743 = math.tanh %742 : vector<2x16xf32>
    %744 = arith.mulf %718, %743 : vector<2x16xf32>
    %745 = arith.mulf %731, %649 : vector<2x16xf32>
    %746 = arith.mulf %725, %733 : vector<2x16xf32>
    %747 = arith.addf %745, %746 : vector<2x16xf32>
    %748 = math.tanh %747 : vector<2x16xf32>
    %749 = arith.mulf %739, %748 : vector<2x16xf32>
    %750 = vector.shape_cast %689 : vector<2x1xi1> to vector<2x1xi1>
    %751 = vector.broadcast %750 : vector<2x1xi1> to vector<2x16xi1>
    %752 = arith.select %751, %744, %640 : vector<2x16xi1>, vector<2x16xf32>
    %753 = vector.shape_cast %689 : vector<2x1xi1> to vector<2x1xi1>
    %754 = vector.broadcast %753 : vector<2x1xi1> to vector<2x16xi1>
    %755 = arith.select %754, %742, %643 : vector<2x16xi1>, vector<2x16xf32>
    %756 = vector.shape_cast %694 : vector<2x1xi1> to vector<2x1xi1>
    %757 = vector.broadcast %756 : vector<2x1xi1> to vector<2x16xi1>
    %758 = arith.select %757, %749, %646 : vector<2x16xi1>, vector<2x16xf32>
    %759 = vector.shape_cast %694 : vector<2x1xi1> to vector<2x1xi1>
    %760 = vector.broadcast %759 : vector<2x1xi1> to vector<2x16xi1>
    %761 = arith.select %760, %747, %649 : vector<2x16xi1>, vector<2x16xf32>
    %cst_189 = arith.constant 0.000000e+00 : f32
    %762 = vector.broadcast %cst_189 : f32 to vector<2x16xf32>
    %763 = arith.maximumf %752, %762 : vector<2x16xf32>
    %cst_190 = arith.constant 0.000000e+00 : f32
    %764 = vector.shape_cast %689 : vector<2x1xi1> to vector<2x1xi1>
    %765 = vector.broadcast %764 : vector<2x1xi1> to vector<2x16xi1>
    %766 = vector.broadcast %cst_190 : f32 to vector<2x16xf32>
    %767 = arith.select %765, %763, %766 : vector<2x16xi1>, vector<2x16xf32>
    %cst_191 = arith.constant 0.000000e+00 : f32
    %768 = vector.broadcast %cst_191 : f32 to vector<2x16xf32>
    %769 = arith.maximumf %758, %768 : vector<2x16xf32>
    %cst_192 = arith.constant 0.000000e+00 : f32
    %770 = vector.shape_cast %694 : vector<2x1xi1> to vector<2x1xi1>
    %771 = vector.broadcast %770 : vector<2x1xi1> to vector<2x16xi1>
    %772 = vector.broadcast %cst_192 : f32 to vector<2x16xf32>
    %773 = arith.select %771, %769, %772 : vector<2x16xi1>, vector<2x16xf32>
    %774 = arith.index_cast %c6_i32 : i32 to index
    %c0_193 = arith.constant 0 : index
    %c0_194 = arith.constant 0 : index
    %c0_195 = arith.constant 0 : index
    %775 = vector.load %arg3[%774, %c0_193, %c0_194, %c0_195] : memref<8x2x4x1xf32, #tpu.memory_space<vmem>>, vector<1x2x4x1xf32>
    %776 = vector.shape_cast %775 : vector<1x2x4x1xf32> to vector<2x4x1xf32>
    %777 = vector.shape_cast %767 : vector<2x16xf32> to vector<2x1x16xf32>
    %778 = vector.broadcast %776 : vector<2x4x1xf32> to vector<2x4x16xf32>
    %779 = vector.broadcast %777 : vector<2x1x16xf32> to vector<2x4x16xf32>
    %780 = arith.mulf %778, %779 : vector<2x4x16xf32>
    %781 = arith.addf %669, %780 : vector<2x4x16xf32>
    %782 = arith.index_cast %678 : i32 to index
    %c0_196 = arith.constant 0 : index
    %c0_197 = arith.constant 0 : index
    %c0_198 = arith.constant 0 : index
    %783 = vector.load %arg3[%782, %c0_196, %c0_197, %c0_198] : memref<8x2x4x1xf32, #tpu.memory_space<vmem>>, vector<1x2x4x1xf32>
    %784 = vector.shape_cast %783 : vector<1x2x4x1xf32> to vector<2x4x1xf32>
    %785 = vector.shape_cast %773 : vector<2x16xf32> to vector<2x1x16xf32>
    %786 = vector.broadcast %784 : vector<2x4x1xf32> to vector<2x4x16xf32>
    %787 = vector.broadcast %785 : vector<2x1x16xf32> to vector<2x4x16xf32>
    %788 = arith.mulf %786, %787 : vector<2x4x16xf32>
    %789 = arith.addf %677, %788 : vector<2x4x16xf32>
    %c7_i32_199 = arith.constant 7 : i32
    %c7_i32_200 = arith.constant 7 : i32
    %790 = arith.subi %c7_i32_200, %c7_i32_199 : i32
    %791 = arith.index_cast %c7_i32_199 : i32 to index
    %c0_201 = arith.constant 0 : index
    %c0_202 = arith.constant 0 : index
    %792 = vector.load %arg1[%791, %c0_201, %c0_202] : memref<8x2x32xf32, #tpu.memory_space<vmem>>, vector<1x2x32xf32>
    %793 = vector.shape_cast %792 : vector<1x2x32xf32> to vector<2x32xf32>
    %794 = arith.index_cast %790 : i32 to index
    %c0_203 = arith.constant 0 : index
    %c0_204 = arith.constant 0 : index
    %795 = vector.load %arg1[%794, %c0_203, %c0_204] : memref<8x2x32xf32, #tpu.memory_space<vmem>>, vector<1x2x32xf32>
    %796 = vector.shape_cast %795 : vector<1x2x32xf32> to vector<2x32xf32>
    %797 = arith.index_cast %c7_i32_199 : i32 to index
    %c0_205 = arith.constant 0 : index
    %c0_206 = arith.constant 0 : index
    %798 = vector.load %arg2[%797, %c0_205, %c0_206] : memref<8x2x1xf32, #tpu.memory_space<vmem>>, vector<1x2x1xf32>
    %799 = vector.shape_cast %798 : vector<1x2x1xf32> to vector<2x1xf32>
    %cst_207 = arith.constant 0.000000e+00 : f32
    %800 = vector.broadcast %cst_207 : f32 to vector<2x1xf32>
    %801 = arith.cmpf ogt, %799, %800 : vector<2x1xf32>
    %802 = arith.index_cast %790 : i32 to index
    %c0_208 = arith.constant 0 : index
    %c0_209 = arith.constant 0 : index
    %803 = vector.load %arg2[%802, %c0_208, %c0_209] : memref<8x2x1xf32, #tpu.memory_space<vmem>>, vector<1x2x1xf32>
    %804 = vector.shape_cast %803 : vector<1x2x1xf32> to vector<2x1xf32>
    %cst_210 = arith.constant 0.000000e+00 : f32
    %805 = vector.broadcast %cst_210 : f32 to vector<2x1xf32>
    %806 = arith.cmpf ogt, %804, %805 : vector<2x1xf32>
    %807 = tpu.concatenate %793, %752, %796, %758 in 1 : vector<2x32xf32>, vector<2x16xf32>, vector<2x32xf32>, vector<2x16xf32> -> vector<2x96xf32>
    %cst_211 = arith.constant dense<0.000000e+00> : vector<2x128xf32>
    %808 = tpu.matmul %807, %0, %cst_211 {dimension_numbers = #tpu.dot_dimension_numbers<[1], [0], [0], [1], [0, 0, 1, 1], [], []>} : vector<2x96xf32>, vector<96x128xf32>, vector<2x128xf32> -> vector<2x128xf32>
    %809 = arith.addf %808, %3 : vector<2x128xf32>
    %810 = vector.extract_strided_slice %809 {offsets = [0, 0], sizes = [2, 64], strides = [1, 1]} : vector<2x128xf32> to vector<2x64xf32>
    %811 = vector.extract_strided_slice %810 {offsets = [0, 0], sizes = [2, 16], strides = [1, 1]} : vector<2x64xf32> to vector<2x16xf32>
    %812 = arith.negf %811 : vector<2x16xf32>
    %813 = math.exp %812 : vector<2x16xf32>
    %cst_212 = arith.constant 1.000000e+00 : f32
    %814 = vector.broadcast %cst_212 : f32 to vector<2x16xf32>
    %815 = arith.addf %814, %813 : vector<2x16xf32>
    %816 = arith.divf %814, %815 : vector<2x16xf32>
    %817 = vector.extract_strided_slice %810 {offsets = [0, 16], sizes = [2, 16], strides = [1, 1]} : vector<2x64xf32> to vector<2x16xf32>
    %818 = arith.negf %817 : vector<2x16xf32>
    %819 = math.exp %818 : vector<2x16xf32>
    %cst_213 = arith.constant 1.000000e+00 : f32
    %820 = vector.broadcast %cst_213 : f32 to vector<2x16xf32>
    %821 = arith.addf %820, %819 : vector<2x16xf32>
    %822 = arith.divf %820, %821 : vector<2x16xf32>
    %823 = vector.extract_strided_slice %810 {offsets = [0, 32], sizes = [2, 16], strides = [1, 1]} : vector<2x64xf32> to vector<2x16xf32>
    %824 = math.tanh %823 : vector<2x16xf32>
    %825 = vector.extract_strided_slice %810 {offsets = [0, 48], sizes = [2, 16], strides = [1, 1]} : vector<2x64xf32> to vector<2x16xf32>
    %826 = arith.negf %825 : vector<2x16xf32>
    %827 = math.exp %826 : vector<2x16xf32>
    %cst_214 = arith.constant 1.000000e+00 : f32
    %828 = vector.broadcast %cst_214 : f32 to vector<2x16xf32>
    %829 = arith.addf %828, %827 : vector<2x16xf32>
    %830 = arith.divf %828, %829 : vector<2x16xf32>
    %831 = vector.extract_strided_slice %809 {offsets = [0, 64], sizes = [2, 64], strides = [1, 1]} : vector<2x128xf32> to vector<2x64xf32>
    %832 = vector.extract_strided_slice %831 {offsets = [0, 0], sizes = [2, 16], strides = [1, 1]} : vector<2x64xf32> to vector<2x16xf32>
    %833 = arith.negf %832 : vector<2x16xf32>
    %834 = math.exp %833 : vector<2x16xf32>
    %cst_215 = arith.constant 1.000000e+00 : f32
    %835 = vector.broadcast %cst_215 : f32 to vector<2x16xf32>
    %836 = arith.addf %835, %834 : vector<2x16xf32>
    %837 = arith.divf %835, %836 : vector<2x16xf32>
    %838 = vector.extract_strided_slice %831 {offsets = [0, 16], sizes = [2, 16], strides = [1, 1]} : vector<2x64xf32> to vector<2x16xf32>
    %839 = arith.negf %838 : vector<2x16xf32>
    %840 = math.exp %839 : vector<2x16xf32>
    %cst_216 = arith.constant 1.000000e+00 : f32
    %841 = vector.broadcast %cst_216 : f32 to vector<2x16xf32>
    %842 = arith.addf %841, %840 : vector<2x16xf32>
    %843 = arith.divf %841, %842 : vector<2x16xf32>
    %844 = vector.extract_strided_slice %831 {offsets = [0, 32], sizes = [2, 16], strides = [1, 1]} : vector<2x64xf32> to vector<2x16xf32>
    %845 = math.tanh %844 : vector<2x16xf32>
    %846 = vector.extract_strided_slice %831 {offsets = [0, 48], sizes = [2, 16], strides = [1, 1]} : vector<2x64xf32> to vector<2x16xf32>
    %847 = arith.negf %846 : vector<2x16xf32>
    %848 = math.exp %847 : vector<2x16xf32>
    %cst_217 = arith.constant 1.000000e+00 : f32
    %849 = vector.broadcast %cst_217 : f32 to vector<2x16xf32>
    %850 = arith.addf %849, %848 : vector<2x16xf32>
    %851 = arith.divf %849, %850 : vector<2x16xf32>
    %852 = arith.mulf %822, %755 : vector<2x16xf32>
    %853 = arith.mulf %816, %824 : vector<2x16xf32>
    %854 = arith.addf %852, %853 : vector<2x16xf32>
    %855 = math.tanh %854 : vector<2x16xf32>
    %856 = arith.mulf %830, %855 : vector<2x16xf32>
    %857 = arith.mulf %843, %761 : vector<2x16xf32>
    %858 = arith.mulf %837, %845 : vector<2x16xf32>
    %859 = arith.addf %857, %858 : vector<2x16xf32>
    %860 = math.tanh %859 : vector<2x16xf32>
    %861 = arith.mulf %851, %860 : vector<2x16xf32>
    %862 = vector.shape_cast %801 : vector<2x1xi1> to vector<2x1xi1>
    %863 = vector.broadcast %862 : vector<2x1xi1> to vector<2x16xi1>
    %864 = arith.select %863, %856, %752 : vector<2x16xi1>, vector<2x16xf32>
    %865 = vector.shape_cast %801 : vector<2x1xi1> to vector<2x1xi1>
    %866 = vector.broadcast %865 : vector<2x1xi1> to vector<2x16xi1>
    %867 = arith.select %866, %854, %755 : vector<2x16xi1>, vector<2x16xf32>
    %868 = vector.shape_cast %806 : vector<2x1xi1> to vector<2x1xi1>
    %869 = vector.broadcast %868 : vector<2x1xi1> to vector<2x16xi1>
    %870 = arith.select %869, %861, %758 : vector<2x16xi1>, vector<2x16xf32>
    %871 = vector.shape_cast %806 : vector<2x1xi1> to vector<2x1xi1>
    %872 = vector.broadcast %871 : vector<2x1xi1> to vector<2x16xi1>
    %873 = arith.select %872, %859, %761 : vector<2x16xi1>, vector<2x16xf32>
    %cst_218 = arith.constant 0.000000e+00 : f32
    %874 = vector.broadcast %cst_218 : f32 to vector<2x16xf32>
    %875 = arith.maximumf %864, %874 : vector<2x16xf32>
    %cst_219 = arith.constant 0.000000e+00 : f32
    %876 = vector.shape_cast %801 : vector<2x1xi1> to vector<2x1xi1>
    %877 = vector.broadcast %876 : vector<2x1xi1> to vector<2x16xi1>
    %878 = vector.broadcast %cst_219 : f32 to vector<2x16xf32>
    %879 = arith.select %877, %875, %878 : vector<2x16xi1>, vector<2x16xf32>
    %cst_220 = arith.constant 0.000000e+00 : f32
    %880 = vector.broadcast %cst_220 : f32 to vector<2x16xf32>
    %881 = arith.maximumf %870, %880 : vector<2x16xf32>
    %cst_221 = arith.constant 0.000000e+00 : f32
    %882 = vector.shape_cast %806 : vector<2x1xi1> to vector<2x1xi1>
    %883 = vector.broadcast %882 : vector<2x1xi1> to vector<2x16xi1>
    %884 = vector.broadcast %cst_221 : f32 to vector<2x16xf32>
    %885 = arith.select %883, %881, %884 : vector<2x16xi1>, vector<2x16xf32>
    %886 = arith.index_cast %c7_i32_199 : i32 to index
    %c0_222 = arith.constant 0 : index
    %c0_223 = arith.constant 0 : index
    %c0_224 = arith.constant 0 : index
    %887 = vector.load %arg3[%886, %c0_222, %c0_223, %c0_224] : memref<8x2x4x1xf32, #tpu.memory_space<vmem>>, vector<1x2x4x1xf32>
    %888 = vector.shape_cast %887 : vector<1x2x4x1xf32> to vector<2x4x1xf32>
    %889 = vector.shape_cast %879 : vector<2x16xf32> to vector<2x1x16xf32>
    %890 = vector.broadcast %888 : vector<2x4x1xf32> to vector<2x4x16xf32>
    %891 = vector.broadcast %889 : vector<2x1x16xf32> to vector<2x4x16xf32>
    %892 = arith.mulf %890, %891 : vector<2x4x16xf32>
    %893 = arith.addf %781, %892 : vector<2x4x16xf32>
    %894 = arith.index_cast %790 : i32 to index
    %c0_225 = arith.constant 0 : index
    %c0_226 = arith.constant 0 : index
    %c0_227 = arith.constant 0 : index
    %895 = vector.load %arg3[%894, %c0_225, %c0_226, %c0_227] : memref<8x2x4x1xf32, #tpu.memory_space<vmem>>, vector<1x2x4x1xf32>
    %896 = vector.shape_cast %895 : vector<1x2x4x1xf32> to vector<2x4x1xf32>
    %897 = vector.shape_cast %885 : vector<2x16xf32> to vector<2x1x16xf32>
    %898 = vector.broadcast %896 : vector<2x4x1xf32> to vector<2x4x16xf32>
    %899 = vector.broadcast %897 : vector<2x1x16xf32> to vector<2x4x16xf32>
    %900 = arith.mulf %898, %899 : vector<2x4x16xf32>
    %901 = arith.addf %789, %900 : vector<2x4x16xf32>
    %c8_i32 = arith.constant 8 : i32
    %c0_228 = arith.constant 0 : index
    %c0_229 = arith.constant 0 : index
    %902 = vector.load %arg6[%c0_228, %c0_229] : memref<16x3xf32, #tpu.memory_space<vmem>>, vector<16x3xf32>
    %c0_230 = arith.constant 0 : index
    %c0_231 = arith.constant 0 : index
    %903 = vector.load %arg7[%c0_230, %c0_231] : memref<16x3xf32, #tpu.memory_space<vmem>>, vector<16x3xf32>
    %c0_232 = arith.constant 0 : index
    %c0_233 = arith.constant 0 : index
    %904 = vector.load %arg8[%c0_232, %c0_233] : memref<1x3xf32, #tpu.memory_space<vmem>>, vector<1x3xf32>
    %905 = vector.extract_strided_slice %893 {offsets = [0, 0, 0], sizes = [1, 4, 16], strides = [1, 1, 1]} : vector<2x4x16xf32> to vector<1x4x16xf32>
    %906 = vector.shape_cast %905 : vector<1x4x16xf32> to vector<4x16xf32>
    %cst_234 = arith.constant dense<0.000000e+00> : vector<4x3xf32>
    %907 = tpu.matmul %906, %902, %cst_234 {dimension_numbers = #tpu.dot_dimension_numbers<[1], [0], [0], [1], [0, 0, 1, 1], [], []>} : vector<4x16xf32>, vector<16x3xf32>, vector<4x3xf32> -> vector<4x3xf32>
    %908 = vector.extract_strided_slice %901 {offsets = [0, 0, 0], sizes = [1, 4, 16], strides = [1, 1, 1]} : vector<2x4x16xf32> to vector<1x4x16xf32>
    %909 = vector.shape_cast %908 : vector<1x4x16xf32> to vector<4x16xf32>
    %cst_235 = arith.constant dense<0.000000e+00> : vector<4x3xf32>
    %910 = tpu.matmul %909, %903, %cst_235 {dimension_numbers = #tpu.dot_dimension_numbers<[1], [0], [0], [1], [0, 0, 1, 1], [], []>} : vector<4x16xf32>, vector<16x3xf32>, vector<4x3xf32> -> vector<4x3xf32>
    %911 = arith.addf %907, %910 : vector<4x3xf32>
    %912 = vector.broadcast %904 : vector<1x3xf32> to vector<4x3xf32>
    %913 = arith.addf %911, %912 : vector<4x3xf32>
    %914 = vector.extract_strided_slice %893 {offsets = [1, 0, 0], sizes = [1, 4, 16], strides = [1, 1, 1]} : vector<2x4x16xf32> to vector<1x4x16xf32>
    %915 = vector.shape_cast %914 : vector<1x4x16xf32> to vector<4x16xf32>
    %cst_236 = arith.constant dense<0.000000e+00> : vector<4x3xf32>
    %916 = tpu.matmul %915, %902, %cst_236 {dimension_numbers = #tpu.dot_dimension_numbers<[1], [0], [0], [1], [0, 0, 1, 1], [], []>} : vector<4x16xf32>, vector<16x3xf32>, vector<4x3xf32> -> vector<4x3xf32>
    %917 = vector.extract_strided_slice %901 {offsets = [1, 0, 0], sizes = [1, 4, 16], strides = [1, 1, 1]} : vector<2x4x16xf32> to vector<1x4x16xf32>
    %918 = vector.shape_cast %917 : vector<1x4x16xf32> to vector<4x16xf32>
    %cst_237 = arith.constant dense<0.000000e+00> : vector<4x3xf32>
    %919 = tpu.matmul %918, %903, %cst_237 {dimension_numbers = #tpu.dot_dimension_numbers<[1], [0], [0], [1], [0, 0, 1, 1], [], []>} : vector<4x16xf32>, vector<16x3xf32>, vector<4x3xf32> -> vector<4x3xf32>
    %920 = arith.addf %916, %919 : vector<4x3xf32>
    %921 = vector.broadcast %904 : vector<1x3xf32> to vector<4x3xf32>
    %922 = arith.addf %920, %921 : vector<4x3xf32>
    %923 = vector.shape_cast %913 : vector<4x3xf32> to vector<1x4x3xf32>
    %924 = vector.shape_cast %922 : vector<4x3xf32> to vector<1x4x3xf32>
    %925 = tpu.concatenate %923, %924 in 0 : vector<1x4x3xf32>, vector<1x4x3xf32> -> vector<2x4x3xf32>
    %c0_238 = arith.constant 0 : index
    %c0_239 = arith.constant 0 : index
    %c0_240 = arith.constant 0 : index
    %926 = vector.load %arg9[%c0_238, %c0_239, %c0_240] : memref<2x4x3xf32, #tpu.memory_space<vmem>>, vector<2x4x3xf32>
    tpu.vector_store %arg9[%c0_238, %c0_239, %c0_240], %925 {strides = array<i32>} : memref<2x4x3xf32, #tpu.memory_space<vmem>>, vector<2x4x3xf32>,
    return
  }
  func.func @transform_0(%arg0: i32) -> (i32, i32, i32) {
    %c0_i32 = arith.constant 0 : i32
    %c0_i32_0 = arith.constant 0 : i32
    %c0_i32_1 = arith.constant 0 : i32
    return %c0_i32, %arg0, %c0_i32_0 : i32, i32, i32
  }
  func.func @transform_1(%arg0: i32) -> (i32, i32, i32) {
    %c0_i32 = arith.constant 0 : i32
    %c0_i32_0 = arith.constant 0 : i32
    %c0_i32_1 = arith.constant 0 : i32
    return %c0_i32, %arg0, %c0_i32_0 : i32, i32, i32
  }
  func.func @transform_2(%arg0: i32) -> (i32, i32, i32, i32) {
    %c0_i32 = arith.constant 0 : i32
    %c0_i32_0 = arith.constant 0 : i32
    %c0_i32_1 = arith.constant 0 : i32
    %c0_i32_2 = arith.constant 0 : i32
    return %c0_i32, %arg0, %c0_i32_0, %c0_i32_1 : i32, i32, i32, i32
  }
  func.func @transform_3(%arg0: i32) -> (i32, i32) {
    %c0_i32 = arith.constant 0 : i32
    %c0_i32_0 = arith.constant 0 : i32
    %c0_i32_1 = arith.constant 0 : i32
    return %c0_i32, %c0_i32_0 : i32, i32
  }
  func.func @transform_4(%arg0: i32) -> (i32, i32) {
    %c0_i32 = arith.constant 0 : i32
    %c0_i32_0 = arith.constant 0 : i32
    %c0_i32_1 = arith.constant 0 : i32
    return %c0_i32, %c0_i32_0 : i32, i32
  }
  func.func @transform_5(%arg0: i32) -> (i32, i32) {
    %c0_i32 = arith.constant 0 : i32
    %c0_i32_0 = arith.constant 0 : i32
    %c0_i32_1 = arith.constant 0 : i32
    return %c0_i32, %c0_i32_0 : i32, i32
  }
  func.func @transform_6(%arg0: i32) -> (i32, i32) {
    %c0_i32 = arith.constant 0 : i32
    %c0_i32_0 = arith.constant 0 : i32
    %c0_i32_1 = arith.constant 0 : i32
    return %c0_i32, %c0_i32_0 : i32, i32
  }
  func.func @transform_7(%arg0: i32) -> (i32, i32) {
    %c0_i32 = arith.constant 0 : i32
    %c0_i32_0 = arith.constant 0 : i32
    %c0_i32_1 = arith.constant 0 : i32
    return %c0_i32, %c0_i32_0 : i32, i32
  }
  func.func @transform_8(%arg0: i32) -> (i32, i32, i32) {
    %c0_i32 = arith.constant 0 : i32
    %c0_i32_0 = arith.constant 0 : i32
    %c0_i32_1 = arith.constant 0 : i32
    return %arg0, %c0_i32, %c0_i32_0 : i32, i32, i32
  }
}

</mosaic_0001>

<llo_original>
// kernel: tpu_custom_call.1
$region0: #{tpu_custom_call.1}
  #allocation0 [shape = 'u32[]', space=smem, size = 0x4, offset = 0x4, fixed_abs, tag = 'smem constant byte address 0x4 - core index']
  #allocation1 [shape = 'u32[144,128]{1,0:T(1,128)}', space=vmem, size = 0x12000, scoped, tag = 'internal scratch']
  %s0 = inlined_call_operand.vmem [shape: f32[8,2,32], index: 0, kind: input, shape index: {}]
  %s1 = inlined_call_operand.vmem [shape: f32[8,2,1], index: 1, kind: input, shape index: {}]
  %s2 = inlined_call_operand.vmem [shape: f32[8,2,4,1], index: 2, kind: input, shape index: {}]
  %s3 = inlined_call_operand.vmem [shape: f32[96,128], index: 3, kind: input, shape index: {}]
  %s4 = inlined_call_operand.vmem [shape: f32[1,128], index: 4, kind: input, shape index: {}]
  %s5 = inlined_call_operand.vmem [shape: f32[16,3], index: 5, kind: input, shape index: {}]
  %s6 = inlined_call_operand.vmem [shape: f32[16,3], index: 6, kind: input, shape index: {}]
  %s7 = inlined_call_operand.vmem [shape: f32[1,3], index: 7, kind: input, shape index: {}]
  %s8 = inlined_call_operand.vmem [shape: f32[2,4,3], index: 8, kind: output, shape index: {}]
  %s9 = sld [smem:[#allocation0]]
  $region42: #{tpu_custom_call.1} parent=0
    _
  %s11 = ssub.s32 1, %s9
  %s12 = scalar_select 0, %s11, %s9
  // Predicated region
  $region2: #{tpu_custom_call.1} parent=0 // pred_check
    _
  $region3: #{tpu_custom_call.1} parent=0 // pred_check_branch
    %14 = sbr.rel (0) target = $region5
  $region4: #{tpu_custom_call.1} parent=0 // pred_region
    _
  $region5: #{tpu_custom_call.1} parent=0 // pred_fallthru
    _
  // Predicated region
  $region6: #{tpu_custom_call.1} parent=0 // pred_check
    _
  $region7: #{tpu_custom_call.1} parent=0 // pred_check_branch
    %16 = sbr.rel (0) target = $region9
  $region8: #{tpu_custom_call.1} parent=0 // pred_region
    _
  $region9: #{tpu_custom_call.1} parent=0 // pred_fallthru
    _
  // Predicated region
  $region10: #{tpu_custom_call.1} parent=0 // pred_check
    _
  $region11: #{tpu_custom_call.1} parent=0 // pred_check_branch
    %18 = sbr.rel (0) target = $region13
  $region12: #{tpu_custom_call.1} parent=0 // pred_region
    _
  $region13: #{tpu_custom_call.1} parent=0 // pred_fallthru
    _
  // Predicated region
  $region14: #{tpu_custom_call.1} parent=0 // pred_check
    _
  $region15: #{tpu_custom_call.1} parent=0 // pred_check_branch
    %20 = sbr.rel (0) target = $region17
  $region16: #{tpu_custom_call.1} parent=0 // pred_region
    _
  $region17: #{tpu_custom_call.1} parent=0 // pred_fallthru
    _
  // Predicated region
  $region18: #{tpu_custom_call.1} parent=0 // pred_check
    _
  $region19: #{tpu_custom_call.1} parent=0 // pred_check_branch
    %22 = sbr.rel (0) target = $region21
  $region20: #{tpu_custom_call.1} parent=0 // pred_region
    _
  $region21: #{tpu_custom_call.1} parent=0 // pred_fallthru
    _
  // Predicated region
  $region22: #{tpu_custom_call.1} parent=0 // pred_check
    _
  $region23: #{tpu_custom_call.1} parent=0 // pred_check_branch
    %24 = sbr.rel (0) target = $region25
  $region24: #{tpu_custom_call.1} parent=0 // pred_region
    _
  $region25: #{tpu_custom_call.1} parent=0 // pred_fallthru
    _
  // Predicated region
  $region26: #{tpu_custom_call.1} parent=0 // pred_check
    _
  $region27: #{tpu_custom_call.1} parent=0 // pred_check_branch
    %26 = sbr.rel (0) target = $region29
  $region28: #{tpu_custom_call.1} parent=0 // pred_region
    _
  $region29: #{tpu_custom_call.1} parent=0 // pred_fallthru
    _
  // Predicated region
  $region30: #{tpu_custom_call.1} parent=0 // pred_check
    _
  $region31: #{tpu_custom_call.1} parent=0 // pred_check_branch
    %28 = sbr.rel (0) target = $region33
  $region32: #{tpu_custom_call.1} parent=0 // pred_region
    _
  $region33: #{tpu_custom_call.1} parent=0 // pred_fallthru
    _
  %v29 = vld [vmem:[%s3] sm:$0xff]
  %v30 = vld [vmem:[%s3 + $0x8] sm:$0xff]
  %v31 = vld [vmem:[%s3 + $0x10] sm:$0xff]
  %v32 = vld [vmem:[%s3 + $0x18] sm:$0xff]
  %v33 = vld [vmem:[%s3 + $0x20] sm:$0xff]
  %v34 = vld [vmem:[%s3 + $0x28] sm:$0xff]
  %v35 = vld [vmem:[%s3 + $0x30] sm:$0xff]
  %v36 = vld [vmem:[%s3 + $0x38] sm:$0xff]
  %v37 = vld [vmem:[%s3 + $0x40] sm:$0xff]
  %v38 = vld [vmem:[%s3 + $0x48] sm:$0xff]
  %v39 = vld [vmem:[%s3 + $0x50] sm:$0xff]
  %v40 = vld [vmem:[%s3 + $0x58] sm:$0xff]
  %v41 = vld [vmem:[%s4] sm:$0x1]
  %v43 = vlaneseq
  %v44 = vshrl.u32 %v43, 7
  %v45 = vsub.s32 0, %v44
  %v46 = vrot.slane %v41, %v45
  %v48 = vld [vmem:[%s0] sm:$0x3]
  %s49 = scalar_lea.vmem %s0, 14
  %v50 = vld [vmem:[%s49] sm:$0x3]
  %v51 = vld [vmem:[%s1] sm:$0x3]
  %vm52 = vcmp.gt.f32.partialorder %v51, 0.0
  %s53 = scalar_lea.vmem %s1, 14
  %v54 = vld [vmem:[%s53] sm:$0x3]
  %vm55 = vcmp.gt.f32.partialorder %v54, 0.0
  %57 = vrot.lane.b32.xlu0 %v50, 48
  %v58 = vpop.permute.xlu0 %57
  %vm60 = vcmask 261120
  %v61 = vsel %vm60, %v48, 0.0
  %vm62 = vcmask 392192
  %v63 = vsel %vm62, %v61, %v58
  %vm64 = vcmask 654336
  %v65 = vsel %vm64, %v63, 0.0
  %vm66 = vcmask 785408
  %v68 = vsel %vm66, %v65, 0
  %70 = vmatprep.subr.mxu0 0.0
  %71 = vmatpush1.msra.mxu0 %v29
  %72 = vmatprep.subr.mxu0 0.0
  %73 = vmatpush1.msra.mxu0 %v30
  %74 = vmatprep.subr.mxu0 0.0
  %75 = vmatpush1.msra.mxu0 %v31
  %76 = vmatprep.subr.mxu0 0.0
  %77 = vmatpush1.msra.mxu0 %v32
  %78 = vmatprep.subr.mxu0 0.0
  %79 = vmatpush1.msra.mxu0 %v33
  %80 = vmatprep.subr.mxu0 0.0
  %81 = vmatpush1.msra.mxu0 %v34
  %82 = vmatprep.subr.mxu0 0.0
  %83 = vmatpush1.msra.mxu0 %v35
  %84 = vmatprep.subr.mxu0 0.0
  %85 = vmatpush1.msra.mxu0 %v36
  %86 = vmatprep.subr.mxu0 0.0
  %87 = vmatpush1.msra.mxu0 %v37
  %88 = vmatprep.subr.mxu0 0.0
  %89 = vmatpush1.msra.mxu0 %v38
  %90 = vmatprep.subr.mxu0 0.0
  %91 = vmatpush1.msra.mxu0 %v39
  %92 = vmatprep.subr.mxu0 0.0
  %93 = vmatpush1.msra.mxu0 %v40
  %94 = vmatprep.subr.mxu0 0.0
  %95 = vmatpush1.msra.mxu0 0.0
  %96 = vmatprep.subr.mxu0 0.0
  %97 = vmatpush1.msra.mxu0 0.0
  %98 = vmatprep.subr.mxu0 0.0
  %99 = vmatpush1.msra.mxu0 0.0
  %100 = vmatprep.subr.mxu0 0.0
  %101 = vmatpush1.msra.mxu0 0.0
  %102 = vmatprep.subr.mxu0 0.0
  %103 = vmatpush1.msra.mxu0 0.0
  %104 = vmatprep.subr.mxu0 0.0
  %105 = vmatpush1.msra.mxu0 0.0
  %106 = vmatprep.subr.mxu0 0.0
  %107 = vmatpush1.msra.mxu0 0.0
  %108 = vmatprep.subr.mxu0 0.0
  %109 = vmatpush1.msra.mxu0 0.0
  %110 = vmatprep.subr.mxu0 0.0
  %111 = vmatpush1.msra.mxu0 0.0
  %112 = vmatprep.subr.mxu0 0.0
  %113 = vmatpush1.msra.mxu0 0.0
  %114 = vmatprep.subr.mxu0 0.0
  %115 = vmatpush1.msra.mxu0 0.0
  %116 = vmatprep.subr.mxu0 0.0
  %117 = vmatpush1.msra.mxu0 0.0
  %118 = vmatprep.subr.mxu0 0.0
  %119 = vmatpush1.msra.mxu0 0.0
  %120 = vmatprep.subr.mxu0 0.0
  %121 = vmatpush1.msra.mxu0 0.0
  %122 = vmatprep.subr.mxu0 0.0
  %123 = vmatpush1.msra.mxu0 0.0
  %124 = vmatprep.subr.mxu0 0.0
  %125 = vmatpush1.msra.mxu0 0.0
  %126 = vmatprep.subr.mxu0 0.0
  %127 = vmatpush1.msra.mxu0 0.0
  %128 = vmatprep.subr.mxu0 0.0
  %129 = vmatpush1.msra.mxu0 0.0
  %130 = vmatprep.subr.mxu0 0.0
  %131 = vmatpush1.msra.mxu0 0.0
  %132 = vmatprep.subr.mxu0 0.0
  %133 = vmatpush1.msra.mxu0 0.0
  %134 = vmatprep.mubr.f32.mxu0 0.0
  %135 = vmatmul.mubr.f32.gmra.mrb[0].mxu0 %v68
  %v136 = vpop.f32.mrb[0].mxu0
  %v137 = vadd.f32 %v46, %v136
  %v138 = vpop.f32.mrb[0].mxu0
  %139 = vdwg.mxu0
  %v140 = vxor.u32 %v137, 2147483648
  %v141 = vmul.f32 %v140, 1.442695
  %v142 = vpow.pop %v141
  %v143 = vadd.f32 %v142, 1.0
  %v144 = vrcp.pop %v143
  %v145 = vmul.f32 1.0, %v144
  %v146 = vtanh.pop %v137
  %v147 = vmul.f32 %v145, 0.0
  %149 = vrot.lane.b32.xlu0 %v146, 96
  %v150 = vpop.permute.xlu0 %149
  %v152 = vmul.f32 %v145, %v150
  %154 = vrot.lane.b32.xlu0 %v152, 16
  %v155 = vpop.permute.xlu0 %154
  %v157 = vadd.f32 %v147, %v155
  %v158 = vtanh.pop %v157
  %160 = vrot.lane.b32.xlu0 %v158, 32
  %v161 = vpop.permute.xlu0 %160
  %v163 = vmul.f32 %v145, %v161
  %v164 = vsel %vm52, 1, 0
  %165 = vset.pattern.permute.xlu0 0
  %166 = vperm.xlu0 %165, %v164
  %v167 = vpop.permute.xlu0 %166
  %vm168 = vcmp.eq.s32.totalorder %v167, 1
  %v169 = vsel %vm168, %v163, 0.0
  %v170 = vsel %vm168, %v157, 0.0
  %v171 = vsel %vm55, 1, 0
  %172 = vset.pattern.permute.xlu0 0
  %173 = vperm.xlu0 %172, %v171
  %v174 = vpop.permute.xlu0 %173
  %vm175 = vcmp.eq.s32.totalorder %v174, 1
  %v176 = vsel %vm175, %v163, 0.0
  %v177 = vsel %vm175, %v157, 0.0
  %v178 = vmax.f32 %v169, 0.0
  %v179 = vsel %vm168, %v178, 0.0
  %v180 = vmax.f32 %v176, 0.0
  %v181 = vsel %vm175, %v180, 0.0
  %v182 = vld [vmem:[%s2] sm:$0xf]
  %v183 = vld [vmem:[%s2 + $0x4] sm:$0xf]
  %v186 = vunpack.c.l.s4 1966171168
  %v187 = vunpack.c.0.s8 %v186
  %v188 = vlaneseq
  %v189 = vshrl.u32 %v188, 7
  %v190 = vsub.s32 %v187, %v189
  %v191 = vrot.slane %v179, %v190
  %v192 = vcombine.high %v191, %v191
  %v194 = vunpack.c.l.s4 1966171168
  %v195 = vunpack.c.0.s8 %v194
  %v196 = vlaneseq
  %v197 = vshrl.u32 %v196, 7
  %v198 = vsub.s32 %v195, %v197
  %v199 = vrot.slane %v191, %v198
  %v201 = vunpack.c.l.s4 1966171168
  %v202 = vunpack.c.0.s8 %v201
  %v203 = vlaneseq
  %v204 = vshrl.u32 %v203, 7
  %v205 = vsub.s32 %v202, %v204
  %v206 = vrot.slane %v192, %v205
  %208 = vset.pattern.permute.xlu0 0
  %209 = vperm.xlu0 %208, %v182
  %v210 = vpop.permute.xlu0 %209
  %213 = vset.pattern.permute.xlu0 0
  %214 = vperm.xlu0 %213, %v183
  %v215 = vpop.permute.xlu0 %214
  %v217 = vlaneseq
  %v218 = vshrl.u32 %v217, 7
  %v219 = vsub.s32 0, %v218
  %v220 = vrot.slane %v199, %v219
  %v221 = vlaneseq
  %v222 = vshrl.u32 %v221, 7
  %v223 = vsub.s32 0, %v222
  %v224 = vrot.slane %v206, %v223
  %v227 = vmul.f32 %v210, %v220
  %v228 = vmul.f32 %v215, %v224
  %v229 = vadd.f32 %v227, 0.0
  %v230 = vadd.f32 %v228, 0.0
  %s231 = scalar_lea.vmem %s2, 56
  %v232 = vld [vmem:[%s231] sm:$0xf]
  %v233 = vld [vmem:[%s231 + $0x4] sm:$0xf]
  %v236 = vunpack.c.l.s4 1966171168
  %v237 = vunpack.c.0.s8 %v236
  %v238 = vlaneseq
  %v239 = vshrl.u32 %v238, 7
  %v240 = vsub.s32 %v237, %v239
  %v241 = vrot.slane %v181, %v240
  %v242 = vcombine.high %v241, %v241
  %v244 = vunpack.c.l.s4 1966171168
  %v245 = vunpack.c.0.s8 %v244
  %v246 = vlaneseq
  %v247 = vshrl.u32 %v246, 7
  %v248 = vsub.s32 %v245, %v247
  %v249 = vrot.slane %v241, %v248
  %v251 = vunpack.c.l.s4 1966171168
  %v252 = vunpack.c.0.s8 %v251
  %v253 = vlaneseq
  %v254 = vshrl.u32 %v253, 7
  %v255 = vsub.s32 %v252, %v254
  %v256 = vrot.slane %v242, %v255
  %258 = vset.pattern.permute.xlu0 0
  %259 = vperm.xlu0 %258, %v232
  %v260 = vpop.permute.xlu0 %259
  %263 = vset.pattern.permute.xlu0 0
  %264 = vperm.xlu0 %263, %v233
  %v265 = vpop.permute.xlu0 %264
  %v267 = vlaneseq
  %v268 = vshrl.u32 %v267, 7
  %v269 = vsub.s32 0, %v268
  %v270 = vrot.slane %v249, %v269
  %v271 = vlaneseq
  %v272 = vshrl.u32 %v271, 7
  %v273 = vsub.s32 0, %v272
  %v274 = vrot.slane %v256, %v273
  %v277 = vmul.f32 %v260, %v270
  %v278 = vmul.f32 %v265, %v274
  %v279 = vadd.f32 %v277, 0.0
  %v280 = vadd.f32 %v278, 0.0
  %s281 = scalar_lea.vmem %s0, 2
  %v282 = vld [vmem:[%s281] sm:$0x3]
  %s283 = scalar_lea.vmem %s0, 12
  %v284 = vld [vmem:[%s283] sm:$0x3]
  %s285 = scalar_lea.vmem %s1, 2
  %v286 = vld [vmem:[%s285] sm:$0x3]
  %vm287 = vcmp.gt.f32.partialorder %v286, 0.0
  %s288 = scalar_lea.vmem %s1, 12
  %v289 = vld [vmem:[%s288] sm:$0x3]
  %vm290 = vcmp.gt.f32.partialorder %v289, 0.0
  %292 = vrot.lane.b32.xlu0 %v169, 112
  %v293 = vpop.permute.xlu0 %292
  %296 = vrot.lane.b32.xlu0 %v284, 48
  %v297 = vpop.permute.xlu0 %296
  %300 = vrot.lane.b32.xlu0 %v176, 96
  %v301 = vpop.permute.xlu0 %300
  %v303 = vsel %vm60, %v282, %v293
  %v304 = vsel %vm62, %v303, %v297
  %v305 = vsel %vm64, %v304, %v301
  %v307 = vsel %vm66, %v305, 0
  %309 = vmatprep.subr.mxu0 0.0
  %310 = vmatpush1.msra.mxu0 %v29
  %311 = vmatprep.subr.mxu0 0.0
  %312 = vmatpush1.msra.mxu0 %v30
  %313 = vmatprep.subr.mxu0 0.0
  %314 = vmatpush1.msra.mxu0 %v31
  %315 = vmatprep.subr.mxu0 0.0
  %316 = vmatpush1.msra.mxu0 %v32
  %317 = vmatprep.subr.mxu0 0.0
  %318 = vmatpush1.msra.mxu0 %v33
  %319 = vmatprep.subr.mxu0 0.0
  %320 = vmatpush1.msra.mxu0 %v34
  %321 = vmatprep.subr.mxu0 0.0
  %322 = vmatpush1.msra.mxu0 %v35
  %323 = vmatprep.subr.mxu0 0.0
  %324 = vmatpush1.msra.mxu0 %v36
  %325 = vmatprep.subr.mxu0 0.0
  %326 = vmatpush1.msra.mxu0 %v37
  %327 = vmatprep.subr.mxu0 0.0
  %328 = vmatpush1.msra.mxu0 %v38
  %329 = vmatprep.subr.mxu0 0.0
  %330 = vmatpush1.msra.mxu0 %v39
  %331 = vmatprep.subr.mxu0 0.0
  %332 = vmatpush1.msra.mxu0 %v40
  %333 = vmatprep.subr.mxu0 0.0
  %334 = vmatpush1.msra.mxu0 0.0
  %335 = vmatprep.subr.mxu0 0.0
  %336 = vmatpush1.msra.mxu0 0.0
  %337 = vmatprep.subr.mxu0 0.0
  %338 = vmatpush1.msra.mxu0 0.0
  %339 = vmatprep.subr.mxu0 0.0
  %340 = vmatpush1.msra.mxu0 0.0
  %341 = vmatprep.subr.mxu0 0.0
  %342 = vmatpush1.msra.mxu0 0.0
  %343 = vmatprep.subr.mxu0 0.0
  %344 = vmatpush1.msra.mxu0 0.0
  %345 = vmatprep.subr.mxu0 0.0
  %346 = vmatpush1.msra.mxu0 0.0
  %347 = vmatprep.subr.mxu0 0.0
  %348 = vmatpush1.msra.mxu0 0.0
  %349 = vmatprep.subr.mxu0 0.0
  %350 = vmatpush1.msra.mxu0 0.0
  %351 = vmatprep.subr.mxu0 0.0
  %352 = vmatpush1.msra.mxu0 0.0
  %353 = vmatprep.subr.mxu0 0.0
  %354 = vmatpush1.msra.mxu0 0.0
  %355 = vmatprep.subr.mxu0 0.0
  %356 = vmatpush1.msra.mxu0 0.0
  %357 = vmatprep.subr.mxu0 0.0
  %358 = vmatpush1.msra.mxu0 0.0
  %359 = vmatprep.subr.mxu0 0.0
  %360 = vmatpush1.msra.mxu0 0.0
  %361 = vmatprep.subr.mxu0 0.0
  %362 = vmatpush1.msra.mxu0 0.0
  %363 = vmatprep.subr.mxu0 0.0
  %364 = vmatpush1.msra.mxu0 0.0
  %365 = vmatprep.subr.mxu0 0.0
  %366 = vmatpush1.msra.mxu0 0.0
  %367 = vmatprep.subr.mxu0 0.0
  %368 = vmatpush1.msra.mxu0 0.0
  %369 = vmatprep.subr.mxu0 0.0
  %370 = vmatpush1.msra.mxu0 0.0
  %371 = vmatprep.subr.mxu0 0.0
  %372 = vmatpush1.msra.mxu0 0.0
  %373 = vmatprep.mubr.f32.mxu0 0.0
  %374 = vmatmul.mubr.f32.gmra.mrb[0].mxu0 %v307
  %v375 = vpop.f32.mrb[0].mxu0
  %v376 = vadd.f32 %v46, %v375
  %v377 = vpop.f32.mrb[0].mxu0
  %378 = vdwg.mxu0
  %v379 = vxor.u32 %v376, 2147483648
  %v380 = vmul.f32 %v379, 1.442695
  %v381 = vpow.pop %v380
  %v382 = vadd.f32 %v381, 1.0
  %v383 = vrcp.pop %v382
  %v384 = vmul.f32 1.0, %v383
  %v385 = vtanh.pop %v376
  %v386 = vmul.f32 %v384, %v170
  %388 = vrot.lane.b32.xlu0 %v385, 96
  %v389 = vpop.permute.xlu0 %388
  %v391 = vmul.f32 %v384, %v389
  %393 = vrot.lane.b32.xlu0 %v391, 16
  %v394 = vpop.permute.xlu0 %393
  %v396 = vadd.f32 %v386, %v394
  %v397 = vtanh.pop %v396
  %399 = vrot.lane.b32.xlu0 %v397, 32
  %v400 = vpop.permute.xlu0 %399
  %v402 = vmul.f32 %v384, %v400
  %v403 = vmul.f32 %v384, %v177
  %v404 = vadd.f32 %v403, %v394
  %v405 = vtanh.pop %v404
  %407 = vrot.lane.b32.xlu0 %v405, 32
  %v408 = vpop.permute.xlu0 %407
  %v410 = vmul.f32 %v384, %v408
  %v411 = vsel %vm287, 1, 0
  %412 = vset.pattern.permute.xlu0 0
  %413 = vperm.xlu0 %412, %v411
  %v414 = vpop.permute.xlu0 %413
  %vm415 = vcmp.eq.s32.totalorder %v414, 1
  %v416 = vsel %vm415, %v402, %v169
  %v417 = vsel %vm415, %v396, %v170
  %v418 = vsel %vm290, 1, 0
  %419 = vset.pattern.permute.xlu0 0
  %420 = vperm.xlu0 %419, %v418
  %v421 = vpop.permute.xlu0 %420
  %vm422 = vcmp.eq.s32.totalorder %v421, 1
  %v423 = vsel %vm422, %v410, %v176
  %v424 = vsel %vm422, %v404, %v177
  %v425 = vmax.f32 %v416, 0.0
  %v426 = vsel %vm415, %v425, 0.0
  %v427 = vmax.f32 %v423, 0.0
  %v428 = vsel %vm422, %v427, 0.0
  %s429 = scalar_lea.vmem %s2, 8
  %v430 = vld [vmem:[%s429] sm:$0xf]
  %v431 = vld [vmem:[%s429 + $0x4] sm:$0xf]
  %v434 = vunpack.c.l.s4 1966171168
  %v435 = vunpack.c.0.s8 %v434
  %v436 = vlaneseq
  %v437 = vshrl.u32 %v436, 7
  %v438 = vsub.s32 %v435, %v437
  %v439 = vrot.slane %v426, %v438
  %v440 = vcombine.high %v439, %v439
  %v442 = vunpack.c.l.s4 1966171168
  %v443 = vunpack.c.0.s8 %v442
  %v444 = vlaneseq
  %v445 = vshrl.u32 %v444, 7
  %v446 = vsub.s32 %v443, %v445
  %v447 = vrot.slane %v439, %v446
  %v449 = vunpack.c.l.s4 1966171168
  %v450 = vunpack.c.0.s8 %v449
  %v451 = vlaneseq
  %v452 = vshrl.u32 %v451, 7
  %v453 = vsub.s32 %v450, %v452
  %v454 = vrot.slane %v440, %v453
  %456 = vset.pattern.permute.xlu0 0
  %457 = vperm.xlu0 %456, %v430
  %v458 = vpop.permute.xlu0 %457
  %461 = vset.pattern.permute.xlu0 0
  %462 = vperm.xlu0 %461, %v431
  %v463 = vpop.permute.xlu0 %462
  %v465 = vlaneseq
  %v466 = vshrl.u32 %v465, 7
  %v467 = vsub.s32 0, %v466
  %v468 = vrot.slane %v447, %v467
  %v469 = vlaneseq
  %v470 = vshrl.u32 %v469, 7
  %v471 = vsub.s32 0, %v470
  %v472 = vrot.slane %v454, %v471
  %v475 = vmul.f32 %v458, %v468
  %v476 = vmul.f32 %v463, %v472
  %v477 = vadd.f32 %v229, %v475
  %v478 = vadd.f32 %v230, %v476
  %s479 = scalar_lea.vmem %s2, 48
  %v480 = vld [vmem:[%s479] sm:$0xf]
  %v481 = vld [vmem:[%s479 + $0x4] sm:$0xf]
  %v484 = vunpack.c.l.s4 1966171168
  %v485 = vunpack.c.0.s8 %v484
  %v486 = vlaneseq
  %v487 = vshrl.u32 %v486, 7
  %v488 = vsub.s32 %v485, %v487
  %v489 = vrot.slane %v428, %v488
  %v490 = vcombine.high %v489, %v489
  %v492 = vunpack.c.l.s4 1966171168
  %v493 = vunpack.c.0.s8 %v492
  %v494 = vlaneseq
  %v495 = vshrl.u32 %v494, 7
  %v496 = vsub.s32 %v493, %v495
  %v497 = vrot.slane %v489, %v496
  %v499 = vunpack.c.l.s4 1966171168
  %v500 = vunpack.c.0.s8 %v499
  %v501 = vlaneseq
  %v502 = vshrl.u32 %v501, 7
  %v503 = vsub.s32 %v500, %v502
  %v504 = vrot.slane %v490, %v503
  %506 = vset.pattern.permute.xlu0 0
  %507 = vperm.xlu0 %506, %v480
  %v508 = vpop.permute.xlu0 %507
  %511 = vset.pattern.permute.xlu0 0
  %512 = vperm.xlu0 %511, %v481
  %v513 = vpop.permute.xlu0 %512
  %v515 = vlaneseq
  %v516 = vshrl.u32 %v515, 7
  %v517 = vsub.s32 0, %v516
  %v518 = vrot.slane %v497, %v517
  %v519 = vlaneseq
  %v520 = vshrl.u32 %v519, 7
  %v521 = vsub.s32 0, %v520
  %v522 = vrot.slane %v504, %v521
  %v525 = vmul.f32 %v508, %v518
  %v526 = vmul.f32 %v513, %v522
  %v527 = vadd.f32 %v279, %v525
  %v528 = vadd.f32 %v280, %v526
  %s529 = scalar_lea.vmem %s0, 4
  %v530 = vld [vmem:[%s529] sm:$0x3]
  %s531 = scalar_lea.vmem %s0, 10
  %v532 = vld [vmem:[%s531] sm:$0x3]
  %s533 = scalar_lea.vmem %s1, 4
  %v534 = vld [vmem:[%s533] sm:$0x3]
  %vm535 = vcmp.gt.f32.partialorder %v534, 0.0
  %s536 = scalar_lea.vmem %s1, 10
  %v537 = vld [vmem:[%s536] sm:$0x3]
  %vm538 = vcmp.gt.f32.partialorder %v537, 0.0
  %540 = vrot.lane.b32.xlu0 %v416, 112
  %v541 = vpop.permute.xlu0 %540
  %544 = vrot.lane.b32.xlu0 %v532, 48
  %v545 = vpop.permute.xlu0 %544
  %548 = vrot.lane.b32.xlu0 %v423, 96
  %v549 = vpop.permute.xlu0 %548
  %v551 = vsel %vm60, %v530, %v541
  %v552 = vsel %vm62, %v551, %v545
  %v553 = vsel %vm64, %v552, %v549
  %v555 = vsel %vm66, %v553, 0
  %557 = vmatprep.subr.mxu0 0.0
  %558 = vmatpush1.msra.mxu0 %v29
  %559 = vmatprep.subr.mxu0 0.0
  %560 = vmatpush1.msra.mxu0 %v30
  %561 = vmatprep.subr.mxu0 0.0
  %562 = vmatpush1.msra.mxu0 %v31
  %563 = vmatprep.subr.mxu0 0.0
  %564 = vmatpush1.msra.mxu0 %v32
  %565 = vmatprep.subr.mxu0 0.0
  %566 = vmatpush1.msra.mxu0 %v33
  %567 = vmatprep.subr.mxu0 0.0
  %568 = vmatpush1.msra.mxu0 %v34
  %569 = vmatprep.subr.mxu0 0.0
  %570 = vmatpush1.msra.mxu0 %v35
  %571 = vmatprep.subr.mxu0 0.0
  %572 = vmatpush1.msra.mxu0 %v36
  %573 = vmatprep.subr.mxu0 0.0
  %574 = vmatpush1.msra.mxu0 %v37
  %575 = vmatprep.subr.mxu0 0.0
  %576 = vmatpush1.msra.mxu0 %v38
  %577 = vmatprep.subr.mxu0 0.0
  %578 = vmatpush1.msra.mxu0 %v39
  %579 = vmatprep.subr.mxu0 0.0
  %580 = vmatpush1.msra.mxu0 %v40
  %581 = vmatprep.subr.mxu0 0.0
  %582 = vmatpush1.msra.mxu0 0.0
  %583 = vmatprep.subr.mxu0 0.0
  %584 = vmatpush1.msra.mxu0 0.0
  %585 = vmatprep.subr.mxu0 0.0
  %586 = vmatpush1.msra.mxu0 0.0
  %587 = vmatprep.subr.mxu0 0.0
  %588 = vmatpush1.msra.mxu0 0.0
  %589 = vmatprep.subr.mxu0 0.0
  %590 = vmatpush1.msra.mxu0 0.0
  %591 = vmatprep.subr.mxu0 0.0
  %592 = vmatpush1.msra.mxu0 0.0
  %593 = vmatprep.subr.mxu0 0.0
  %594 = vmatpush1.msra.mxu0 0.0
  %595 = vmatprep.subr.mxu0 0.0
  %596 = vmatpush1.msra.mxu0 0.0
  %597 = vmatprep.subr.mxu0 0.0
  %598 = vmatpush1.msra.mxu0 0.0
  %599 = vmatprep.subr.mxu0 0.0
  %600 = vmatpush1.msra.mxu0 0.0
  %601 = vmatprep.subr.mxu0 0.0
  %602 = vmatpush1.msra.mxu0 0.0
  %603 = vmatprep.subr.mxu0 0.0
  %604 = vmatpush1.msra.mxu0 0.0
  %605 = vmatprep.subr.mxu0 0.0
  %606 = vmatpush1.msra.mxu0 0.0
  %607 = vmatprep.subr.mxu0 0.0
  %608 = vmatpush1.msra.mxu0 0.0
  %609 = vmatprep.subr.mxu0 0.0
  %610 = vmatpush1.msra.mxu0 0.0
  %611 = vmatprep.subr.mxu0 0.0
  %612 = vmatpush1.msra.mxu0 0.0
  %613 = vmatprep.subr.mxu0 0.0
  %614 = vmatpush1.msra.mxu0 0.0
  %615 = vmatprep.subr.mxu0 0.0
  %616 = vmatpush1.msra.mxu0 0.0
  %617 = vmatprep.subr.mxu0 0.0
  %618 = vmatpush1.msra.mxu0 0.0
  %619 = vmatprep.subr.mxu0 0.0
  %620 = vmatpush1.msra.mxu0 0.0
  %621 = vmatprep.mubr.f32.mxu0 0.0
  %622 = vmatmul.mubr.f32.gmra.mrb[0].mxu0 %v555
  %v623 = vpop.f32.mrb[0].mxu0
  %v624 = vadd.f32 %v46, %v623
  %v625 = vpop.f32.mrb[0].mxu0
  %626 = vdwg.mxu0
  %v627 = vxor.u32 %v624, 2147483648
  %v628 = vmul.f32 %v627, 1.442695
  %v629 = vpow.pop %v628
  %v630 = vadd.f32 %v629, 1.0
  %v631 = vrcp.pop %v630
  %v632 = vmul.f32 1.0, %v631
  %v633 = vtanh.pop %v624
  %v634 = vmul.f32 %v632, %v417
  %636 = vrot.lane.b32.xlu0 %v633, 96
  %v637 = vpop.permute.xlu0 %636
  %v639 = vmul.f32 %v632, %v637
  %641 = vrot.lane.b32.xlu0 %v639, 16
  %v642 = vpop.permute.xlu0 %641
  %v644 = vadd.f32 %v634, %v642
  %v645 = vtanh.pop %v644
  %647 = vrot.lane.b32.xlu0 %v645, 32
  %v648 = vpop.permute.xlu0 %647
  %v650 = vmul.f32 %v632, %v648
  %v651 = vmul.f32 %v632, %v424
  %v652 = vadd.f32 %v651, %v642
  %v653 = vtanh.pop %v652
  %655 = vrot.lane.b32.xlu0 %v653, 32
  %v656 = vpop.permute.xlu0 %655
  %v658 = vmul.f32 %v632, %v656
  %v659 = vsel %vm535, 1, 0
  %660 = vset.pattern.permute.xlu0 0
  %661 = vperm.xlu0 %660, %v659
  %v662 = vpop.permute.xlu0 %661
  %vm663 = vcmp.eq.s32.totalorder %v662, 1
  %v664 = vsel %vm663, %v650, %v416
  %v665 = vsel %vm663, %v644, %v417
  %v666 = vsel %vm538, 1, 0
  %667 = vset.pattern.permute.xlu0 0
  %668 = vperm.xlu0 %667, %v666
  %v669 = vpop.permute.xlu0 %668
  %vm670 = vcmp.eq.s32.totalorder %v669, 1
  %v671 = vsel %vm670, %v658, %v423
  %v672 = vsel %vm670, %v652, %v424
  %v673 = vmax.f32 %v664, 0.0
  %v674 = vsel %vm663, %v673, 0.0
  %v675 = vmax.f32 %v671, 0.0
  %v676 = vsel %vm670, %v675, 0.0
  %s677 = scalar_lea.vmem %s2, 16
  %v678 = vld [vmem:[%s677] sm:$0xf]
  %v679 = vld [vmem:[%s677 + $0x4] sm:$0xf]
  %v682 = vunpack.c.l.s4 1966171168
  %v683 = vunpack.c.0.s8 %v682
  %v684 = vlaneseq
  %v685 = vshrl.u32 %v684, 7
  %v686 = vsub.s32 %v683, %v685
  %v687 = vrot.slane %v674, %v686
  %v688 = vcombine.high %v687, %v687
  %v690 = vunpack.c.l.s4 1966171168
  %v691 = vunpack.c.0.s8 %v690
  %v692 = vlaneseq
  %v693 = vshrl.u32 %v692, 7
  %v694 = vsub.s32 %v691, %v693
  %v695 = vrot.slane %v687, %v694
  %v697 = vunpack.c.l.s4 1966171168
  %v698 = vunpack.c.0.s8 %v697
  %v699 = vlaneseq
  %v700 = vshrl.u32 %v699, 7
  %v701 = vsub.s32 %v698, %v700
  %v702 = vrot.slane %v688, %v701
  %704 = vset.pattern.permute.xlu0 0
  %705 = vperm.xlu0 %704, %v678
  %v706 = vpop.permute.xlu0 %705
  %709 = vset.pattern.permute.xlu0 0
  %710 = vperm.xlu0 %709, %v679
  %v711 = vpop.permute.xlu0 %710
  %v713 = vlaneseq
  %v714 = vshrl.u32 %v713, 7
  %v715 = vsub.s32 0, %v714
  %v716 = vrot.slane %v695, %v715
  %v717 = vlaneseq
  %v718 = vshrl.u32 %v717, 7
  %v719 = vsub.s32 0, %v718
  %v720 = vrot.slane %v702, %v719
  %v723 = vmul.f32 %v706, %v716
  %v724 = vmul.f32 %v711, %v720
  %v725 = vadd.f32 %v477, %v723
  %v726 = vadd.f32 %v478, %v724
  %s727 = scalar_lea.vmem %s2, 40
  %v728 = vld [vmem:[%s727] sm:$0xf]
  %v729 = vld [vmem:[%s727 + $0x4] sm:$0xf]
  %v732 = vunpack.c.l.s4 1966171168
  %v733 = vunpack.c.0.s8 %v732
  %v734 = vlaneseq
  %v735 = vshrl.u32 %v734, 7
  %v736 = vsub.s32 %v733, %v735
  %v737 = vrot.slane %v676, %v736
  %v738 = vcombine.high %v737, %v737
  %v740 = vunpack.c.l.s4 1966171168
  %v741 = vunpack.c.0.s8 %v740
  %v742 = vlaneseq
  %v743 = vshrl.u32 %v742, 7
  %v744 = vsub.s32 %v741, %v743
  %v745 = vrot.slane %v737, %v744
  %v747 = vunpack.c.l.s4 1966171168
  %v748 = vunpack.c.0.s8 %v747
  %v749 = vlaneseq
  %v750 = vshrl.u32 %v749, 7
  %v751 = vsub.s32 %v748, %v750
  %v752 = vrot.slane %v738, %v751
  %754 = vset.pattern.permute.xlu0 0
  %755 = vperm.xlu0 %754, %v728
  %v756 = vpop.permute.xlu0 %755
  %759 = vset.pattern.permute.xlu0 0
  %760 = vperm.xlu0 %759, %v729
  %v761 = vpop.permute.xlu0 %760
  %v763 = vlaneseq
  %v764 = vshrl.u32 %v763, 7
  %v765 = vsub.s32 0, %v764
  %v766 = vrot.slane %v745, %v765
  %v767 = vlaneseq
  %v768 = vshrl.u32 %v767, 7
  %v769 = vsub.s32 0, %v768
  %v770 = vrot.slane %v752, %v769
  %v773 = vmul.f32 %v756, %v766
  %v774 = vmul.f32 %v761, %v770
  %v775 = vadd.f32 %v527, %v773
  %v776 = vadd.f32 %v528, %v774
  %s777 = scalar_lea.vmem %s0, 6
  %v778 = vld [vmem:[%s777] sm:$0x3]
  %s779 = scalar_lea.vmem %s0, 8
  %v780 = vld [vmem:[%s779] sm:$0x3]
  %s781 = scalar_lea.vmem %s1, 6
  %v782 = vld [vmem:[%s781] sm:$0x3]
  %vm783 = vcmp.gt.f32.partialorder %v782, 0.0
  %s784 = scalar_lea.vmem %s1, 8
  %v785 = vld [vmem:[%s784] sm:$0x3]
  %vm786 = vcmp.gt.f32.partialorder %v785, 0.0
  %788 = vrot.lane.b32.xlu0 %v664, 112
  %v789 = vpop.permute.xlu0 %788
  %792 = vrot.lane.b32.xlu0 %v780, 48
  %v793 = vpop.permute.xlu0 %792
  %796 = vrot.lane.b32.xlu0 %v671, 96
  %v797 = vpop.permute.xlu0 %796
  %v799 = vsel %vm60, %v778, %v789
  %v800 = vsel %vm62, %v799, %v793
  %v801 = vsel %vm64, %v800, %v797
  %v803 = vsel %vm66, %v801, 0
  %805 = vmatprep.subr.mxu0 0.0
  %806 = vmatpush1.msra.mxu0 %v29
  %807 = vmatprep.subr.mxu0 0.0
  %808 = vmatpush1.msra.mxu0 %v30
  %809 = vmatprep.subr.mxu0 0.0
  %810 = vmatpush1.msra.mxu0 %v31
  %811 = vmatprep.subr.mxu0 0.0
  %812 = vmatpush1.msra.mxu0 %v32
  %813 = vmatprep.subr.mxu0 0.0
  %814 = vmatpush1.msra.mxu0 %v33
  %815 = vmatprep.subr.mxu0 0.0
  %816 = vmatpush1.msra.mxu0 %v34
  %817 = vmatprep.subr.mxu0 0.0
  %818 = vmatpush1.msra.mxu0 %v35
  %819 = vmatprep.subr.mxu0 0.0
  %820 = vmatpush1.msra.mxu0 %v36
  %821 = vmatprep.subr.mxu0 0.0
  %822 = vmatpush1.msra.mxu0 %v37
  %823 = vmatprep.subr.mxu0 0.0
  %824 = vmatpush1.msra.mxu0 %v38
  %825 = vmatprep.subr.mxu0 0.0
  %826 = vmatpush1.msra.mxu0 %v39
  %827 = vmatprep.subr.mxu0 0.0
  %828 = vmatpush1.msra.mxu0 %v40
  %829 = vmatprep.subr.mxu0 0.0
  %830 = vmatpush1.msra.mxu0 0.0
  %831 = vmatprep.subr.mxu0 0.0
  %832 = vmatpush1.msra.mxu0 0.0
  %833 = vmatprep.subr.mxu0 0.0
  %834 = vmatpush1.msra.mxu0 0.0
  %835 = vmatprep.subr.mxu0 0.0
  %836 = vmatpush1.msra.mxu0 0.0
  %837 = vmatprep.subr.mxu0 0.0
  %838 = vmatpush1.msra.mxu0 0.0
  %839 = vmatprep.subr.mxu0 0.0
  %840 = vmatpush1.msra.mxu0 0.0
  %841 = vmatprep.subr.mxu0 0.0
  %842 = vmatpush1.msra.mxu0 0.0
  %843 = vmatprep.subr.mxu0 0.0
  %844 = vmatpush1.msra.mxu0 0.0
  %845 = vmatprep.subr.mxu0 0.0
  %846 = vmatpush1.msra.mxu0 0.0
  %847 = vmatprep.subr.mxu0 0.0
  %848 = vmatpush1.msra.mxu0 0.0
  %849 = vmatprep.subr.mxu0 0.0
  %850 = vmatpush1.msra.mxu0 0.0
  %851 = vmatprep.subr.mxu0 0.0
  %852 = vmatpush1.msra.mxu0 0.0
  %853 = vmatprep.subr.mxu0 0.0
  %854 = vmatpush1.msra.mxu0 0.0
  %855 = vmatprep.subr.mxu0 0.0
  %856 = vmatpush1.msra.mxu0 0.0
  %857 = vmatprep.subr.mxu0 0.0
  %858 = vmatpush1.msra.mxu0 0.0
  %859 = vmatprep.subr.mxu0 0.0
  %860 = vmatpush1.msra.mxu0 0.0
  %861 = vmatprep.subr.mxu0 0.0
  %862 = vmatpush1.msra.mxu0 0.0
  %863 = vmatprep.subr.mxu0 0.0
  %864 = vmatpush1.msra.mxu0 0.0
  %865 = vmatprep.subr.mxu0 0.0
  %866 = vmatpush1.msra.mxu0 0.0
  %867 = vmatprep.subr.mxu0 0.0
  %868 = vmatpush1.msra.mxu0 0.0
  %869 = vmatprep.mubr.f32.mxu0 0.0
  %870 = vmatmul.mubr.f32.gmra.mrb[0].mxu0 %v803
  %v871 = vpop.f32.mrb[0].mxu0
  %v872 = vadd.f32 %v46, %v871
  %v873 = vpop.f32.mrb[0].mxu0
  %874 = vdwg.mxu0
  %v875 = vxor.u32 %v872, 2147483648
  %v876 = vmul.f32 %v875, 1.442695
  %v877 = vpow.pop %v876
  %v878 = vadd.f32 %v877, 1.0
  %v879 = vrcp.pop %v878
  %v880 = vmul.f32 1.0, %v879
  %v881 = vtanh.pop %v872
  %v882 = vmul.f32 %v880, %v665
  %884 = vrot.lane.b32.xlu0 %v881, 96
  %v885 = vpop.permute.xlu0 %884
  %v887 = vmul.f32 %v880, %v885
  %889 = vrot.lane.b32.xlu0 %v887, 16
  %v890 = vpop.permute.xlu0 %889
  %v892 = vadd.f32 %v882, %v890
  %v893 = vtanh.pop %v892
  %895 = vrot.lane.b32.xlu0 %v893, 32
  %v896 = vpop.permute.xlu0 %895
  %v898 = vmul.f32 %v880, %v896
  %v899 = vmul.f32 %v880, %v672
  %v900 = vadd.f32 %v899, %v890
  %v901 = vtanh.pop %v900
  %903 = vrot.lane.b32.xlu0 %v901, 32
  %v904 = vpop.permute.xlu0 %903
  %v906 = vmul.f32 %v880, %v904
  %v907 = vsel %vm783, 1, 0
  %908 = vset.pattern.permute.xlu0 0
  %909 = vperm.xlu0 %908, %v907
  %v910 = vpop.permute.xlu0 %909
  %vm911 = vcmp.eq.s32.totalorder %v910, 1
  %v912 = vsel %vm911, %v898, %v664
  %v913 = vsel %vm911, %v892, %v665
  %v914 = vsel %vm786, 1, 0
  %915 = vset.pattern.permute.xlu0 0
  %916 = vperm.xlu0 %915, %v914
  %v917 = vpop.permute.xlu0 %916
  %vm918 = vcmp.eq.s32.totalorder %v917, 1
  %v919 = vsel %vm918, %v906, %v671
  %v920 = vsel %vm918, %v900, %v672
  %v921 = vmax.f32 %v912, 0.0
  %v922 = vsel %vm911, %v921, 0.0
  %v923 = vmax.f32 %v919, 0.0
  %v924 = vsel %vm918, %v923, 0.0
  %s925 = scalar_lea.vmem %s2, 24
  %v926 = vld [vmem:[%s925] sm:$0xf]
  %v927 = vld [vmem:[%s925 + $0x4] sm:$0xf]
  %v930 = vunpack.c.l.s4 1966171168
  %v931 = vunpack.c.0.s8 %v930
  %v932 = vlaneseq
  %v933 = vshrl.u32 %v932, 7
  %v934 = vsub.s32 %v931, %v933
  %v935 = vrot.slane %v922, %v934
  %v936 = vcombine.high %v935, %v935
  %v938 = vunpack.c.l.s4 1966171168
  %v939 = vunpack.c.0.s8 %v938
  %v940 = vlaneseq
  %v941 = vshrl.u32 %v940, 7
  %v942 = vsub.s32 %v939, %v941
  %v943 = vrot.slane %v935, %v942
  %v945 = vunpack.c.l.s4 1966171168
  %v946 = vunpack.c.0.s8 %v945
  %v947 = vlaneseq
  %v948 = vshrl.u32 %v947, 7
  %v949 = vsub.s32 %v946, %v948
  %v950 = vrot.slane %v936, %v949
  %952 = vset.pattern.permute.xlu0 0
  %953 = vperm.xlu0 %952, %v926
  %v954 = vpop.permute.xlu0 %953
  %957 = vset.pattern.permute.xlu0 0
  %958 = vperm.xlu0 %957, %v927
  %v959 = vpop.permute.xlu0 %958
  %v961 = vlaneseq
  %v962 = vshrl.u32 %v961, 7
  %v963 = vsub.s32 0, %v962
  %v964 = vrot.slane %v943, %v963
  %v965 = vlaneseq
  %v966 = vshrl.u32 %v965, 7
  %v967 = vsub.s32 0, %v966
  %v968 = vrot.slane %v950, %v967
  %v971 = vmul.f32 %v954, %v964
  %v972 = vmul.f32 %v959, %v968
  %v973 = vadd.f32 %v725, %v971
  %v974 = vadd.f32 %v726, %v972
  %s975 = scalar_lea.vmem %s2, 32
  %v976 = vld [vmem:[%s975] sm:$0xf]
  %v977 = vld [vmem:[%s975 + $0x4] sm:$0xf]
  %v980 = vunpack.c.l.s4 1966171168
  %v981 = vunpack.c.0.s8 %v980
  %v982 = vlaneseq
  %v983 = vshrl.u32 %v982, 7
  %v984 = vsub.s32 %v981, %v983
  %v985 = vrot.slane %v924, %v984
  %v986 = vcombine.high %v985, %v985
  %v988 = vunpack.c.l.s4 1966171168
  %v989 = vunpack.c.0.s8 %v988
  %v990 = vlaneseq
  %v991 = vshrl.u32 %v990, 7
  %v992 = vsub.s32 %v989, %v991
  %v993 = vrot.slane %v985, %v992
  %v995 = vunpack.c.l.s4 1966171168
  %v996 = vunpack.c.0.s8 %v995
  %v997 = vlaneseq
  %v998 = vshrl.u32 %v997, 7
  %v999 = vsub.s32 %v996, %v998
  %v1000 = vrot.slane %v986, %v999
  %1002 = vset.pattern.permute.xlu0 0
  %1003 = vperm.xlu0 %1002, %v976
  %v1004 = vpop.permute.xlu0 %1003
  %1007 = vset.pattern.permute.xlu0 0
  %1008 = vperm.xlu0 %1007, %v977
  %v1009 = vpop.permute.xlu0 %1008
  %v1011 = vlaneseq
  %v1012 = vshrl.u32 %v1011, 7
  %v1013 = vsub.s32 0, %v1012
  %v1014 = vrot.slane %v993, %v1013
  %v1015 = vlaneseq
  %v1016 = vshrl.u32 %v1015, 7
  %v1017 = vsub.s32 0, %v1016
  %v1018 = vrot.slane %v1000, %v1017
  %v1021 = vmul.f32 %v1004, %v1014
  %v1022 = vmul.f32 %v1009, %v1018
  %v1023 = vadd.f32 %v775, %v1021
  %v1024 = vadd.f32 %v776, %v1022
  %1026 = vrot.lane.b32.xlu0 %v912, 112
  %v1027 = vpop.permute.xlu0 %1026
  %1030 = vrot.lane.b32.xlu0 %v778, 48
  %v1031 = vpop.permute.xlu0 %1030
  %1034 = vrot.lane.b32.xlu0 %v919, 96
  %v1035 = vpop.permute.xlu0 %1034
  %v1037 = vsel %vm60, %v780, %v1027
  %v1038 = vsel %vm62, %v1037, %v1031
  %v1039 = vsel %vm64, %v1038, %v1035
  %v1041 = vsel %vm66, %v1039, 0
  %1043 = vmatprep.subr.mxu0 0.0
  %1044 = vmatpush1.msra.mxu0 %v29
  %1045 = vmatprep.subr.mxu0 0.0
  %1046 = vmatpush1.msra.mxu0 %v30
  %1047 = vmatprep.subr.mxu0 0.0
  %1048 = vmatpush1.msra.mxu0 %v31
  %1049 = vmatprep.subr.mxu0 0.0
  %1050 = vmatpush1.msra.mxu0 %v32
  %1051 = vmatprep.subr.mxu0 0.0
  %1052 = vmatpush1.msra.mxu0 %v33
  %1053 = vmatprep.subr.mxu0 0.0
  %1054 = vmatpush1.msra.mxu0 %v34
  %1055 = vmatprep.subr.mxu0 0.0
  %1056 = vmatpush1.msra.mxu0 %v35
  %1057 = vmatprep.subr.mxu0 0.0
  %1058 = vmatpush1.msra.mxu0 %v36
  %1059 = vmatprep.subr.mxu0 0.0
  %1060 = vmatpush1.msra.mxu0 %v37
  %1061 = vmatprep.subr.mxu0 0.0
  %1062 = vmatpush1.msra.mxu0 %v38
  %1063 = vmatprep.subr.mxu0 0.0
  %1064 = vmatpush1.msra.mxu0 %v39
  %1065 = vmatprep.subr.mxu0 0.0
  %1066 = vmatpush1.msra.mxu0 %v40
  %1067 = vmatprep.subr.mxu0 0.0
  %1068 = vmatpush1.msra.mxu0 0.0
  %1069 = vmatprep.subr.mxu0 0.0
  %1070 = vmatpush1.msra.mxu0 0.0
  %1071 = vmatprep.subr.mxu0 0.0
  %1072 = vmatpush1.msra.mxu0 0.0
  %1073 = vmatprep.subr.mxu0 0.0
  %1074 = vmatpush1.msra.mxu0 0.0
  %1075 = vmatprep.subr.mxu0 0.0
  %1076 = vmatpush1.msra.mxu0 0.0
  %1077 = vmatprep.subr.mxu0 0.0
  %1078 = vmatpush1.msra.mxu0 0.0
  %1079 = vmatprep.subr.mxu0 0.0
  %1080 = vmatpush1.msra.mxu0 0.0
  %1081 = vmatprep.subr.mxu0 0.0
  %1082 = vmatpush1.msra.mxu0 0.0
  %1083 = vmatprep.subr.mxu0 0.0
  %1084 = vmatpush1.msra.mxu0 0.0
  %1085 = vmatprep.subr.mxu0 0.0
  %1086 = vmatpush1.msra.mxu0 0.0
  %1087 = vmatprep.subr.mxu0 0.0
  %1088 = vmatpush1.msra.mxu0 0.0
  %1089 = vmatprep.subr.mxu0 0.0
  %1090 = vmatpush1.msra.mxu0 0.0
  %1091 = vmatprep.subr.mxu0 0.0
  %1092 = vmatpush1.msra.mxu0 0.0
  %1093 = vmatprep.subr.mxu0 0.0
  %1094 = vmatpush1.msra.mxu0 0.0
  %1095 = vmatprep.subr.mxu0 0.0
  %1096 = vmatpush1.msra.mxu0 0.0
  %1097 = vmatprep.subr.mxu0 0.0
  %1098 = vmatpush1.msra.mxu0 0.0
  %1099 = vmatprep.subr.mxu0 0.0
  %1100 = vmatpush1.msra.mxu0 0.0
  %1101 = vmatprep.subr.mxu0 0.0
  %1102 = vmatpush1.msra.mxu0 0.0
  %1103 = vmatprep.subr.mxu0 0.0
  %1104 = vmatpush1.msra.mxu0 0.0
  %1105 = vmatprep.subr.mxu0 0.0
  %1106 = vmatpush1.msra.mxu0 0.0
  %1107 = vmatprep.mubr.f32.mxu0 0.0
  %1108 = vmatmul.mubr.f32.gmra.mrb[0].mxu0 %v1041
  %v1109 = vpop.f32.mrb[0].mxu0
  %v1110 = vadd.f32 %v46, %v1109
  %v1111 = vpop.f32.mrb[0].mxu0
  %1112 = vdwg.mxu0
  %v1113 = vxor.u32 %v1110, 2147483648
  %v1114 = vmul.f32 %v1113, 1.442695
  %v1115 = vpow.pop %v1114
  %v1116 = vadd.f32 %v1115, 1.0
  %v1117 = vrcp.pop %v1116
  %v1118 = vmul.f32 1.0, %v1117
  %v1119 = vtanh.pop %v1110
  %v1120 = vmul.f32 %v1118, %v913
  %1122 = vrot.lane.b32.xlu0 %v1119, 96
  %v1123 = vpop.permute.xlu0 %1122
  %v1125 = vmul.f32 %v1118, %v1123
  %1127 = vrot.lane.b32.xlu0 %v1125, 16
  %v1128 = vpop.permute.xlu0 %1127
  %v1130 = vadd.f32 %v1120, %v1128
  %v1131 = vtanh.pop %v1130
  %1133 = vrot.lane.b32.xlu0 %v1131, 32
  %v1134 = vpop.permute.xlu0 %1133
  %v1136 = vmul.f32 %v1118, %v1134
  %v1137 = vmul.f32 %v1118, %v920
  %v1138 = vadd.f32 %v1137, %v1128
  %v1139 = vtanh.pop %v1138
  %1141 = vrot.lane.b32.xlu0 %v1139, 32
  %v1142 = vpop.permute.xlu0 %1141
  %v1144 = vmul.f32 %v1118, %v1142
  %v1145 = vsel %vm918, %v1136, %v912
  %v1146 = vsel %vm918, %v1130, %v913
  %v1147 = vsel %vm911, %v1144, %v919
  %v1148 = vsel %vm911, %v1138, %v920
  %v1149 = vmax.f32 %v1145, 0.0
  %v1150 = vsel %vm918, %v1149, 0.0
  %v1151 = vmax.f32 %v1147, 0.0
  %v1152 = vsel %vm911, %v1151, 0.0
  %v1155 = vunpack.c.l.s4 1966171168
  %v1156 = vunpack.c.0.s8 %v1155
  %v1157 = vlaneseq
  %v1158 = vshrl.u32 %v1157, 7
  %v1159 = vsub.s32 %v1156, %v1158
  %v1160 = vrot.slane %v1150, %v1159
  %v1161 = vcombine.high %v1160, %v1160
  %v1163 = vunpack.c.l.s4 1966171168
  %v1164 = vunpack.c.0.s8 %v1163
  %v1165 = vlaneseq
  %v1166 = vshrl.u32 %v1165, 7
  %v1167 = vsub.s32 %v1164, %v1166
  %v1168 = vrot.slane %v1160, %v1167
  %v1170 = vunpack.c.l.s4 1966171168
  %v1171 = vunpack.c.0.s8 %v1170
  %v1172 = vlaneseq
  %v1173 = vshrl.u32 %v1172, 7
  %v1174 = vsub.s32 %v1171, %v1173
  %v1175 = vrot.slane %v1161, %v1174
  %v1176 = vlaneseq
  %v1177 = vshrl.u32 %v1176, 7
  %v1178 = vsub.s32 0, %v1177
  %v1179 = vrot.slane %v1168, %v1178
  %v1180 = vlaneseq
  %v1181 = vshrl.u32 %v1180, 7
  %v1182 = vsub.s32 0, %v1181
  %v1183 = vrot.slane %v1175, %v1182
  %v1186 = vmul.f32 %v1004, %v1179
  %v1187 = vmul.f32 %v1009, %v1183
  %v1188 = vadd.f32 %v973, %v1186
  %v1189 = vadd.f32 %v974, %v1187
  %v1192 = vunpack.c.l.s4 1966171168
  %v1193 = vunpack.c.0.s8 %v1192
  %v1194 = vlaneseq
  %v1195 = vshrl.u32 %v1194, 7
  %v1196 = vsub.s32 %v1193, %v1195
  %v1197 = vrot.slane %v1152, %v1196
  %v1198 = vcombine.high %v1197, %v1197
  %v1200 = vunpack.c.l.s4 1966171168
  %v1201 = vunpack.c.0.s8 %v1200
  %v1202 = vlaneseq
  %v1203 = vshrl.u32 %v1202, 7
  %v1204 = vsub.s32 %v1201, %v1203
  %v1205 = vrot.slane %v1197, %v1204
  %v1207 = vunpack.c.l.s4 1966171168
  %v1208 = vunpack.c.0.s8 %v1207
  %v1209 = vlaneseq
  %v1210 = vshrl.u32 %v1209, 7
  %v1211 = vsub.s32 %v1208, %v1210
  %v1212 = vrot.slane %v1198, %v1211
  %v1213 = vlaneseq
  %v1214 = vshrl.u32 %v1213, 7
  %v1215 = vsub.s32 0, %v1214
  %v1216 = vrot.slane %v1205, %v1215
  %v1217 = vlaneseq
  %v1218 = vshrl.u32 %v1217, 7
  %v1219 = vsub.s32 0, %v1218
  %v1220 = vrot.slane %v1212, %v1219
  %v1223 = vmul.f32 %v954, %v1216
  %v1224 = vmul.f32 %v959, %v1220
  %v1225 = vadd.f32 %v1023, %v1223
  %v1226 = vadd.f32 %v1024, %v1224
  %1228 = vrot.lane.b32.xlu0 %v1145, 112
  %v1229 = vpop.permute.xlu0 %1228
  %1232 = vrot.lane.b32.xlu0 %v530, 48
  %v1233 = vpop.permute.xlu0 %1232
  %1236 = vrot.lane.b32.xlu0 %v1147, 96
  %v1237 = vpop.permute.xlu0 %1236
  %v1239 = vsel %vm60, %v532, %v1229
  %v1240 = vsel %vm62, %v1239, %v1233
  %v1241 = vsel %vm64, %v1240, %v1237
  %v1243 = vsel %vm66, %v1241, 0
  %1245 = vmatprep.subr.mxu0 0.0
  %1246 = vmatpush1.msra.mxu0 %v29
  %1247 = vmatprep.subr.mxu0 0.0
  %1248 = vmatpush1.msra.mxu0 %v30
  %1249 = vmatprep.subr.mxu0 0.0
  %1250 = vmatpush1.msra.mxu0 %v31
  %1251 = vmatprep.subr.mxu0 0.0
  %1252 = vmatpush1.msra.mxu0 %v32
  %1253 = vmatprep.subr.mxu0 0.0
  %1254 = vmatpush1.msra.mxu0 %v33
  %1255 = vmatprep.subr.mxu0 0.0
  %1256 = vmatpush1.msra.mxu0 %v34
  %1257 = vmatprep.subr.mxu0 0.0
  %1258 = vmatpush1.msra.mxu0 %v35
  %1259 = vmatprep.subr.mxu0 0.0
  %1260 = vmatpush1.msra.mxu0 %v36
  %1261 = vmatprep.subr.mxu0 0.0
  %1262 = vmatpush1.msra.mxu0 %v37
  %1263 = vmatprep.subr.mxu0 0.0
  %1264 = vmatpush1.msra.mxu0 %v38
  %1265 = vmatprep.subr.mxu0 0.0
  %1266 = vmatpush1.msra.mxu0 %v39
  %1267 = vmatprep.subr.mxu0 0.0
  %1268 = vmatpush1.msra.mxu0 %v40
  %1269 = vmatprep.subr.mxu0 0.0
  %1270 = vmatpush1.msra.mxu0 0.0
  %1271 = vmatprep.subr.mxu0 0.0
  %1272 = vmatpush1.msra.mxu0 0.0
  %1273 = vmatprep.subr.mxu0 0.0
  %1274 = vmatpush1.msra.mxu0 0.0
  %1275 = vmatprep.subr.mxu0 0.0
  %1276 = vmatpush1.msra.mxu0 0.0
  %1277 = vmatprep.subr.mxu0 0.0
  %1278 = vmatpush1.msra.mxu0 0.0
  %1279 = vmatprep.subr.mxu0 0.0
  %1280 = vmatpush1.msra.mxu0 0.0
  %1281 = vmatprep.subr.mxu0 0.0
  %1282 = vmatpush1.msra.mxu0 0.0
  %1283 = vmatprep.subr.mxu0 0.0
  %1284 = vmatpush1.msra.mxu0 0.0
  %1285 = vmatprep.subr.mxu0 0.0
  %1286 = vmatpush1.msra.mxu0 0.0
  %1287 = vmatprep.subr.mxu0 0.0
  %1288 = vmatpush1.msra.mxu0 0.0
  %1289 = vmatprep.subr.mxu0 0.0
  %1290 = vmatpush1.msra.mxu0 0.0
  %1291 = vmatprep.subr.mxu0 0.0
  %1292 = vmatpush1.msra.mxu0 0.0
  %1293 = vmatprep.subr.mxu0 0.0
  %1294 = vmatpush1.msra.mxu0 0.0
  %1295 = vmatprep.subr.mxu0 0.0
  %1296 = vmatpush1.msra.mxu0 0.0
  %1297 = vmatprep.subr.mxu0 0.0
  %1298 = vmatpush1.msra.mxu0 0.0
  %1299 = vmatprep.subr.mxu0 0.0
  %1300 = vmatpush1.msra.mxu0 0.0
  %1301 = vmatprep.subr.mxu0 0.0
  %1302 = vmatpush1.msra.mxu0 0.0
  %1303 = vmatprep.subr.mxu0 0.0
  %1304 = vmatpush1.msra.mxu0 0.0
  %1305 = vmatprep.subr.mxu0 0.0
  %1306 = vmatpush1.msra.mxu0 0.0
  %1307 = vmatprep.subr.mxu0 0.0
  %1308 = vmatpush1.msra.mxu0 0.0
  %1309 = vmatprep.mubr.f32.mxu0 0.0
  %1310 = vmatmul.mubr.f32.gmra.mrb[0].mxu0 %v1243
  %v1311 = vpop.f32.mrb[0].mxu0
  %v1312 = vadd.f32 %v46, %v1311
  %v1313 = vpop.f32.mrb[0].mxu0
  %1314 = vdwg.mxu0
  %v1315 = vxor.u32 %v1312, 2147483648
  %v1316 = vmul.f32 %v1315, 1.442695
  %v1317 = vpow.pop %v1316
  %v1318 = vadd.f32 %v1317, 1.0
  %v1319 = vrcp.pop %v1318
  %v1320 = vmul.f32 1.0, %v1319
  %v1321 = vtanh.pop %v1312
  %v1322 = vmul.f32 %v1320, %v1146
  %1324 = vrot.lane.b32.xlu0 %v1321, 96
  %v1325 = vpop.permute.xlu0 %1324
  %v1327 = vmul.f32 %v1320, %v1325
  %1329 = vrot.lane.b32.xlu0 %v1327, 16
  %v1330 = vpop.permute.xlu0 %1329
  %v1332 = vadd.f32 %v1322, %v1330
  %v1333 = vtanh.pop %v1332
  %1335 = vrot.lane.b32.xlu0 %v1333, 32
  %v1336 = vpop.permute.xlu0 %1335
  %v1338 = vmul.f32 %v1320, %v1336
  %v1339 = vmul.f32 %v1320, %v1148
  %v1340 = vadd.f32 %v1339, %v1330
  %v1341 = vtanh.pop %v1340
  %1343 = vrot.lane.b32.xlu0 %v1341, 32
  %v1344 = vpop.permute.xlu0 %1343
  %v1346 = vmul.f32 %v1320, %v1344
  %v1347 = vsel %vm670, %v1338, %v1145
  %v1348 = vsel %vm670, %v1332, %v1146
  %v1349 = vsel %vm663, %v1346, %v1147
  %v1350 = vsel %vm663, %v1340, %v1148
  %v1351 = vmax.f32 %v1347, 0.0
  %v1352 = vsel %vm670, %v1351, 0.0
  %v1353 = vmax.f32 %v1349, 0.0
  %v1354 = vsel %vm663, %v1353, 0.0
  %v1357 = vunpack.c.l.s4 1966171168
  %v1358 = vunpack.c.0.s8 %v1357
  %v1359 = vlaneseq
  %v1360 = vshrl.u32 %v1359, 7
  %v1361 = vsub.s32 %v1358, %v1360
  %v1362 = vrot.slane %v1352, %v1361
  %v1363 = vcombine.high %v1362, %v1362
  %v1365 = vunpack.c.l.s4 1966171168
  %v1366 = vunpack.c.0.s8 %v1365
  %v1367 = vlaneseq
  %v1368 = vshrl.u32 %v1367, 7
  %v1369 = vsub.s32 %v1366, %v1368
  %v1370 = vrot.slane %v1362, %v1369
  %v1372 = vunpack.c.l.s4 1966171168
  %v1373 = vunpack.c.0.s8 %v1372
  %v1374 = vlaneseq
  %v1375 = vshrl.u32 %v1374, 7
  %v1376 = vsub.s32 %v1373, %v1375
  %v1377 = vrot.slane %v1363, %v1376
  %v1378 = vlaneseq
  %v1379 = vshrl.u32 %v1378, 7
  %v1380 = vsub.s32 0, %v1379
  %v1381 = vrot.slane %v1370, %v1380
  %v1382 = vlaneseq
  %v1383 = vshrl.u32 %v1382, 7
  %v1384 = vsub.s32 0, %v1383
  %v1385 = vrot.slane %v1377, %v1384
  %v1388 = vmul.f32 %v756, %v1381
  %v1389 = vmul.f32 %v761, %v1385
  %v1390 = vadd.f32 %v1188, %v1388
  %v1391 = vadd.f32 %v1189, %v1389
  %v1394 = vunpack.c.l.s4 1966171168
  %v1395 = vunpack.c.0.s8 %v1394
  %v1396 = vlaneseq
  %v1397 = vshrl.u32 %v1396, 7
  %v1398 = vsub.s32 %v1395, %v1397
  %v1399 = vrot.slane %v1354, %v1398
  %v1400 = vcombine.high %v1399, %v1399
  %v1402 = vunpack.c.l.s4 1966171168
  %v1403 = vunpack.c.0.s8 %v1402
  %v1404 = vlaneseq
  %v1405 = vshrl.u32 %v1404, 7
  %v1406 = vsub.s32 %v1403, %v1405
  %v1407 = vrot.slane %v1399, %v1406
  %v1409 = vunpack.c.l.s4 1966171168
  %v1410 = vunpack.c.0.s8 %v1409
  %v1411 = vlaneseq
  %v1412 = vshrl.u32 %v1411, 7
  %v1413 = vsub.s32 %v1410, %v1412
  %v1414 = vrot.slane %v1400, %v1413
  %v1415 = vlaneseq
  %v1416 = vshrl.u32 %v1415, 7
  %v1417 = vsub.s32 0, %v1416
  %v1418 = vrot.slane %v1407, %v1417
  %v1419 = vlaneseq
  %v1420 = vshrl.u32 %v1419, 7
  %v1421 = vsub.s32 0, %v1420
  %v1422 = vrot.slane %v1414, %v1421
  %v1425 = vmul.f32 %v706, %v1418
  %v1426 = vmul.f32 %v711, %v1422
  %v1427 = vadd.f32 %v1225, %v1425
  %v1428 = vadd.f32 %v1226, %v1426
  %1430 = vrot.lane.b32.xlu0 %v1347, 112
  %v1431 = vpop.permute.xlu0 %1430
  %1434 = vrot.lane.b32.xlu0 %v282, 48
  %v1435 = vpop.permute.xlu0 %1434
  %1438 = vrot.lane.b32.xlu0 %v1349, 96
  %v1439 = vpop.permute.xlu0 %1438
  %v1441 = vsel %vm60, %v284, %v1431
  %v1442 = vsel %vm62, %v1441, %v1435
  %v1443 = vsel %vm64, %v1442, %v1439
  %v1445 = vsel %vm66, %v1443, 0
  %1447 = vmatprep.subr.mxu0 0.0
  %1448 = vmatpush1.msra.mxu0 %v29
  %1449 = vmatprep.subr.mxu0 0.0
  %1450 = vmatpush1.msra.mxu0 %v30
  %1451 = vmatprep.subr.mxu0 0.0
  %1452 = vmatpush1.msra.mxu0 %v31
  %1453 = vmatprep.subr.mxu0 0.0
  %1454 = vmatpush1.msra.mxu0 %v32
  %1455 = vmatprep.subr.mxu0 0.0
  %1456 = vmatpush1.msra.mxu0 %v33
  %1457 = vmatprep.subr.mxu0 0.0
  %1458 = vmatpush1.msra.mxu0 %v34
  %1459 = vmatprep.subr.mxu0 0.0
  %1460 = vmatpush1.msra.mxu0 %v35
  %1461 = vmatprep.subr.mxu0 0.0
  %1462 = vmatpush1.msra.mxu0 %v36
  %1463 = vmatprep.subr.mxu0 0.0
  %1464 = vmatpush1.msra.mxu0 %v37
  %1465 = vmatprep.subr.mxu0 0.0
  %1466 = vmatpush1.msra.mxu0 %v38
  %1467 = vmatprep.subr.mxu0 0.0
  %1468 = vmatpush1.msra.mxu0 %v39
  %1469 = vmatprep.subr.mxu0 0.0
  %1470 = vmatpush1.msra.mxu0 %v40
  %1471 = vmatprep.subr.mxu0 0.0
  %1472 = vmatpush1.msra.mxu0 0.0
  %1473 = vmatprep.subr.mxu0 0.0
  %1474 = vmatpush1.msra.mxu0 0.0
  %1475 = vmatprep.subr.mxu0 0.0
  %1476 = vmatpush1.msra.mxu0 0.0
  %1477 = vmatprep.subr.mxu0 0.0
  %1478 = vmatpush1.msra.mxu0 0.0
  %1479 = vmatprep.subr.mxu0 0.0
  %1480 = vmatpush1.msra.mxu0 0.0
  %1481 = vmatprep.subr.mxu0 0.0
  %1482 = vmatpush1.msra.mxu0 0.0
  %1483 = vmatprep.subr.mxu0 0.0
  %1484 = vmatpush1.msra.mxu0 0.0
  %1485 = vmatprep.subr.mxu0 0.0
  %1486 = vmatpush1.msra.mxu0 0.0
  %1487 = vmatprep.subr.mxu0 0.0
  %1488 = vmatpush1.msra.mxu0 0.0
  %1489 = vmatprep.subr.mxu0 0.0
  %1490 = vmatpush1.msra.mxu0 0.0
  %1491 = vmatprep.subr.mxu0 0.0
  %1492 = vmatpush1.msra.mxu0 0.0
  %1493 = vmatprep.subr.mxu0 0.0
  %1494 = vmatpush1.msra.mxu0 0.0
  %1495 = vmatprep.subr.mxu0 0.0
  %1496 = vmatpush1.msra.mxu0 0.0
  %1497 = vmatprep.subr.mxu0 0.0
  %1498 = vmatpush1.msra.mxu0 0.0
  %1499 = vmatprep.subr.mxu0 0.0
  %1500 = vmatpush1.msra.mxu0 0.0
  %1501 = vmatprep.subr.mxu0 0.0
  %1502 = vmatpush1.msra.mxu0 0.0
  %1503 = vmatprep.subr.mxu0 0.0
  %1504 = vmatpush1.msra.mxu0 0.0
  %1505 = vmatprep.subr.mxu0 0.0
  %1506 = vmatpush1.msra.mxu0 0.0
  %1507 = vmatprep.subr.mxu0 0.0
  %1508 = vmatpush1.msra.mxu0 0.0
  %1509 = vmatprep.subr.mxu0 0.0
  %1510 = vmatpush1.msra.mxu0 0.0
  %1511 = vmatprep.mubr.f32.mxu0 0.0
  %1512 = vmatmul.mubr.f32.gmra.mrb[0].mxu0 %v1445
  %v1513 = vpop.f32.mrb[0].mxu0
  %v1514 = vadd.f32 %v46, %v1513
  %v1515 = vpop.f32.mrb[0].mxu0
  %1516 = vdwg.mxu0
  %v1517 = vxor.u32 %v1514, 2147483648
  %v1518 = vmul.f32 %v1517, 1.442695
  %v1519 = vpow.pop %v1518
  %v1520 = vadd.f32 %v1519, 1.0
  %v1521 = vrcp.pop %v1520
  %v1522 = vmul.f32 1.0, %v1521
  %v1523 = vtanh.pop %v1514
  %v1524 = vmul.f32 %v1522, %v1348
  %1526 = vrot.lane.b32.xlu0 %v1523, 96
  %v1527 = vpop.permute.xlu0 %1526
  %v1529 = vmul.f32 %v1522, %v1527
  %1531 = vrot.lane.b32.xlu0 %v1529, 16
  %v1532 = vpop.permute.xlu0 %1531
  %v1534 = vadd.f32 %v1524, %v1532
  %v1535 = vtanh.pop %v1534
  %1537 = vrot.lane.b32.xlu0 %v1535, 32
  %v1538 = vpop.permute.xlu0 %1537
  %v1540 = vmul.f32 %v1522, %v1538
  %v1541 = vmul.f32 %v1522, %v1350
  %v1542 = vadd.f32 %v1541, %v1532
  %v1543 = vtanh.pop %v1542
  %1545 = vrot.lane.b32.xlu0 %v1543, 32
  %v1546 = vpop.permute.xlu0 %1545
  %v1548 = vmul.f32 %v1522, %v1546
  %v1549 = vsel %vm422, %v1540, %v1347
  %v1550 = vsel %vm422, %v1534, %v1348
  %v1551 = vsel %vm415, %v1548, %v1349
  %v1552 = vsel %vm415, %v1542, %v1350
  %v1553 = vmax.f32 %v1549, 0.0
  %v1554 = vsel %vm422, %v1553, 0.0
  %v1555 = vmax.f32 %v1551, 0.0
  %v1556 = vsel %vm415, %v1555, 0.0
  %v1559 = vunpack.c.l.s4 1966171168
  %v1560 = vunpack.c.0.s8 %v1559
  %v1561 = vlaneseq
  %v1562 = vshrl.u32 %v1561, 7
  %v1563 = vsub.s32 %v1560, %v1562
  %v1564 = vrot.slane %v1554, %v1563
  %v1565 = vcombine.high %v1564, %v1564
  %v1567 = vunpack.c.l.s4 1966171168
  %v1568 = vunpack.c.0.s8 %v1567
  %v1569 = vlaneseq
  %v1570 = vshrl.u32 %v1569, 7
  %v1571 = vsub.s32 %v1568, %v1570
  %v1572 = vrot.slane %v1564, %v1571
  %v1574 = vunpack.c.l.s4 1966171168
  %v1575 = vunpack.c.0.s8 %v1574
  %v1576 = vlaneseq
  %v1577 = vshrl.u32 %v1576, 7
  %v1578 = vsub.s32 %v1575, %v1577
  %v1579 = vrot.slane %v1565, %v1578
  %v1580 = vlaneseq
  %v1581 = vshrl.u32 %v1580, 7
  %v1582 = vsub.s32 0, %v1581
  %v1583 = vrot.slane %v1572, %v1582
  %v1584 = vlaneseq
  %v1585 = vshrl.u32 %v1584, 7
  %v1586 = vsub.s32 0, %v1585
  %v1587 = vrot.slane %v1579, %v1586
  %v1590 = vmul.f32 %v508, %v1583
  %v1591 = vmul.f32 %v513, %v1587
  %v1592 = vadd.f32 %v1390, %v1590
  %v1593 = vadd.f32 %v1391, %v1591
  %v1596 = vunpack.c.l.s4 1966171168
  %v1597 = vunpack.c.0.s8 %v1596
  %v1598 = vlaneseq
  %v1599 = vshrl.u32 %v1598, 7
  %v1600 = vsub.s32 %v1597, %v1599
  %v1601 = vrot.slane %v1556, %v1600
  %v1602 = vcombine.high %v1601, %v1601
  %v1604 = vunpack.c.l.s4 1966171168
  %v1605 = vunpack.c.0.s8 %v1604
  %v1606 = vlaneseq
  %v1607 = vshrl.u32 %v1606, 7
  %v1608 = vsub.s32 %v1605, %v1607
  %v1609 = vrot.slane %v1601, %v1608
  %v1611 = vunpack.c.l.s4 1966171168
  %v1612 = vunpack.c.0.s8 %v1611
  %v1613 = vlaneseq
  %v1614 = vshrl.u32 %v1613, 7
  %v1615 = vsub.s32 %v1612, %v1614
  %v1616 = vrot.slane %v1602, %v1615
  %v1617 = vlaneseq
  %v1618 = vshrl.u32 %v1617, 7
  %v1619 = vsub.s32 0, %v1618
  %v1620 = vrot.slane %v1609, %v1619
  %v1621 = vlaneseq
  %v1622 = vshrl.u32 %v1621, 7
  %v1623 = vsub.s32 0, %v1622
  %v1624 = vrot.slane %v1616, %v1623
  %v1627 = vmul.f32 %v458, %v1620
  %v1628 = vmul.f32 %v463, %v1624
  %v1629 = vadd.f32 %v1427, %v1627
  %v1630 = vadd.f32 %v1428, %v1628
  %1632 = vrot.lane.b32.xlu0 %v1549, 112
  %v1633 = vpop.permute.xlu0 %1632
  %1636 = vrot.lane.b32.xlu0 %v48, 48
  %v1637 = vpop.permute.xlu0 %1636
  %1640 = vrot.lane.b32.xlu0 %v1551, 96
  %v1641 = vpop.permute.xlu0 %1640
  %v1643 = vsel %vm60, %v50, %v1633
  %v1644 = vsel %vm62, %v1643, %v1637
  %v1645 = vsel %vm64, %v1644, %v1641
  %v1647 = vsel %vm66, %v1645, 0
  %1649 = vmatprep.subr.mxu0 0.0
  %1650 = vmatpush1.msra.mxu0 %v29
  %1651 = vmatprep.subr.mxu0 0.0
  %1652 = vmatpush1.msra.mxu0 %v30
  %1653 = vmatprep.subr.mxu0 0.0
  %1654 = vmatpush1.msra.mxu0 %v31
  %1655 = vmatprep.subr.mxu0 0.0
  %1656 = vmatpush1.msra.mxu0 %v32
  %1657 = vmatprep.subr.mxu0 0.0
  %1658 = vmatpush1.msra.mxu0 %v33
  %1659 = vmatprep.subr.mxu0 0.0
  %1660 = vmatpush1.msra.mxu0 %v34
  %1661 = vmatprep.subr.mxu0 0.0
  %1662 = vmatpush1.msra.mxu0 %v35
  %1663 = vmatprep.subr.mxu0 0.0
  %1664 = vmatpush1.msra.mxu0 %v36
  %1665 = vmatprep.subr.mxu0 0.0
  %1666 = vmatpush1.msra.mxu0 %v37
  %1667 = vmatprep.subr.mxu0 0.0
  %1668 = vmatpush1.msra.mxu0 %v38
  %1669 = vmatprep.subr.mxu0 0.0
  %1670 = vmatpush1.msra.mxu0 %v39
  %1671 = vmatprep.subr.mxu0 0.0
  %1672 = vmatpush1.msra.mxu0 %v40
  %1673 = vmatprep.subr.mxu0 0.0
  %1674 = vmatpush1.msra.mxu0 0.0
  %1675 = vmatprep.subr.mxu0 0.0
  %1676 = vmatpush1.msra.mxu0 0.0
  %1677 = vmatprep.subr.mxu0 0.0
  %1678 = vmatpush1.msra.mxu0 0.0
  %1679 = vmatprep.subr.mxu0 0.0
  %1680 = vmatpush1.msra.mxu0 0.0
  %1681 = vmatprep.subr.mxu0 0.0
  %1682 = vmatpush1.msra.mxu0 0.0
  %1683 = vmatprep.subr.mxu0 0.0
  %1684 = vmatpush1.msra.mxu0 0.0
  %1685 = vmatprep.subr.mxu0 0.0
  %1686 = vmatpush1.msra.mxu0 0.0
  %1687 = vmatprep.subr.mxu0 0.0
  %1688 = vmatpush1.msra.mxu0 0.0
  %1689 = vmatprep.subr.mxu0 0.0
  %1690 = vmatpush1.msra.mxu0 0.0
  %1691 = vmatprep.subr.mxu0 0.0
  %1692 = vmatpush1.msra.mxu0 0.0
  %1693 = vmatprep.subr.mxu0 0.0
  %1694 = vmatpush1.msra.mxu0 0.0
  %1695 = vmatprep.subr.mxu0 0.0
  %1696 = vmatpush1.msra.mxu0 0.0
  %1697 = vmatprep.subr.mxu0 0.0
  %1698 = vmatpush1.msra.mxu0 0.0
  %1699 = vmatprep.subr.mxu0 0.0
  %1700 = vmatpush1.msra.mxu0 0.0
  %1701 = vmatprep.subr.mxu0 0.0
  %1702 = vmatpush1.msra.mxu0 0.0
  %1703 = vmatprep.subr.mxu0 0.0
  %1704 = vmatpush1.msra.mxu0 0.0
  %1705 = vmatprep.subr.mxu0 0.0
  %1706 = vmatpush1.msra.mxu0 0.0
  %1707 = vmatprep.subr.mxu0 0.0
  %1708 = vmatpush1.msra.mxu0 0.0
  %1709 = vmatprep.subr.mxu0 0.0
  %1710 = vmatpush1.msra.mxu0 0.0
  %1711 = vmatprep.subr.mxu0 0.0
  %1712 = vmatpush1.msra.mxu0 0.0
  %1713 = vmatprep.mubr.f32.mxu0 0.0
  %1714 = vmatmul.mubr.f32.gmra.mrb[0].mxu0 %v1647
  %v1715 = vpop.f32.mrb[0].mxu0
  %v1716 = vadd.f32 %v46, %v1715
  %v1717 = vpop.f32.mrb[0].mxu0
  %1718 = vdwg.mxu0
  %v1719 = vxor.u32 %v1716, 2147483648
  %v1720 = vmul.f32 %v1719, 1.442695
  %v1721 = vpow.pop %v1720
  %v1722 = vadd.f32 %v1721, 1.0
  %v1723 = vrcp.pop %v1722
  %v1724 = vmul.f32 1.0, %v1723
  %v1725 = vtanh.pop %v1716
  %v1726 = vmul.f32 %v1724, %v1550
  %1728 = vrot.lane.b32.xlu0 %v1725, 96
  %v1729 = vpop.permute.xlu0 %1728
  %v1731 = vmul.f32 %v1724, %v1729
  %1733 = vrot.lane.b32.xlu0 %v1731, 16
  %v1734 = vpop.permute.xlu0 %1733
  %v1736 = vadd.f32 %v1726, %v1734
  %v1737 = vtanh.pop %v1736
  %1739 = vrot.lane.b32.xlu0 %v1737, 32
  %v1740 = vpop.permute.xlu0 %1739
  %v1742 = vmul.f32 %v1724, %v1740
  %v1743 = vmul.f32 %v1724, %v1552
  %v1744 = vadd.f32 %v1743, %v1734
  %v1745 = vtanh.pop %v1744
  %1747 = vrot.lane.b32.xlu0 %v1745, 32
  %v1748 = vpop.permute.xlu0 %1747
  %v1750 = vmul.f32 %v1724, %v1748
  %v1751 = vsel %vm175, %v1742, %v1549
  %v1752 = vsel %vm168, %v1750, %v1551
  %v1753 = vmax.f32 %v1751, 0.0
  %v1754 = vsel %vm175, %v1753, 0.0
  %v1755 = vmax.f32 %v1752, 0.0
  %v1756 = vsel %vm168, %v1755, 0.0
  %v1759 = vunpack.c.l.s4 1966171168
  %v1760 = vunpack.c.0.s8 %v1759
  %v1761 = vlaneseq
  %v1762 = vshrl.u32 %v1761, 7
  %v1763 = vsub.s32 %v1760, %v1762
  %v1764 = vrot.slane %v1754, %v1763
  %v1765 = vcombine.high %v1764, %v1764
  %v1767 = vunpack.c.l.s4 1966171168
  %v1768 = vunpack.c.0.s8 %v1767
  %v1769 = vlaneseq
  %v1770 = vshrl.u32 %v1769, 7
  %v1771 = vsub.s32 %v1768, %v1770
  %v1772 = vrot.slane %v1764, %v1771
  %v1774 = vunpack.c.l.s4 1966171168
  %v1775 = vunpack.c.0.s8 %v1774
  %v1776 = vlaneseq
  %v1777 = vshrl.u32 %v1776, 7
  %v1778 = vsub.s32 %v1775, %v1777
  %v1779 = vrot.slane %v1765, %v1778
  %v1780 = vlaneseq
  %v1781 = vshrl.u32 %v1780, 7
  %v1782 = vsub.s32 0, %v1781
  %v1783 = vrot.slane %v1772, %v1782
  %v1784 = vlaneseq
  %v1785 = vshrl.u32 %v1784, 7
  %v1786 = vsub.s32 0, %v1785
  %v1787 = vrot.slane %v1779, %v1786
  %v1790 = vmul.f32 %v260, %v1783
  %v1791 = vmul.f32 %v265, %v1787
  %v1792 = vadd.f32 %v1592, %v1790
  %v1793 = vadd.f32 %v1593, %v1791
  %v1796 = vunpack.c.l.s4 1966171168
  %v1797 = vunpack.c.0.s8 %v1796
  %v1798 = vlaneseq
  %v1799 = vshrl.u32 %v1798, 7
  %v1800 = vsub.s32 %v1797, %v1799
  %v1801 = vrot.slane %v1756, %v1800
  %v1802 = vcombine.high %v1801, %v1801
  %v1804 = vunpack.c.l.s4 1966171168
  %v1805 = vunpack.c.0.s8 %v1804
  %v1806 = vlaneseq
  %v1807 = vshrl.u32 %v1806, 7
  %v1808 = vsub.s32 %v1805, %v1807
  %v1809 = vrot.slane %v1801, %v1808
  %v1811 = vunpack.c.l.s4 1966171168
  %v1812 = vunpack.c.0.s8 %v1811
  %v1813 = vlaneseq
  %v1814 = vshrl.u32 %v1813, 7
  %v1815 = vsub.s32 %v1812, %v1814
  %v1816 = vrot.slane %v1802, %v1815
  %v1817 = vlaneseq
  %v1818 = vshrl.u32 %v1817, 7
  %v1819 = vsub.s32 0, %v1818
  %v1820 = vrot.slane %v1809, %v1819
  %v1821 = vlaneseq
  %v1822 = vshrl.u32 %v1821, 7
  %v1823 = vsub.s32 0, %v1822
  %v1824 = vrot.slane %v1816, %v1823
  %v1827 = vmul.f32 %v210, %v1820
  %v1828 = vmul.f32 %v215, %v1824
  %v1829 = vadd.f32 %v1629, %v1827
  %v1830 = vadd.f32 %v1630, %v1828
  %v1831 = vld [vmem:[%s5] sm:$0xff]
  %v1832 = vld [vmem:[%s5 + $0x8] sm:$0xff]
  %v1833 = vld [vmem:[%s6] sm:$0xff]
  %v1834 = vld [vmem:[%s6 + $0x8] sm:$0xff]
  %v1835 = vld [vmem:[%s7] sm:$0x1]
  %1837 = vrot.lane.b32.xlu0 %v1829, 16
  %v1838 = vpop.permute.xlu0 %1837
  %vm1839 = vcmask 130048
  %v1840 = vsel %vm1839, %v1838, 0
  %1842 = vmatprep.subr.mxu0 0.0
  %1843 = vmatpush1.msra.mxu0 %v1833
  %1844 = vmatprep.subr.mxu0 0.0
  %1845 = vmatpush1.msra.mxu0 %v1834
  %1846 = vmatprep.subr.mxu0 0.0
  %1847 = vmatpush1.msra.mxu0 0.0
  %1848 = vmatprep.subr.mxu0 0.0
  %1849 = vmatpush1.msra.mxu0 0.0
  %1850 = vmatprep.subr.mxu0 0.0
  %1851 = vmatpush1.msra.mxu0 0.0
  %1852 = vmatprep.subr.mxu0 0.0
  %1853 = vmatpush1.msra.mxu0 0.0
  %1854 = vmatprep.subr.mxu0 0.0
  %1855 = vmatpush1.msra.mxu0 0.0
  %1856 = vmatprep.subr.mxu0 0.0
  %1857 = vmatpush1.msra.mxu0 0.0
  %1858 = vmatprep.subr.mxu0 0.0
  %1859 = vmatpush1.msra.mxu0 0.0
  %1860 = vmatprep.subr.mxu0 0.0
  %1861 = vmatpush1.msra.mxu0 0.0
  %1862 = vmatprep.subr.mxu0 0.0
  %1863 = vmatpush1.msra.mxu0 0.0
  %1864 = vmatprep.subr.mxu0 0.0
  %1865 = vmatpush1.msra.mxu0 0.0
  %1866 = vmatprep.subr.mxu0 0.0
  %1867 = vmatpush1.msra.mxu0 0.0
  %1868 = vmatprep.subr.mxu0 0.0
  %1869 = vmatpush1.msra.mxu0 0.0
  %1870 = vmatprep.subr.mxu0 0.0
  %1871 = vmatpush1.msra.mxu0 0.0
  %1872 = vmatprep.subr.mxu0 0.0
  %1873 = vmatpush1.msra.mxu0 0.0
  %1874 = vmatprep.subr.mxu0 0.0
  %1875 = vmatpush1.msra.mxu0 0.0
  %1876 = vmatprep.subr.mxu0 0.0
  %1877 = vmatpush1.msra.mxu0 0.0
  %1878 = vmatprep.subr.mxu0 0.0
  %1879 = vmatpush1.msra.mxu0 0.0
  %1880 = vmatprep.subr.mxu0 0.0
  %1881 = vmatpush1.msra.mxu0 0.0
  %1882 = vmatprep.subr.mxu0 0.0
  %1883 = vmatpush1.msra.mxu0 0.0
  %1884 = vmatprep.subr.mxu0 0.0
  %1885 = vmatpush1.msra.mxu0 0.0
  %1886 = vmatprep.subr.mxu0 0.0
  %1887 = vmatpush1.msra.mxu0 0.0
  %1888 = vmatprep.subr.mxu0 0.0
  %1889 = vmatpush1.msra.mxu0 0.0
  %1890 = vmatprep.subr.mxu0 0.0
  %1891 = vmatpush1.msra.mxu0 0.0
  %1892 = vmatprep.subr.mxu0 0.0
  %1893 = vmatpush1.msra.mxu0 0.0
  %1894 = vmatprep.subr.mxu0 0.0
  %1895 = vmatpush1.msra.mxu0 0.0
  %1896 = vmatprep.subr.mxu0 0.0
  %1897 = vmatpush1.msra.mxu0 0.0
  %1898 = vmatprep.subr.mxu0 0.0
  %1899 = vmatpush1.msra.mxu0 0.0
  %1900 = vmatprep.subr.mxu0 0.0
  %1901 = vmatpush1.msra.mxu0 0.0
  %1902 = vmatprep.subr.mxu0 0.0
  %1903 = vmatpush1.msra.mxu0 0.0
  %1904 = vmatprep.subr.mxu0 0.0
  %1905 = vmatpush1.msra.mxu0 0.0
  %1906 = vmatprep.mubr.f32.mxu0 0.0
  %1907 = vmatmul.mubr.f32.gmra.mrb[0].mxu0 %v1840
  %v1908 = vpop.f32.mrb[0].mxu0
  %v1909 = vadd.f32 0.0, %v1908
  %v1910 = vpop.f32.mrb[0].mxu0
  %1911 = vdwg.mxu0
  %1913 = vrot.lane.b32.xlu0 %v1792, 80
  %v1914 = vpop.permute.xlu0 %1913
  %v1915 = vsel %vm1839, %v1914, 0
  %1917 = vmatprep.subr.mxu0 0.0
  %1918 = vmatpush1.msra.mxu0 %v1831
  %1919 = vmatprep.subr.mxu0 0.0
  %1920 = vmatpush1.msra.mxu0 %v1832
  %1921 = vmatprep.subr.mxu0 0.0
  %1922 = vmatpush1.msra.mxu0 0.0
  %1923 = vmatprep.subr.mxu0 0.0
  %1924 = vmatpush1.msra.mxu0 0.0
  %1925 = vmatprep.subr.mxu0 0.0
  %1926 = vmatpush1.msra.mxu0 0.0
  %1927 = vmatprep.subr.mxu0 0.0
  %1928 = vmatpush1.msra.mxu0 0.0
  %1929 = vmatprep.subr.mxu0 0.0
  %1930 = vmatpush1.msra.mxu0 0.0
  %1931 = vmatprep.subr.mxu0 0.0
  %1932 = vmatpush1.msra.mxu0 0.0
  %1933 = vmatprep.subr.mxu0 0.0
  %1934 = vmatpush1.msra.mxu0 0.0
  %1935 = vmatprep.subr.mxu0 0.0
  %1936 = vmatpush1.msra.mxu0 0.0
  %1937 = vmatprep.subr.mxu0 0.0
  %1938 = vmatpush1.msra.mxu0 0.0
  %1939 = vmatprep.subr.mxu0 0.0
  %1940 = vmatpush1.msra.mxu0 0.0
  %1941 = vmatprep.subr.mxu0 0.0
  %1942 = vmatpush1.msra.mxu0 0.0
  %1943 = vmatprep.subr.mxu0 0.0
  %1944 = vmatpush1.msra.mxu0 0.0
  %1945 = vmatprep.subr.mxu0 0.0
  %1946 = vmatpush1.msra.mxu0 0.0
  %1947 = vmatprep.subr.mxu0 0.0
  %1948 = vmatpush1.msra.mxu0 0.0
  %1949 = vmatprep.subr.mxu0 0.0
  %1950 = vmatpush1.msra.mxu0 0.0
  %1951 = vmatprep.subr.mxu0 0.0
  %1952 = vmatpush1.msra.mxu0 0.0
  %1953 = vmatprep.subr.mxu0 0.0
  %1954 = vmatpush1.msra.mxu0 0.0
  %1955 = vmatprep.subr.mxu0 0.0
  %1956 = vmatpush1.msra.mxu0 0.0
  %1957 = vmatprep.subr.mxu0 0.0
  %1958 = vmatpush1.msra.mxu0 0.0
  %1959 = vmatprep.subr.mxu0 0.0
  %1960 = vmatpush1.msra.mxu0 0.0
  %1961 = vmatprep.subr.mxu0 0.0
  %1962 = vmatpush1.msra.mxu0 0.0
  %1963 = vmatprep.subr.mxu0 0.0
  %1964 = vmatpush1.msra.mxu0 0.0
  %1965 = vmatprep.subr.mxu0 0.0
  %1966 = vmatpush1.msra.mxu0 0.0
  %1967 = vmatprep.subr.mxu0 0.0
  %1968 = vmatpush1.msra.mxu0 0.0
  %1969 = vmatprep.subr.mxu0 0.0
  %1970 = vmatpush1.msra.mxu0 0.0
  %1971 = vmatprep.subr.mxu0 0.0
  %1972 = vmatpush1.msra.mxu0 0.0
  %1973 = vmatprep.subr.mxu0 0.0
  %1974 = vmatpush1.msra.mxu0 0.0
  %1975 = vmatprep.subr.mxu0 0.0
  %1976 = vmatpush1.msra.mxu0 0.0
  %1977 = vmatprep.subr.mxu0 0.0
  %1978 = vmatpush1.msra.mxu0 0.0
  %1979 = vmatprep.subr.mxu0 0.0
  %1980 = vmatpush1.msra.mxu0 0.0
  %1981 = vmatprep.mubr.f32.mxu0 0.0
  %1982 = vmatmul.mubr.f32.gmra.mrb[0].mxu0 %v1915
  %v1983 = vpop.f32.mrb[0].mxu0
  %v1984 = vadd.f32 %v1909, %v1983
  %v1985 = vpop.f32.mrb[0].mxu0
  %1986 = vdwg.mxu0
  %v1988 = vlaneseq
  %v1989 = vshrl.u32 %v1988, 7
  %v1990 = vsub.s32 0, %v1989
  %v1991 = vrot.slane %v1835, %v1990
  %v1993 = vadd.f32 %v1984, %v1991
  %1995 = vrot.lane.b32.xlu0 %v1830, 16
  %v1996 = vpop.permute.xlu0 %1995
  %v1997 = vsel %vm1839, %v1996, 0
  %1999 = vmatprep.subr.mxu0 0.0
  %2000 = vmatpush1.msra.mxu0 %v1833
  %2001 = vmatprep.subr.mxu0 0.0
  %2002 = vmatpush1.msra.mxu0 %v1834
  %2003 = vmatprep.subr.mxu0 0.0
  %2004 = vmatpush1.msra.mxu0 0.0
  %2005 = vmatprep.subr.mxu0 0.0
  %2006 = vmatpush1.msra.mxu0 0.0
  %2007 = vmatprep.subr.mxu0 0.0
  %2008 = vmatpush1.msra.mxu0 0.0
  %2009 = vmatprep.subr.mxu0 0.0
  %2010 = vmatpush1.msra.mxu0 0.0
  %2011 = vmatprep.subr.mxu0 0.0
  %2012 = vmatpush1.msra.mxu0 0.0
  %2013 = vmatprep.subr.mxu0 0.0
  %2014 = vmatpush1.msra.mxu0 0.0
  %2015 = vmatprep.subr.mxu0 0.0
  %2016 = vmatpush1.msra.mxu0 0.0
  %2017 = vmatprep.subr.mxu0 0.0
  %2018 = vmatpush1.msra.mxu0 0.0
  %2019 = vmatprep.subr.mxu0 0.0
  %2020 = vmatpush1.msra.mxu0 0.0
  %2021 = vmatprep.subr.mxu0 0.0
  %2022 = vmatpush1.msra.mxu0 0.0
  %2023 = vmatprep.subr.mxu0 0.0
  %2024 = vmatpush1.msra.mxu0 0.0
  %2025 = vmatprep.subr.mxu0 0.0
  %2026 = vmatpush1.msra.mxu0 0.0
  %2027 = vmatprep.subr.mxu0 0.0
  %2028 = vmatpush1.msra.mxu0 0.0
  %2029 = vmatprep.subr.mxu0 0.0
  %2030 = vmatpush1.msra.mxu0 0.0
  %2031 = vmatprep.subr.mxu0 0.0
  %2032 = vmatpush1.msra.mxu0 0.0
  %2033 = vmatprep.subr.mxu0 0.0
  %2034 = vmatpush1.msra.mxu0 0.0
  %2035 = vmatprep.subr.mxu0 0.0
  %2036 = vmatpush1.msra.mxu0 0.0
  %2037 = vmatprep.subr.mxu0 0.0
  %2038 = vmatpush1.msra.mxu0 0.0
  %2039 = vmatprep.subr.mxu0 0.0
  %2040 = vmatpush1.msra.mxu0 0.0
  %2041 = vmatprep.subr.mxu0 0.0
  %2042 = vmatpush1.msra.mxu0 0.0
  %2043 = vmatprep.subr.mxu0 0.0
  %2044 = vmatpush1.msra.mxu0 0.0
  %2045 = vmatprep.subr.mxu0 0.0
  %2046 = vmatpush1.msra.mxu0 0.0
  %2047 = vmatprep.subr.mxu0 0.0
  %2048 = vmatpush1.msra.mxu0 0.0
  %2049 = vmatprep.subr.mxu0 0.0
  %2050 = vmatpush1.msra.mxu0 0.0
  %2051 = vmatprep.subr.mxu0 0.0
  %2052 = vmatpush1.msra.mxu0 0.0
  %2053 = vmatprep.subr.mxu0 0.0
  %2054 = vmatpush1.msra.mxu0 0.0
  %2055 = vmatprep.subr.mxu0 0.0
  %2056 = vmatpush1.msra.mxu0 0.0
  %2057 = vmatprep.subr.mxu0 0.0
  %2058 = vmatpush1.msra.mxu0 0.0
  %2059 = vmatprep.subr.mxu0 0.0
  %2060 = vmatpush1.msra.mxu0 0.0
  %2061 = vmatprep.subr.mxu0 0.0
  %2062 = vmatpush1.msra.mxu0 0.0
  %2063 = vmatprep.mubr.f32.mxu0 0.0
  %2064 = vmatmul.mubr.f32.gmra.mrb[0].mxu0 %v1997
  %v2065 = vpop.f32.mrb[0].mxu0
  %v2066 = vadd.f32 0.0, %v2065
  %v2067 = vpop.f32.mrb[0].mxu0
  %2068 = vdwg.mxu0
  %2070 = vrot.lane.b32.xlu0 %v1793, 80
  %v2071 = vpop.permute.xlu0 %2070
  %v2072 = vsel %vm1839, %v2071, 0
  %2074 = vmatprep.subr.mxu0 0.0
  %2075 = vmatpush1.msra.mxu0 %v1831
  %2076 = vmatprep.subr.mxu0 0.0
  %2077 = vmatpush1.msra.mxu0 %v1832
  %2078 = vmatprep.subr.mxu0 0.0
  %2079 = vmatpush1.msra.mxu0 0.0
  %2080 = vmatprep.subr.mxu0 0.0
  %2081 = vmatpush1.msra.mxu0 0.0
  %2082 = vmatprep.subr.mxu0 0.0
  %2083 = vmatpush1.msra.mxu0 0.0
  %2084 = vmatprep.subr.mxu0 0.0
  %2085 = vmatpush1.msra.mxu0 0.0
  %2086 = vmatprep.subr.mxu0 0.0
  %2087 = vmatpush1.msra.mxu0 0.0
  %2088 = vmatprep.subr.mxu0 0.0
  %2089 = vmatpush1.msra.mxu0 0.0
  %2090 = vmatprep.subr.mxu0 0.0
  %2091 = vmatpush1.msra.mxu0 0.0
  %2092 = vmatprep.subr.mxu0 0.0
  %2093 = vmatpush1.msra.mxu0 0.0
  %2094 = vmatprep.subr.mxu0 0.0
  %2095 = vmatpush1.msra.mxu0 0.0
  %2096 = vmatprep.subr.mxu0 0.0
  %2097 = vmatpush1.msra.mxu0 0.0
  %2098 = vmatprep.subr.mxu0 0.0
  %2099 = vmatpush1.msra.mxu0 0.0
  %2100 = vmatprep.subr.mxu0 0.0
  %2101 = vmatpush1.msra.mxu0 0.0
  %2102 = vmatprep.subr.mxu0 0.0
  %2103 = vmatpush1.msra.mxu0 0.0
  %2104 = vmatprep.subr.mxu0 0.0
  %2105 = vmatpush1.msra.mxu0 0.0
  %2106 = vmatprep.subr.mxu0 0.0
  %2107 = vmatpush1.msra.mxu0 0.0
  %2108 = vmatprep.subr.mxu0 0.0
  %2109 = vmatpush1.msra.mxu0 0.0
  %2110 = vmatprep.subr.mxu0 0.0
  %2111 = vmatpush1.msra.mxu0 0.0
  %2112 = vmatprep.subr.mxu0 0.0
  %2113 = vmatpush1.msra.mxu0 0.0
  %2114 = vmatprep.subr.mxu0 0.0
  %2115 = vmatpush1.msra.mxu0 0.0
  %2116 = vmatprep.subr.mxu0 0.0
  %2117 = vmatpush1.msra.mxu0 0.0
  %2118 = vmatprep.subr.mxu0 0.0
  %2119 = vmatpush1.msra.mxu0 0.0
  %2120 = vmatprep.subr.mxu0 0.0
  %2121 = vmatpush1.msra.mxu0 0.0
  %2122 = vmatprep.subr.mxu0 0.0
  %2123 = vmatpush1.msra.mxu0 0.0
  %2124 = vmatprep.subr.mxu0 0.0
  %2125 = vmatpush1.msra.mxu0 0.0
  %2126 = vmatprep.subr.mxu0 0.0
  %2127 = vmatpush1.msra.mxu0 0.0
  %2128 = vmatprep.subr.mxu0 0.0
  %2129 = vmatpush1.msra.mxu0 0.0
  %2130 = vmatprep.subr.mxu0 0.0
  %2131 = vmatpush1.msra.mxu0 0.0
  %2132 = vmatprep.subr.mxu0 0.0
  %2133 = vmatpush1.msra.mxu0 0.0
  %2134 = vmatprep.subr.mxu0 0.0
  %2135 = vmatpush1.msra.mxu0 0.0
  %2136 = vmatprep.subr.mxu0 0.0
  %2137 = vmatpush1.msra.mxu0 0.0
  %2138 = vmatprep.mubr.f32.mxu0 0.0
  %2139 = vmatmul.mubr.f32.gmra.mrb[0].mxu0 %v2072
  %v2140 = vpop.f32.mrb[0].mxu0
  %v2141 = vadd.f32 %v2066, %v2140
  %v2142 = vpop.f32.mrb[0].mxu0
  %2143 = vdwg.mxu0
  %v2144 = vadd.f32 %v2141, %v1991
  %vm2145 = vcmask 19456
  %2146 = vst.msk [vmem:[%s8] sm:$0xf] %vm2145, %v1993
  %2147 = vst.msk [vmem:[%s8 + $0x4] sm:$0xf] %vm2145, %v2144
  // Predicated region
  $region34: #{tpu_custom_call.1} parent=0 // pred_check
    _
  $region35: #{tpu_custom_call.1} parent=0 // pred_check_branch
    %2149 = sbr.rel (0) target = $region37
  $region36: #{tpu_custom_call.1} parent=0 // pred_region
    _
  $region37: #{tpu_custom_call.1} parent=0 // pred_fallthru
    _
  // Predicated region
  $region38: #{tpu_custom_call.1} parent=0 // pred_check
    _
  $region39: #{tpu_custom_call.1} parent=0 // pred_check_branch
    %2151 = sbr.rel (0) target = $region41
  $region40: #{tpu_custom_call.1} parent=0 // pred_region
    _
  $region41: #{tpu_custom_call.1} parent=0 // pred_fallthru
    _

</llo_original>
